<compile_context>
chip_gen: v5e
topology: v5e:2x2
jax: 0.10.0
libtpu: 0.0.40
codegen_flags: <defaults>
</compile_context>

<pallas_src>
import functools
import math

import jax
import jax.numpy as jnp
from jax.experimental import pallas as pl
from jax.experimental.pallas import tpu as pltpu

BN_EPS = 1e-5
LANE = 128


# ------------------------------ Pallas kernel -------------------------------

def _make_fused_kernel(B, Ho, Wo, Cin, ks, Cpad):
    """Fused conv(ks x ks) + bias + BatchNorm(batch stats) + ReLU."""
    M = B * Ho * Wo

    def kernel(xp_ref, w_ref, b_ref, g_ref, beta_ref, o_ref, acc_ref):
        # In-kernel im2col: ks*ks statically shifted slices of the padded NHWC
        # tile, each contracted against its (Cin, Cpad) weight slab on the MXU.
        xp = xp_ref[...]                                         # (B, Hp, Wp, Cin) bf16
        first = True
        for dy in range(ks):
            for dx in range(ks):
                tap = dy * ks + dx
                a = xp[:, dy:dy + Ho, dx:dx + Wo, :].reshape(M, Cin)
                w_tap = w_ref[tap * Cin:(tap + 1) * Cin, :]      # (Cin, Cpad) bf16
                contrib = jnp.dot(a, w_tap,
                                  preferred_element_type=jnp.float32)
                if first:
                    acc_ref[...] = contrib                       # no zero-fill pass
                    first = False
                else:
                    acc_ref[...] += contrib

        h = acc_ref[...] + b_ref[...]                            # conv output, f32

        # BatchNorm2d (training mode): per-channel batch stats over N*H*W pixels.
        mean = jnp.mean(h, axis=0, keepdims=True)                # (1, Cpad)
        var = jnp.mean((h - mean) ** 2, axis=0, keepdims=True)   # biased variance
        scale = g_ref[...] * jax.lax.rsqrt(var + BN_EPS)         # gamma folded in
        shift = beta_ref[...] - mean * scale
        o_ref[...] = jnp.maximum(h * scale + shift, 0.0)         # BN affine + ReLU

    return kernel


# -------------------------------- wrapper -----------------------------------

def reconstruct_forward(x, w, b, gamma, beta, *, scale_factor, kernel_size):
    """Pallas forward of Reconstruct.  x: (B, n_patch, hidden).  Returns NCHW."""
    if x is None:
        return None

    B, n_patch, hidden = x.shape
    hs = int(round(math.sqrt(n_patch)))
    ws = hs
    s = int(scale_factor)
    ks = int(kernel_size)
    pad = 1 if ks == 3 else 0
    Cin = hidden
    Cout = w.shape[-1]

    # tokens -> image.  torch does permute(0,2,1).view(B, hidden, h, w) (NCHW);
    # the equivalent NHWC tensor is a straight reshape.
    x_img = x.reshape(B, hs, ws, Cin)

    # nn.Upsample(scale_factor=s) default mode='nearest': out[i,j] = in[i//s, j//s].
    x_up = jnp.repeat(jnp.repeat(x_img, s, axis=1), s, axis=2)
    Hu, Wu = hs * s, ws * s
    Ho = Hu + 2 * pad - ks + 1
    Wo = Wu + 2 * pad - ks + 1
    M = B * Ho * Wo

    # Spatial zero-pad for the conv; activations to bf16 for the MXU.
    x_pad = jnp.pad(x_up, ((0, 0), (pad, pad), (pad, pad), (0, 0))).astype(jnp.bfloat16)

    # Lane-dense channel padding (unmasked full-width stores in the kernel).
    Cpad = max(LANE, ((Cout + LANE - 1) // LANE) * LANE)
    cpadding = ((0, 0), (0, Cpad - Cout))
    wmat = jnp.pad(w.reshape(ks * ks * Cin, Cout), cpadding).astype(jnp.bfloat16)
    bp = jnp.pad(b.reshape(1, Cout), cpadding).astype(jnp.float32)
    gp = jnp.pad(gamma.reshape(1, Cout), cpadding).astype(jnp.float32)
    betap = jnp.pad(beta.reshape(1, Cout), cpadding).astype(jnp.float32)

    kernel = _make_fused_kernel(B, Ho, Wo, Cin, ks, Cpad)

    def full_spec(shape):
        nd = len(shape)
        return pl.BlockSpec(shape, lambda i, _nd=nd: (0,) * _nd)

    flops = 2 * M * (ks * ks * Cin) * Cpad + 8 * M * Cpad
    bytes_accessed = (x_pad.size * 2 + wmat.size * 2
                      + (bp.size + gp.size + betap.size) * 4 + M * Cpad * 4)

    out = pl.pallas_call(
        kernel,
        out_shape=jax.ShapeDtypeStruct((M, Cpad), jnp.float32),
        grid=(1,),
        in_specs=[full_spec(x_pad.shape), full_spec(wmat.shape),
                  full_spec(bp.shape), full_spec(gp.shape), full_spec(betap.shape)],
        out_specs=full_spec((M, Cpad)),
        scratch_shapes=[pltpu.VMEM((M, Cpad), jnp.float32)],
        compiler_params=pltpu.CompilerParams(
            dimension_semantics=("arbitrary",),
            vmem_limit_bytes=32 * 1024 * 1024),   # safe on v5e/v6e/v7x
        cost_estimate=pl.CostEstimate(flops=flops, transcendentals=Cpad,
                                      bytes_accessed=bytes_accessed),
    )(x_pad, wmat, bp, gp, betap)

    out = out[:, :Cout].reshape(B, Ho, Wo, Cout)
    return jnp.transpose(out, (0, 3, 1, 2))       # NCHW, matching the torch module


# --------------------------- pure-JAX reference ------------------------------

def reconstruct_reference(x, w, b, gamma, beta, *, scale_factor, kernel_size):
    if x is None:
        return None
    B, n_patch, hidden = x.shape
    hs = int(round(math.sqrt(n_patch)))
    s = int(scale_factor)
    ks = int(kernel_size)
    pad = 1 if ks == 3 else 0
    x_img = x.reshape(B, hs, hs, hidden)
    x_up = jnp.repeat(jnp.repeat(x_img, s, axis=1), s, axis=2)
    y = jax.lax.conv_general_dilated(
        x_up, w, window_strides=(1, 1), padding=[(pad, pad), (pad, pad)],
        dimension_numbers=("NHWC", "HWIO", "NHWC"))
    y = y + b.reshape(1, 1, 1, -1)
    mean = jnp.mean(y, axis=(0, 1, 2), keepdims=True)
    var = jnp.mean((y - mean) ** 2, axis=(0, 1, 2), keepdims=True)
    y = ((y - mean) * jax.lax.rsqrt(var + BN_EPS) * gamma.reshape(1, 1, 1, -1)
         + beta.reshape(1, 1, 1, -1))
    y = jnp.maximum(y, 0.0)
    return jnp.transpose(y, (0, 3, 1, 2))


# ----------------------------------- main ------------------------------------

if __name__ == "__main__":
    key = jax.random.PRNGKey(0)
    kx, kw, kb, kg, kbe = jax.random.split(key, 5)

    # Reconstruct(in_channels=hidden, out_channels, kernel_size=3, scale_factor=2)
    B, n_patch, hidden = 2, 64, 32          # h = w = sqrt(64) = 8
    out_channels = 16
    kernel_size = 3
    scale_factor = 2

    x = jax.random.normal(kx, (B, n_patch, hidden), jnp.float32)
    w = 0.1 * jax.random.normal(
        kw, (kernel_size, kernel_size, hidden, out_channels), jnp.float32)  # HWIO
    b = 0.1 * jax.random.normal(kb, (out_channels,), jnp.float32)
    gamma = 1.0 + 0.1 * jax.random.normal(kg, (out_channels,), jnp.float32)
    beta = 0.1 * jax.random.normal(kbe, (out_channels,), jnp.float32)

    fwd = jax.jit(functools.partial(reconstruct_forward,
                                    scale_factor=scale_factor,
                                    kernel_size=kernel_size))
    out = jax.block_until_ready(fwd(x, w, b, gamma, beta))

    Hu = int(round(math.sqrt(n_patch))) * scale_factor
    assert out.shape == (B, out_channels, Hu, Hu), out.shape

    ref = reconstruct_reference(x, w, b, gamma, beta,
                                scale_factor=scale_factor, kernel_size=kernel_size)
    # bf16 MXU operands vs. the f32 reference -> relaxed tolerance.
    assert jnp.allclose(out, ref, atol=5e-2, rtol=5e-2), \
        float(jnp.max(jnp.abs(out - ref)))

    print("KERNEL_OK")
</pallas_src>

<mosaic_0001>
module attributes {stable_mosaic.version = 11 : i64} {
  func.func @kernel(%arg0: i32, %arg1: memref<2x18x18x32xbf16, #tpu.memory_space<vmem>>, %arg2: memref<288x128xbf16, #tpu.memory_space<vmem>>, %arg3: memref<1x128xf32, #tpu.memory_space<vmem>>, %arg4: memref<1x128xf32, #tpu.memory_space<vmem>>, %arg5: memref<1x128xf32, #tpu.memory_space<vmem>>, %arg6: memref<512x128xf32, #tpu.memory_space<vmem>>, %arg7: memref<512x128xf32, #tpu.memory_space<vmem>>) attributes {dimension_semantics = [#tpu.dimension_semantics<arbitrary>], iteration_bounds = array<i64: 1>, scalar_prefetch = 0 : i64, scratch_operands = 1 : i64, tpu.core_type = #tpu.core_type<tc>, window_params = [{pipeline_mode = #tpu.pipeline_mode<synchronous>, transform_indices = @transform_0, window_bounds = array<i64: 2, 18, 18, 32>}, {pipeline_mode = #tpu.pipeline_mode<synchronous>, transform_indices = @transform_1, window_bounds = array<i64: 288, 128>}, {pipeline_mode = #tpu.pipeline_mode<synchronous>, transform_indices = @transform_2, window_bounds = array<i64: 1, 128>}, {pipeline_mode = #tpu.pipeline_mode<synchronous>, transform_indices = @transform_3, window_bounds = array<i64: 1, 128>}, {pipeline_mode = #tpu.pipeline_mode<synchronous>, transform_indices = @transform_4, window_bounds = array<i64: 1, 128>}, {pipeline_mode = #tpu.pipeline_mode<synchronous>, transform_indices = @transform_5, window_bounds = array<i64: 512, 128>}]} {
    %c0 = arith.constant 0 : index
    %c0_0 = arith.constant 0 : index
    %c0_1 = arith.constant 0 : index
    %c0_2 = arith.constant 0 : index
    %0 = vector.load %arg1[%c0, %c0_0, %c0_1, %c0_2] : memref<2x18x18x32xbf16, #tpu.memory_space<vmem>>, vector<2x18x18x32xbf16>
    %1 = vector.extract_strided_slice %0 {offsets = [0, 0, 0, 0], sizes = [2, 16, 16, 32], strides = [1, 1, 1, 1]} : vector<2x18x18x32xbf16> to vector<2x16x16x32xbf16>
    %2 = vector.shape_cast %1 : vector<2x16x16x32xbf16> to vector<512x32xbf16>
    %c0_3 = arith.constant 0 : index
    %c0_4 = arith.constant 0 : index
    %3 = vector.load %arg2[%c0_3, %c0_4] : memref<288x128xbf16, #tpu.memory_space<vmem>>, vector<32x128xbf16>
    %cst = arith.constant dense<0.000000e+00> : vector<512x128xf32>
    %4 = tpu.matmul %2, %3, %cst {dimension_numbers = #tpu.dot_dimension_numbers<[1], [0], [0], [1], [0, 0, 1, 1], [], []>} : vector<512x32xbf16>, vector<32x128xbf16>, vector<512x128xf32> -> vector<512x128xf32>
    %c0_5 = arith.constant 0 : index
    %c0_6 = arith.constant 0 : index
    %5 = vector.load %arg7[%c0_5, %c0_6] : memref<512x128xf32, #tpu.memory_space<vmem>>, vector<512x128xf32>
    tpu.vector_store %arg7[%c0_5, %c0_6], %4 {strides = array<i32>} : memref<512x128xf32, #tpu.memory_space<vmem>>, vector<512x128xf32>,
    %6 = vector.extract_strided_slice %0 {offsets = [0, 0, 1, 0], sizes = [2, 16, 16, 32], strides = [1, 1, 1, 1]} : vector<2x18x18x32xbf16> to vector<2x16x16x32xbf16>
    %7 = vector.shape_cast %6 : vector<2x16x16x32xbf16> to vector<512x32xbf16>
    %c32 = arith.constant 32 : index
    %c0_7 = arith.constant 0 : index
    %8 = vector.load %arg2[%c32, %c0_7] : memref<288x128xbf16, #tpu.memory_space<vmem>>, vector<32x128xbf16>
    %cst_8 = arith.constant dense<0.000000e+00> : vector<512x128xf32>
    %9 = tpu.matmul %7, %8, %cst_8 {dimension_numbers = #tpu.dot_dimension_numbers<[1], [0], [0], [1], [0, 0, 1, 1], [], []>} : vector<512x32xbf16>, vector<32x128xbf16>, vector<512x128xf32> -> vector<512x128xf32>
    %c0_9 = arith.constant 0 : index
    %c0_10 = arith.constant 0 : index
    %10 = vector.load %arg7[%c0_9, %c0_10] : memref<512x128xf32, #tpu.memory_space<vmem>>, vector<512x128xf32>
    %11 = arith.addf %10, %9 : vector<512x128xf32>
    %c0_11 = arith.constant 0 : index
    %c0_12 = arith.constant 0 : index
    %12 = vector.load %arg7[%c0_11, %c0_12] : memref<512x128xf32, #tpu.memory_space<vmem>>, vector<512x128xf32>
    tpu.vector_store %arg7[%c0_11, %c0_12], %11 {strides = array<i32>} : memref<512x128xf32, #tpu.memory_space<vmem>>, vector<512x128xf32>,
    %13 = vector.extract_strided_slice %0 {offsets = [0, 0, 2, 0], sizes = [2, 16, 16, 32], strides = [1, 1, 1, 1]} : vector<2x18x18x32xbf16> to vector<2x16x16x32xbf16>
    %14 = vector.shape_cast %13 : vector<2x16x16x32xbf16> to vector<512x32xbf16>
    %c64 = arith.constant 64 : index
    %c0_13 = arith.constant 0 : index
    %15 = vector.load %arg2[%c64, %c0_13] : memref<288x128xbf16, #tpu.memory_space<vmem>>, vector<32x128xbf16>
    %cst_14 = arith.constant dense<0.000000e+00> : vector<512x128xf32>
    %16 = tpu.matmul %14, %15, %cst_14 {dimension_numbers = #tpu.dot_dimension_numbers<[1], [0], [0], [1], [0, 0, 1, 1], [], []>} : vector<512x32xbf16>, vector<32x128xbf16>, vector<512x128xf32> -> vector<512x128xf32>
    %c0_15 = arith.constant 0 : index
    %c0_16 = arith.constant 0 : index
    %17 = vector.load %arg7[%c0_15, %c0_16] : memref<512x128xf32, #tpu.memory_space<vmem>>, vector<512x128xf32>
    %18 = arith.addf %17, %16 : vector<512x128xf32>
    %c0_17 = arith.constant 0 : index
    %c0_18 = arith.constant 0 : index
    %19 = vector.load %arg7[%c0_17, %c0_18] : memref<512x128xf32, #tpu.memory_space<vmem>>, vector<512x128xf32>
    tpu.vector_store %arg7[%c0_17, %c0_18], %18 {strides = array<i32>} : memref<512x128xf32, #tpu.memory_space<vmem>>, vector<512x128xf32>,
    %20 = vector.extract_strided_slice %0 {offsets = [0, 1, 0, 0], sizes = [2, 16, 16, 32], strides = [1, 1, 1, 1]} : vector<2x18x18x32xbf16> to vector<2x16x16x32xbf16>
    %21 = vector.shape_cast %20 : vector<2x16x16x32xbf16> to vector<512x32xbf16>
    %c96 = arith.constant 96 : index
    %c0_19 = arith.constant 0 : index
    %22 = vector.load %arg2[%c96, %c0_19] : memref<288x128xbf16, #tpu.memory_space<vmem>>, vector<32x128xbf16>
    %cst_20 = arith.constant dense<0.000000e+00> : vector<512x128xf32>
    %23 = tpu.matmul %21, %22, %cst_20 {dimension_numbers = #tpu.dot_dimension_numbers<[1], [0], [0], [1], [0, 0, 1, 1], [], []>} : vector<512x32xbf16>, vector<32x128xbf16>, vector<512x128xf32> -> vector<512x128xf32>
    %c0_21 = arith.constant 0 : index
    %c0_22 = arith.constant 0 : index
    %24 = vector.load %arg7[%c0_21, %c0_22] : memref<512x128xf32, #tpu.memory_space<vmem>>, vector<512x128xf32>
    %25 = arith.addf %24, %23 : vector<512x128xf32>
    %c0_23 = arith.constant 0 : index
    %c0_24 = arith.constant 0 : index
    %26 = vector.load %arg7[%c0_23, %c0_24] : memref<512x128xf32, #tpu.memory_space<vmem>>, vector<512x128xf32>
    tpu.vector_store %arg7[%c0_23, %c0_24], %25 {strides = array<i32>} : memref<512x128xf32, #tpu.memory_space<vmem>>, vector<512x128xf32>,
    %27 = vector.extract_strided_slice %0 {offsets = [0, 1, 1, 0], sizes = [2, 16, 16, 32], strides = [1, 1, 1, 1]} : vector<2x18x18x32xbf16> to vector<2x16x16x32xbf16>
    %28 = vector.shape_cast %27 : vector<2x16x16x32xbf16> to vector<512x32xbf16>
    %c128 = arith.constant 128 : index
    %c0_25 = arith.constant 0 : index
    %29 = vector.load %arg2[%c128, %c0_25] : memref<288x128xbf16, #tpu.memory_space<vmem>>, vector<32x128xbf16>
    %cst_26 = arith.constant dense<0.000000e+00> : vector<512x128xf32>
    %30 = tpu.matmul %28, %29, %cst_26 {dimension_numbers = #tpu.dot_dimension_numbers<[1], [0], [0], [1], [0, 0, 1, 1], [], []>} : vector<512x32xbf16>, vector<32x128xbf16>, vector<512x128xf32> -> vector<512x128xf32>
    %c0_27 = arith.constant 0 : index
    %c0_28 = arith.constant 0 : index
    %31 = vector.load %arg7[%c0_27, %c0_28] : memref<512x128xf32, #tpu.memory_space<vmem>>, vector<512x128xf32>
    %32 = arith.addf %31, %30 : vector<512x128xf32>
    %c0_29 = arith.constant 0 : index
    %c0_30 = arith.constant 0 : index
    %33 = vector.load %arg7[%c0_29, %c0_30] : memref<512x128xf32, #tpu.memory_space<vmem>>, vector<512x128xf32>
    tpu.vector_store %arg7[%c0_29, %c0_30], %32 {strides = array<i32>} : memref<512x128xf32, #tpu.memory_space<vmem>>, vector<512x128xf32>,
    %34 = vector.extract_strided_slice %0 {offsets = [0, 1, 2, 0], sizes = [2, 16, 16, 32], strides = [1, 1, 1, 1]} : vector<2x18x18x32xbf16> to vector<2x16x16x32xbf16>
    %35 = vector.shape_cast %34 : vector<2x16x16x32xbf16> to vector<512x32xbf16>
    %c160 = arith.constant 160 : index
    %c0_31 = arith.constant 0 : index
    %36 = vector.load %arg2[%c160, %c0_31] : memref<288x128xbf16, #tpu.memory_space<vmem>>, vector<32x128xbf16>
    %cst_32 = arith.constant dense<0.000000e+00> : vector<512x128xf32>
    %37 = tpu.matmul %35, %36, %cst_32 {dimension_numbers = #tpu.dot_dimension_numbers<[1], [0], [0], [1], [0, 0, 1, 1], [], []>} : vector<512x32xbf16>, vector<32x128xbf16>, vector<512x128xf32> -> vector<512x128xf32>
    %c0_33 = arith.constant 0 : index
    %c0_34 = arith.constant 0 : index
    %38 = vector.load %arg7[%c0_33, %c0_34] : memref<512x128xf32, #tpu.memory_space<vmem>>, vector<512x128xf32>
    %39 = arith.addf %38, %37 : vector<512x128xf32>
    %c0_35 = arith.constant 0 : index
    %c0_36 = arith.constant 0 : index
    %40 = vector.load %arg7[%c0_35, %c0_36] : memref<512x128xf32, #tpu.memory_space<vmem>>, vector<512x128xf32>
    tpu.vector_store %arg7[%c0_35, %c0_36], %39 {strides = array<i32>} : memref<512x128xf32, #tpu.memory_space<vmem>>, vector<512x128xf32>,
    %41 = vector.extract_strided_slice %0 {offsets = [0, 2, 0, 0], sizes = [2, 16, 16, 32], strides = [1, 1, 1, 1]} : vector<2x18x18x32xbf16> to vector<2x16x16x32xbf16>
    %42 = vector.shape_cast %41 : vector<2x16x16x32xbf16> to vector<512x32xbf16>
    %c192 = arith.constant 192 : index
    %c0_37 = arith.constant 0 : index
    %43 = vector.load %arg2[%c192, %c0_37] : memref<288x128xbf16, #tpu.memory_space<vmem>>, vector<32x128xbf16>
    %cst_38 = arith.constant dense<0.000000e+00> : vector<512x128xf32>
    %44 = tpu.matmul %42, %43, %cst_38 {dimension_numbers = #tpu.dot_dimension_numbers<[1], [0], [0], [1], [0, 0, 1, 1], [], []>} : vector<512x32xbf16>, vector<32x128xbf16>, vector<512x128xf32> -> vector<512x128xf32>
    %c0_39 = arith.constant 0 : index
    %c0_40 = arith.constant 0 : index
    %45 = vector.load %arg7[%c0_39, %c0_40] : memref<512x128xf32, #tpu.memory_space<vmem>>, vector<512x128xf32>
    %46 = arith.addf %45, %44 : vector<512x128xf32>
    %c0_41 = arith.constant 0 : index
    %c0_42 = arith.constant 0 : index
    %47 = vector.load %arg7[%c0_41, %c0_42] : memref<512x128xf32, #tpu.memory_space<vmem>>, vector<512x128xf32>
    tpu.vector_store %arg7[%c0_41, %c0_42], %46 {strides = array<i32>} : memref<512x128xf32, #tpu.memory_space<vmem>>, vector<512x128xf32>,
    %48 = vector.extract_strided_slice %0 {offsets = [0, 2, 1, 0], sizes = [2, 16, 16, 32], strides = [1, 1, 1, 1]} : vector<2x18x18x32xbf16> to vector<2x16x16x32xbf16>
    %49 = vector.shape_cast %48 : vector<2x16x16x32xbf16> to vector<512x32xbf16>
    %c224 = arith.constant 224 : index
    %c0_43 = arith.constant 0 : index
    %50 = vector.load %arg2[%c224, %c0_43] : memref<288x128xbf16, #tpu.memory_space<vmem>>, vector<32x128xbf16>
    %cst_44 = arith.constant dense<0.000000e+00> : vector<512x128xf32>
    %51 = tpu.matmul %49, %50, %cst_44 {dimension_numbers = #tpu.dot_dimension_numbers<[1], [0], [0], [1], [0, 0, 1, 1], [], []>} : vector<512x32xbf16>, vector<32x128xbf16>, vector<512x128xf32> -> vector<512x128xf32>
    %c0_45 = arith.constant 0 : index
    %c0_46 = arith.constant 0 : index
    %52 = vector.load %arg7[%c0_45, %c0_46] : memref<512x128xf32, #tpu.memory_space<vmem>>, vector<512x128xf32>
    %53 = arith.addf %52, %51 : vector<512x128xf32>
    %c0_47 = arith.constant 0 : index
    %c0_48 = arith.constant 0 : index
    %54 = vector.load %arg7[%c0_47, %c0_48] : memref<512x128xf32, #tpu.memory_space<vmem>>, vector<512x128xf32>
    tpu.vector_store %arg7[%c0_47, %c0_48], %53 {strides = array<i32>} : memref<512x128xf32, #tpu.memory_space<vmem>>, vector<512x128xf32>,
    %55 = vector.extract_strided_slice %0 {offsets = [0, 2, 2, 0], sizes = [2, 16, 16, 32], strides = [1, 1, 1, 1]} : vector<2x18x18x32xbf16> to vector<2x16x16x32xbf16>
    %56 = vector.shape_cast %55 : vector<2x16x16x32xbf16> to vector<512x32xbf16>
    %c256 = arith.constant 256 : index
    %c0_49 = arith.constant 0 : index
    %57 = vector.load %arg2[%c256, %c0_49] : memref<288x128xbf16, #tpu.memory_space<vmem>>, vector<32x128xbf16>
    %cst_50 = arith.constant dense<0.000000e+00> : vector<512x128xf32>
    %58 = tpu.matmul %56, %57, %cst_50 {dimension_numbers = #tpu.dot_dimension_numbers<[1], [0], [0], [1], [0, 0, 1, 1], [], []>} : vector<512x32xbf16>, vector<32x128xbf16>, vector<512x128xf32> -> vector<512x128xf32>
    %c0_51 = arith.constant 0 : index
    %c0_52 = arith.constant 0 : index
    %59 = vector.load %arg7[%c0_51, %c0_52] : memref<512x128xf32, #tpu.memory_space<vmem>>, vector<512x128xf32>
    %60 = arith.addf %59, %58 : vector<512x128xf32>
    %c0_53 = arith.constant 0 : index
    %c0_54 = arith.constant 0 : index
    %61 = vector.load %arg7[%c0_53, %c0_54] : memref<512x128xf32, #tpu.memory_space<vmem>>, vector<512x128xf32>
    tpu.vector_store %arg7[%c0_53, %c0_54], %60 {strides = array<i32>} : memref<512x128xf32, #tpu.memory_space<vmem>>, vector<512x128xf32>,
    %c0_55 = arith.constant 0 : index
    %c0_56 = arith.constant 0 : index
    %62 = vector.load %arg7[%c0_55, %c0_56] : memref<512x128xf32, #tpu.memory_space<vmem>>, vector<512x128xf32>
    %c0_57 = arith.constant 0 : index
    %c0_58 = arith.constant 0 : index
    %63 = vector.load %arg3[%c0_57, %c0_58] : memref<1x128xf32, #tpu.memory_space<vmem>>, vector<1x128xf32>
    %64 = vector.broadcast %63 : vector<1x128xf32> to vector<512x128xf32>
    %65 = arith.addf %62, %64 : vector<512x128xf32>
    %cst_59 = arith.constant dense<0.000000e+00> : vector<128xf32>
    %66 = vector.multi_reduction <add>, %65, %cst_59 [0] : vector<512x128xf32> to vector<128xf32>
    %67 = vector.shape_cast %66 : vector<128xf32> to vector<1x128xf32>
    %cst_60 = arith.constant 5.120000e+02 : f32
    %68 = vector.broadcast %cst_60 : f32 to vector<1x128xf32>
    %69 = arith.divf %67, %68 : vector<1x128xf32>
    %70 = vector.broadcast %69 : vector<1x128xf32> to vector<512x128xf32>
    %71 = arith.subf %65, %70 : vector<512x128xf32>
    %72 = arith.mulf %71, %71 : vector<512x128xf32>
    %cst_61 = arith.constant dense<0.000000e+00> : vector<128xf32>
    %73 = vector.multi_reduction <add>, %72, %cst_61 [0] : vector<512x128xf32> to vector<128xf32>
    %74 = vector.shape_cast %73 : vector<128xf32> to vector<1x128xf32>
    %cst_62 = arith.constant 5.120000e+02 : f32
    %75 = vector.broadcast %cst_62 : f32 to vector<1x128xf32>
    %76 = arith.divf %74, %75 : vector<1x128xf32>
    %c0_63 = arith.constant 0 : index
    %c0_64 = arith.constant 0 : index
    %77 = vector.load %arg4[%c0_63, %c0_64] : memref<1x128xf32, #tpu.memory_space<vmem>>, vector<1x128xf32>
    %cst_65 = arith.constant 9.99999974E-6 : f32
    %78 = vector.broadcast %cst_65 : f32 to vector<1x128xf32>
    %79 = arith.addf %76, %78 : vector<1x128xf32>
    %80 = math.rsqrt %79 : vector<1x128xf32>
    %81 = arith.mulf %77, %80 : vector<1x128xf32>
    %c0_66 = arith.constant 0 : index
    %c0_67 = arith.constant 0 : index
    %82 = vector.load %arg5[%c0_66, %c0_67] : memref<1x128xf32, #tpu.memory_space<vmem>>, vector<1x128xf32>
    %83 = arith.mulf %69, %81 : vector<1x128xf32>
    %84 = arith.subf %82, %83 : vector<1x128xf32>
    %85 = vector.broadcast %81 : vector<1x128xf32> to vector<512x128xf32>
    %86 = arith.mulf %65, %85 : vector<512x128xf32>
    %87 = vector.broadcast %84 : vector<1x128xf32> to vector<512x128xf32>
    %88 = arith.addf %86, %87 : vector<512x128xf32>
    %cst_68 = arith.constant 0.000000e+00 : f32
    %89 = vector.broadcast %cst_68 : f32 to vector<512x128xf32>
    %90 = arith.maximumf %88, %89 : vector<512x128xf32>
    %c0_69 = arith.constant 0 : index
    %c0_70 = arith.constant 0 : index
    %91 = vector.load %arg6[%c0_69, %c0_70] : memref<512x128xf32, #tpu.memory_space<vmem>>, vector<512x128xf32>
    tpu.vector_store %arg6[%c0_69, %c0_70], %90 {strides = array<i32>} : memref<512x128xf32, #tpu.memory_space<vmem>>, vector<512x128xf32>,
    return
  }
  func.func @transform_0(%arg0: i32) -> (i32, i32, i32, i32) {
    %c0_i32 = arith.constant 0 : i32
    %c0_i32_0 = arith.constant 0 : i32
    %c0_i32_1 = arith.constant 0 : i32
    %c0_i32_2 = arith.constant 0 : i32
    %c0_i32_3 = arith.constant 0 : i32
    return %c0_i32, %c0_i32_0, %c0_i32_1, %c0_i32_2 : i32, i32, i32, i32
  }
  func.func @transform_1(%arg0: i32) -> (i32, i32) {
    %c0_i32 = arith.constant 0 : i32
    %c0_i32_0 = arith.constant 0 : i32
    %c0_i32_1 = arith.constant 0 : i32
    return %c0_i32, %c0_i32_0 : i32, i32
  }
  func.func @transform_2(%arg0: i32) -> (i32, i32) {
    %c0_i32 = arith.constant 0 : i32
    %c0_i32_0 = arith.constant 0 : i32
    %c0_i32_1 = arith.constant 0 : i32
    return %c0_i32, %c0_i32_0 : i32, i32
  }
  func.func @transform_3(%arg0: i32) -> (i32, i32) {
    %c0_i32 = arith.constant 0 : i32
    %c0_i32_0 = arith.constant 0 : i32
    %c0_i32_1 = arith.constant 0 : i32
    return %c0_i32, %c0_i32_0 : i32, i32
  }
  func.func @transform_4(%arg0: i32) -> (i32, i32) {
    %c0_i32 = arith.constant 0 : i32
    %c0_i32_0 = arith.constant 0 : i32
    %c0_i32_1 = arith.constant 0 : i32
    return %c0_i32, %c0_i32_0 : i32, i32
  }
  func.func @transform_5(%arg0: i32) -> (i32, i32) {
    %c0_i32 = arith.constant 0 : i32
    %c0_i32_0 = arith.constant 0 : i32
    %c0_i32_1 = arith.constant 0 : i32
    return %c0_i32, %c0_i32_0 : i32, i32
  }
}

</mosaic_0001>

<llo_original>
// kernel: reconstruct_forward.1
$region0: #{reconstruct_forward.1}
  #allocation0 [shape = 'u32[]', space=smem, size = 0x4, offset = 0x4, fixed_abs, tag = 'smem constant byte address 0x4 - core index']
  #allocation1 [shape = 'u32[72,128]{1,0:T(1,128)}', space=vmem, size = 0x9000, scoped, tag = 'internal scratch']
  #allocation2 [shape = 'f32[512,128]{1,0:T(8,128)}', space=vmem, size = 0x40000, scoped, tag = 'scratch operand']
  %s0 = inlined_call_operand.vmem [shape: bf16[2,18,18,32], index: 0, kind: input, shape index: {}]
  %s1 = inlined_call_operand.vmem [shape: bf16[288,128], index: 1, kind: input, shape index: {}]
  %s2 = inlined_call_operand.vmem [shape: f32[1,128], index: 2, kind: input, shape index: {}]
  %s3 = inlined_call_operand.vmem [shape: f32[1,128], index: 3, kind: input, shape index: {}]
  %s4 = inlined_call_operand.vmem [shape: f32[1,128], index: 4, kind: input, shape index: {}]
  %s5 = inlined_call_operand.vmem [shape: f32[512,128], index: 5, kind: output, shape index: {}]
  %s6 = sld [smem:[#allocation0]]
  $region30: #{reconstruct_forward.1} parent=0
    _
  %s8 = ssub.s32 1, %s6
  %s9 = scalar_select 0, %s8, %s6
  // Predicated region
  $region2: #{reconstruct_forward.1} parent=0 // pred_check
    _
  $region3: #{reconstruct_forward.1} parent=0 // pred_check_branch
    %11 = sbr.rel (0) target = $region5
  $region4: #{reconstruct_forward.1} parent=0 // pred_region
    _
  $region5: #{reconstruct_forward.1} parent=0 // pred_fallthru
    _
  // Predicated region
  $region6: #{reconstruct_forward.1} parent=0 // pred_check
    _
  $region7: #{reconstruct_forward.1} parent=0 // pred_check_branch
    %13 = sbr.rel (0) target = $region9
  $region8: #{reconstruct_forward.1} parent=0 // pred_region
    _
  $region9: #{reconstruct_forward.1} parent=0 // pred_fallthru
    _
  // Predicated region
  $region10: #{reconstruct_forward.1} parent=0 // pred_check
    _
  $region11: #{reconstruct_forward.1} parent=0 // pred_check_branch
    %15 = sbr.rel (0) target = $region13
  $region12: #{reconstruct_forward.1} parent=0 // pred_region
    _
  $region13: #{reconstruct_forward.1} parent=0 // pred_fallthru
    _
  // Predicated region
  $region14: #{reconstruct_forward.1} parent=0 // pred_check
    _
  $region15: #{reconstruct_forward.1} parent=0 // pred_check_branch
    %17 = sbr.rel (0) target = $region17
  $region16: #{reconstruct_forward.1} parent=0 // pred_region
    _
  $region17: #{reconstruct_forward.1} parent=0 // pred_fallthru
    _
  // Predicated region
  $region18: #{reconstruct_forward.1} parent=0 // pred_check
    _
  $region19: #{reconstruct_forward.1} parent=0 // pred_check_branch
    %19 = sbr.rel (0) target = $region21
  $region20: #{reconstruct_forward.1} parent=0 // pred_region
    _
  $region21: #{reconstruct_forward.1} parent=0 // pred_fallthru
    _
  %v21 = vld [vmem:[%s0] sm:$0xf]
  %v22 = vld [vmem:[%s0 + $0x4] sm:$0xf]
  %v23 = vld [vmem:[%s0 + $0x8] sm:$0x1]
  %v24 = vld [vmem:[%s0 + $0xc] sm:$0xf]
  %v25 = vld [vmem:[%s0 + $0x10] sm:$0xf]
  %v26 = vld [vmem:[%s0 + $0x14] sm:$0x1]
  %v27 = vld [vmem:[%s0 + $0x18] sm:$0xf]
  %v28 = vld [vmem:[%s0 + $0x1c] sm:$0xf]
  %v29 = vld [vmem:[%s0 + $0x20] sm:$0x1]
  %v30 = vld [vmem:[%s0 + $0x24] sm:$0xf]
  %v31 = vld [vmem:[%s0 + $0x28] sm:$0xf]
  %v32 = vld [vmem:[%s0 + $0x2c] sm:$0x1]
  %v33 = vld [vmem:[%s0 + $0x30] sm:$0xf]
  %v34 = vld [vmem:[%s0 + $0x34] sm:$0xf]
  %v35 = vld [vmem:[%s0 + $0x38] sm:$0x1]
  %v36 = vld [vmem:[%s0 + $0x3c] sm:$0xf]
  %v37 = vld [vmem:[%s0 + $0x40] sm:$0xf]
  %v38 = vld [vmem:[%s0 + $0x44] sm:$0x1]
  %v39 = vld [vmem:[%s0 + $0x48] sm:$0xf]
  %v40 = vld [vmem:[%s0 + $0x4c] sm:$0xf]
  %v41 = vld [vmem:[%s0 + $0x50] sm:$0x1]
  %v42 = vld [vmem:[%s0 + $0x54] sm:$0xf]
  %v43 = vld [vmem:[%s0 + $0x58] sm:$0xf]
  %v44 = vld [vmem:[%s0 + $0x5c] sm:$0x1]
  %v45 = vld [vmem:[%s0 + $0x60] sm:$0xf]
  %v46 = vld [vmem:[%s0 + $0x64] sm:$0xf]
  %v47 = vld [vmem:[%s0 + $0x68] sm:$0x1]
  %v48 = vld [vmem:[%s0 + $0x6c] sm:$0xf]
  %v49 = vld [vmem:[%s0 + $0x70] sm:$0xf]
  %v50 = vld [vmem:[%s0 + $0x74] sm:$0x1]
  %v51 = vld [vmem:[%s0 + $0x78] sm:$0xf]
  %v52 = vld [vmem:[%s0 + $0x7c] sm:$0xf]
  %v53 = vld [vmem:[%s0 + $0x80] sm:$0x1]
  %v54 = vld [vmem:[%s0 + $0x84] sm:$0xf]
  %v55 = vld [vmem:[%s0 + $0x88] sm:$0xf]
  %v56 = vld [vmem:[%s0 + $0x8c] sm:$0x1]
  %v57 = vld [vmem:[%s0 + $0x90] sm:$0xf]
  %v58 = vld [vmem:[%s0 + $0x94] sm:$0xf]
  %v59 = vld [vmem:[%s0 + $0x98] sm:$0x1]
  %v60 = vld [vmem:[%s0 + $0x9c] sm:$0xf]
  %v61 = vld [vmem:[%s0 + $0xa0] sm:$0xf]
  %v62 = vld [vmem:[%s0 + $0xa4] sm:$0x1]
  %v63 = vld [vmem:[%s0 + $0xa8] sm:$0xf]
  %v64 = vld [vmem:[%s0 + $0xac] sm:$0xf]
  %v65 = vld [vmem:[%s0 + $0xb0] sm:$0x1]
  %v66 = vld [vmem:[%s0 + $0xb4] sm:$0xf]
  %v67 = vld [vmem:[%s0 + $0xb8] sm:$0xf]
  %v68 = vld [vmem:[%s0 + $0xbc] sm:$0x1]
  %v69 = vld [vmem:[%s0 + $0xc0] sm:$0xf]
  %v70 = vld [vmem:[%s0 + $0xc4] sm:$0xf]
  %v71 = vld [vmem:[%s0 + $0xc8] sm:$0x1]
  %v72 = vld [vmem:[%s0 + $0xcc] sm:$0xf]
  %v73 = vld [vmem:[%s0 + $0xd0] sm:$0xf]
  %v74 = vld [vmem:[%s0 + $0xd4] sm:$0x1]
  %v75 = vld [vmem:[%s0 + $0xd8] sm:$0xf]
  %v76 = vld [vmem:[%s0 + $0xdc] sm:$0xf]
  %v77 = vld [vmem:[%s0 + $0xe0] sm:$0x1]
  %v78 = vld [vmem:[%s0 + $0xe4] sm:$0xf]
  %v79 = vld [vmem:[%s0 + $0xe8] sm:$0xf]
  %v80 = vld [vmem:[%s0 + $0xec] sm:$0x1]
  %v81 = vld [vmem:[%s0 + $0xf0] sm:$0xf]
  %v82 = vld [vmem:[%s0 + $0xf4] sm:$0xf]
  %v83 = vld [vmem:[%s0 + $0xf8] sm:$0x1]
  %v84 = vld [vmem:[%s0 + $0xfc] sm:$0xf]
  %v85 = vld [vmem:[%s0 + $0x100] sm:$0xf]
  %v86 = vld [vmem:[%s0 + $0x104] sm:$0x1]
  %v87 = vld [vmem:[%s0 + $0x108] sm:$0xf]
  %v88 = vld [vmem:[%s0 + $0x10c] sm:$0xf]
  %v89 = vld [vmem:[%s0 + $0x110] sm:$0x1]
  %v90 = vld [vmem:[%s0 + $0x114] sm:$0xf]
  %v91 = vld [vmem:[%s0 + $0x118] sm:$0xf]
  %v92 = vld [vmem:[%s0 + $0x11c] sm:$0x1]
  %v93 = vld [vmem:[%s0 + $0x120] sm:$0xf]
  %v94 = vld [vmem:[%s0 + $0x124] sm:$0xf]
  %v95 = vld [vmem:[%s0 + $0x128] sm:$0x1]
  %v96 = vld [vmem:[%s0 + $0x12c] sm:$0xf]
  %v97 = vld [vmem:[%s0 + $0x130] sm:$0xf]
  %v98 = vld [vmem:[%s0 + $0x134] sm:$0x1]
  %v99 = vld [vmem:[%s0 + $0x138] sm:$0xf]
  %v100 = vld [vmem:[%s0 + $0x13c] sm:$0xf]
  %v101 = vld [vmem:[%s0 + $0x140] sm:$0x1]
  %v102 = vld [vmem:[%s0 + $0x144] sm:$0xf]
  %v103 = vld [vmem:[%s0 + $0x148] sm:$0xf]
  %v104 = vld [vmem:[%s0 + $0x14c] sm:$0x1]
  %v105 = vld [vmem:[%s0 + $0x150] sm:$0xf]
  %v106 = vld [vmem:[%s0 + $0x154] sm:$0xf]
  %v107 = vld [vmem:[%s0 + $0x158] sm:$0x1]
  %v108 = vld [vmem:[%s0 + $0x15c] sm:$0xf]
  %v109 = vld [vmem:[%s0 + $0x160] sm:$0xf]
  %v110 = vld [vmem:[%s0 + $0x164] sm:$0x1]
  %v111 = vld [vmem:[%s0 + $0x168] sm:$0xf]
  %v112 = vld [vmem:[%s0 + $0x16c] sm:$0xf]
  %v113 = vld [vmem:[%s0 + $0x170] sm:$0x1]
  %v114 = vld [vmem:[%s0 + $0x174] sm:$0xf]
  %v115 = vld [vmem:[%s0 + $0x178] sm:$0xf]
  %v116 = vld [vmem:[%s0 + $0x17c] sm:$0x1]
  %v117 = vld [vmem:[%s0 + $0x180] sm:$0xf]
  %v118 = vld [vmem:[%s0 + $0x184] sm:$0xf]
  %v119 = vld [vmem:[%s0 + $0x188] sm:$0x1]
  %v120 = vld [vmem:[%s0 + $0x18c] sm:$0xf]
  %v121 = vld [vmem:[%s0 + $0x190] sm:$0xf]
  %v122 = vld [vmem:[%s0 + $0x194] sm:$0x1]
  %v123 = vld [vmem:[%s0 + $0x198] sm:$0xf]
  %v124 = vld [vmem:[%s0 + $0x19c] sm:$0xf]
  %v125 = vld [vmem:[%s0 + $0x1a0] sm:$0x1]
  %v126 = vld [vmem:[%s0 + $0x1a4] sm:$0xf]
  %v127 = vld [vmem:[%s0 + $0x1a8] sm:$0xf]
  %v128 = vld [vmem:[%s0 + $0x1ac] sm:$0x1]
  %v129 = vld [vmem:[%s1] sm:$0xf]
  %v130 = vld [vmem:[%s1 + $0x4] sm:$0xf]
  %v131 = vld [vmem:[%s1 + $0x8] sm:$0xf]
  %v132 = vld [vmem:[%s1 + $0xc] sm:$0xf]
  %v197 = vunpack.c.l.b16 %v21
  %v198 = vunpack.c.l.b16 %v22
  %v199 = vunpack.c.l.b16 %v24
  %v200 = vunpack.c.l.b16 %v25
  %v201 = vunpack.c.l.b16 %v27
  %v202 = vunpack.c.l.b16 %v28
  %v203 = vunpack.c.l.b16 %v30
  %v204 = vunpack.c.l.b16 %v31
  %v205 = vunpack.c.l.b16 %v33
  %v206 = vunpack.c.l.b16 %v34
  %v207 = vunpack.c.l.b16 %v36
  %v208 = vunpack.c.l.b16 %v37
  %v209 = vunpack.c.l.b16 %v39
  %v210 = vunpack.c.l.b16 %v40
  %v211 = vunpack.c.l.b16 %v42
  %v212 = vunpack.c.l.b16 %v43
  %v213 = vunpack.c.l.b16 %v45
  %v214 = vunpack.c.l.b16 %v46
  %v215 = vunpack.c.l.b16 %v48
  %v216 = vunpack.c.l.b16 %v49
  %v217 = vunpack.c.l.b16 %v51
  %v218 = vunpack.c.l.b16 %v52
  %v219 = vunpack.c.l.b16 %v54
  %v220 = vunpack.c.l.b16 %v55
  %v221 = vunpack.c.l.b16 %v57
  %v222 = vunpack.c.l.b16 %v58
  %v223 = vunpack.c.l.b16 %v60
  %v224 = vunpack.c.l.b16 %v61
  %v225 = vunpack.c.l.b16 %v63
  %v226 = vunpack.c.l.b16 %v64
  %v227 = vunpack.c.l.b16 %v66
  %v228 = vunpack.c.l.b16 %v67
  %v229 = vunpack.c.l.b16 %v75
  %v230 = vunpack.c.l.b16 %v76
  %v231 = vunpack.c.l.b16 %v78
  %v232 = vunpack.c.l.b16 %v79
  %v233 = vunpack.c.l.b16 %v81
  %v234 = vunpack.c.l.b16 %v82
  %v235 = vunpack.c.l.b16 %v84
  %v236 = vunpack.c.l.b16 %v85
  %v237 = vunpack.c.l.b16 %v87
  %v238 = vunpack.c.l.b16 %v88
  %v239 = vunpack.c.l.b16 %v90
  %v240 = vunpack.c.l.b16 %v91
  %v241 = vunpack.c.l.b16 %v93
  %v242 = vunpack.c.l.b16 %v94
  %v243 = vunpack.c.l.b16 %v96
  %v244 = vunpack.c.l.b16 %v97
  %v245 = vunpack.c.l.b16 %v99
  %v246 = vunpack.c.l.b16 %v100
  %v247 = vunpack.c.l.b16 %v102
  %v248 = vunpack.c.l.b16 %v103
  %v249 = vunpack.c.l.b16 %v105
  %v250 = vunpack.c.l.b16 %v106
  %v251 = vunpack.c.l.b16 %v108
  %v252 = vunpack.c.l.b16 %v109
  %v253 = vunpack.c.l.b16 %v111
  %v254 = vunpack.c.l.b16 %v112
  %v255 = vunpack.c.l.b16 %v114
  %v256 = vunpack.c.l.b16 %v115
  %v257 = vunpack.c.l.b16 %v117
  %v258 = vunpack.c.l.b16 %v118
  %v259 = vunpack.c.l.b16 %v120
  %v260 = vunpack.c.l.b16 %v121
  %v261 = vpack.c.b16 %v198, %v197
  %v262 = vpack.c.b16 %v200, %v199
  %v263 = vpack.c.b16 %v202, %v201
  %v264 = vpack.c.b16 %v204, %v203
  %v265 = vpack.c.b16 %v206, %v205
  %v266 = vpack.c.b16 %v208, %v207
  %v267 = vpack.c.b16 %v210, %v209
  %v268 = vpack.c.b16 %v212, %v211
  %v269 = vpack.c.b16 %v214, %v213
  %v270 = vpack.c.b16 %v216, %v215
  %v271 = vpack.c.b16 %v218, %v217
  %v272 = vpack.c.b16 %v220, %v219
  %v273 = vpack.c.b16 %v222, %v221
  %v274 = vpack.c.b16 %v224, %v223
  %v275 = vpack.c.b16 %v226, %v225
  %v276 = vpack.c.b16 %v228, %v227
  %v277 = vpack.c.b16 %v230, %v229
  %v278 = vpack.c.b16 %v232, %v231
  %v279 = vpack.c.b16 %v234, %v233
  %v280 = vpack.c.b16 %v236, %v235
  %v281 = vpack.c.b16 %v238, %v237
  %v282 = vpack.c.b16 %v240, %v239
  %v283 = vpack.c.b16 %v242, %v241
  %v284 = vpack.c.b16 %v244, %v243
  %v285 = vpack.c.b16 %v246, %v245
  %v286 = vpack.c.b16 %v248, %v247
  %v287 = vpack.c.b16 %v250, %v249
  %v288 = vpack.c.b16 %v252, %v251
  %v289 = vpack.c.b16 %v254, %v253
  %v290 = vpack.c.b16 %v256, %v255
  %v291 = vpack.c.b16 %v258, %v257
  %v292 = vpack.c.b16 %v260, %v259
  %v297 = vunpack.c.l.b16 %v129
  %v298 = vunpack.c.l.b16 %v130
  %v299 = vunpack.c.l.b16 %v131
  %v300 = vunpack.c.l.b16 %v132
  %v301 = vpack.c.b16 %v298, %v297
  %v302 = vpack.c.b16 %v300, %v299
  %vm305 = vcmask 261120
  %v307 = vsel %vm305, %v261, 0
  %v310 = vsel %vm305, %v262, 0
  %v313 = vsel %vm305, %v263, 0
  %v316 = vsel %vm305, %v264, 0
  %v319 = vsel %vm305, %v265, 0
  %v322 = vsel %vm305, %v266, 0
  %v325 = vsel %vm305, %v267, 0
  %v328 = vsel %vm305, %v268, 0
  %v331 = vsel %vm305, %v269, 0
  %v334 = vsel %vm305, %v270, 0
  %v337 = vsel %vm305, %v271, 0
  %v340 = vsel %vm305, %v272, 0
  %v343 = vsel %vm305, %v273, 0
  %v346 = vsel %vm305, %v274, 0
  %v349 = vsel %vm305, %v275, 0
  %v352 = vsel %vm305, %v276, 0
  %v355 = vsel %vm305, %v277, 0
  %v358 = vsel %vm305, %v278, 0
  %v361 = vsel %vm305, %v279, 0
  %v364 = vsel %vm305, %v280, 0
  %v367 = vsel %vm305, %v281, 0
  %v370 = vsel %vm305, %v282, 0
  %v373 = vsel %vm305, %v283, 0
  %v376 = vsel %vm305, %v284, 0
  %v379 = vsel %vm305, %v285, 0
  %v382 = vsel %vm305, %v286, 0
  %v385 = vsel %vm305, %v287, 0
  %v388 = vsel %vm305, %v288, 0
  %v391 = vsel %vm305, %v289, 0
  %v394 = vsel %vm305, %v290, 0
  %v397 = vsel %vm305, %v291, 0
  %v400 = vsel %vm305, %v292, 0
  %402 = vmatpush.bf16.msra.mxu0 0
  %403 = vmatpush.bf16.msra.mxu0 0
  %404 = vmatpush.bf16.msra.mxu0 0
  %405 = vmatpush.bf16.msra.mxu0 0
  %406 = vmatpush.bf16.msra.mxu0 0
  %407 = vmatpush.bf16.msra.mxu0 0
  %408 = vmatpush.bf16.msra.mxu0 %v302
  %409 = vmatpush.bf16.msra.mxu0 %v301
  %410 = vmatmul.bf16.gmra.mxu0 %v307
  %v411 = vpop.f32.mrf.mxu0
  %v412 = vadd.f32 0.0, %v411
  %v413 = vpop.f32.mrf.mxu0
  %v414 = vadd.f32 0.0, %v413
  %415 = vmatmul.bf16.gmra.mxu0 %v310
  %v416 = vpop.f32.mrf.mxu0
  %v417 = vadd.f32 0.0, %v416
  %v418 = vpop.f32.mrf.mxu0
  %v419 = vadd.f32 0.0, %v418
  %420 = vmatmul.bf16.gmra.mxu0 %v313
  %v421 = vpop.f32.mrf.mxu0
  %v422 = vadd.f32 0.0, %v421
  %v423 = vpop.f32.mrf.mxu0
  %v424 = vadd.f32 0.0, %v423
  %425 = vmatmul.bf16.gmra.mxu0 %v316
  %v426 = vpop.f32.mrf.mxu0
  %v427 = vadd.f32 0.0, %v426
  %v428 = vpop.f32.mrf.mxu0
  %v429 = vadd.f32 0.0, %v428
  %430 = vmatmul.bf16.gmra.mxu0 %v319
  %v431 = vpop.f32.mrf.mxu0
  %v432 = vadd.f32 0.0, %v431
  %v433 = vpop.f32.mrf.mxu0
  %v434 = vadd.f32 0.0, %v433
  %435 = vmatmul.bf16.gmra.mxu0 %v322
  %v436 = vpop.f32.mrf.mxu0
  %v437 = vadd.f32 0.0, %v436
  %v438 = vpop.f32.mrf.mxu0
  %v439 = vadd.f32 0.0, %v438
  %440 = vmatmul.bf16.gmra.mxu0 %v325
  %v441 = vpop.f32.mrf.mxu0
  %v442 = vadd.f32 0.0, %v441
  %v443 = vpop.f32.mrf.mxu0
  %v444 = vadd.f32 0.0, %v443
  %445 = vmatmul.bf16.gmra.mxu0 %v328
  %v446 = vpop.f32.mrf.mxu0
  %v447 = vadd.f32 0.0, %v446
  %v448 = vpop.f32.mrf.mxu0
  %v449 = vadd.f32 0.0, %v448
  %450 = vmatmul.bf16.gmra.mxu0 %v331
  %v451 = vpop.f32.mrf.mxu0
  %v452 = vadd.f32 0.0, %v451
  %v453 = vpop.f32.mrf.mxu0
  %v454 = vadd.f32 0.0, %v453
  %455 = vmatmul.bf16.gmra.mxu0 %v334
  %v456 = vpop.f32.mrf.mxu0
  %v457 = vadd.f32 0.0, %v456
  %v458 = vpop.f32.mrf.mxu0
  %v459 = vadd.f32 0.0, %v458
  %460 = vmatmul.bf16.gmra.mxu0 %v337
  %v461 = vpop.f32.mrf.mxu0
  %v462 = vadd.f32 0.0, %v461
  %v463 = vpop.f32.mrf.mxu0
  %v464 = vadd.f32 0.0, %v463
  %465 = vmatmul.bf16.gmra.mxu0 %v340
  %v466 = vpop.f32.mrf.mxu0
  %v467 = vadd.f32 0.0, %v466
  %v468 = vpop.f32.mrf.mxu0
  %v469 = vadd.f32 0.0, %v468
  %470 = vmatmul.bf16.gmra.mxu0 %v343
  %v471 = vpop.f32.mrf.mxu0
  %v472 = vadd.f32 0.0, %v471
  %v473 = vpop.f32.mrf.mxu0
  %v474 = vadd.f32 0.0, %v473
  %475 = vmatmul.bf16.gmra.mxu0 %v346
  %v476 = vpop.f32.mrf.mxu0
  %v477 = vadd.f32 0.0, %v476
  %v478 = vpop.f32.mrf.mxu0
  %v479 = vadd.f32 0.0, %v478
  %480 = vmatmul.bf16.gmra.mxu0 %v349
  %v481 = vpop.f32.mrf.mxu0
  %v482 = vadd.f32 0.0, %v481
  %v483 = vpop.f32.mrf.mxu0
  %v484 = vadd.f32 0.0, %v483
  %485 = vmatmul.bf16.gmra.mxu0 %v352
  %v486 = vpop.f32.mrf.mxu0
  %v487 = vadd.f32 0.0, %v486
  %v488 = vpop.f32.mrf.mxu0
  %v489 = vadd.f32 0.0, %v488
  %490 = vmatmul.bf16.gmra.mxu0 %v355
  %v491 = vpop.f32.mrf.mxu0
  %v492 = vadd.f32 0.0, %v491
  %v493 = vpop.f32.mrf.mxu0
  %v494 = vadd.f32 0.0, %v493
  %495 = vmatmul.bf16.gmra.mxu0 %v358
  %v496 = vpop.f32.mrf.mxu0
  %v497 = vadd.f32 0.0, %v496
  %v498 = vpop.f32.mrf.mxu0
  %v499 = vadd.f32 0.0, %v498
  %500 = vmatmul.bf16.gmra.mxu0 %v361
  %v501 = vpop.f32.mrf.mxu0
  %v502 = vadd.f32 0.0, %v501
  %v503 = vpop.f32.mrf.mxu0
  %v504 = vadd.f32 0.0, %v503
  %505 = vmatmul.bf16.gmra.mxu0 %v364
  %v506 = vpop.f32.mrf.mxu0
  %v507 = vadd.f32 0.0, %v506
  %v508 = vpop.f32.mrf.mxu0
  %v509 = vadd.f32 0.0, %v508
  %510 = vmatmul.bf16.gmra.mxu0 %v367
  %v511 = vpop.f32.mrf.mxu0
  %v512 = vadd.f32 0.0, %v511
  %v513 = vpop.f32.mrf.mxu0
  %v514 = vadd.f32 0.0, %v513
  %515 = vmatmul.bf16.gmra.mxu0 %v370
  %v516 = vpop.f32.mrf.mxu0
  %v517 = vadd.f32 0.0, %v516
  %v518 = vpop.f32.mrf.mxu0
  %v519 = vadd.f32 0.0, %v518
  %520 = vmatmul.bf16.gmra.mxu0 %v373
  %v521 = vpop.f32.mrf.mxu0
  %v522 = vadd.f32 0.0, %v521
  %v523 = vpop.f32.mrf.mxu0
  %v524 = vadd.f32 0.0, %v523
  %525 = vmatmul.bf16.gmra.mxu0 %v376
  %v526 = vpop.f32.mrf.mxu0
  %v527 = vadd.f32 0.0, %v526
  %v528 = vpop.f32.mrf.mxu0
  %v529 = vadd.f32 0.0, %v528
  %530 = vmatmul.bf16.gmra.mxu0 %v379
  %v531 = vpop.f32.mrf.mxu0
  %v532 = vadd.f32 0.0, %v531
  %v533 = vpop.f32.mrf.mxu0
  %v534 = vadd.f32 0.0, %v533
  %535 = vmatmul.bf16.gmra.mxu0 %v382
  %v536 = vpop.f32.mrf.mxu0
  %v537 = vadd.f32 0.0, %v536
  %v538 = vpop.f32.mrf.mxu0
  %v539 = vadd.f32 0.0, %v538
  %540 = vmatmul.bf16.gmra.mxu0 %v385
  %v541 = vpop.f32.mrf.mxu0
  %v542 = vadd.f32 0.0, %v541
  %v543 = vpop.f32.mrf.mxu0
  %v544 = vadd.f32 0.0, %v543
  %545 = vmatmul.bf16.gmra.mxu0 %v388
  %v546 = vpop.f32.mrf.mxu0
  %v547 = vadd.f32 0.0, %v546
  %v548 = vpop.f32.mrf.mxu0
  %v549 = vadd.f32 0.0, %v548
  %550 = vmatmul.bf16.gmra.mxu0 %v391
  %v551 = vpop.f32.mrf.mxu0
  %v552 = vadd.f32 0.0, %v551
  %v553 = vpop.f32.mrf.mxu0
  %v554 = vadd.f32 0.0, %v553
  %555 = vmatmul.bf16.gmra.mxu0 %v394
  %v556 = vpop.f32.mrf.mxu0
  %v557 = vadd.f32 0.0, %v556
  %v558 = vpop.f32.mrf.mxu0
  %v559 = vadd.f32 0.0, %v558
  %560 = vmatmul.bf16.gmra.mxu0 %v397
  %v561 = vpop.f32.mrf.mxu0
  %v562 = vadd.f32 0.0, %v561
  %v563 = vpop.f32.mrf.mxu0
  %v564 = vadd.f32 0.0, %v563
  %565 = vmatmul.bf16.gmra.mxu0 %v400
  %v566 = vpop.f32.mrf.mxu0
  %v567 = vadd.f32 0.0, %v566
  %v568 = vpop.f32.mrf.mxu0
  %v569 = vadd.f32 0.0, %v568
  %570 = vdwg.mxu0
  %571 = vst [vmem:[#allocation2] sm:$0xff] %v412
  %572 = vst [vmem:[#allocation2 + $0x8] sm:$0xff] %v414
  %573 = vst [vmem:[#allocation2 + $0x10] sm:$0xff] %v417
  %574 = vst [vmem:[#allocation2 + $0x18] sm:$0xff] %v419
  %575 = vst [vmem:[#allocation2 + $0x20] sm:$0xff] %v422
  %576 = vst [vmem:[#allocation2 + $0x28] sm:$0xff] %v424
  %577 = vst [vmem:[#allocation2 + $0x30] sm:$0xff] %v427
  %578 = vst [vmem:[#allocation2 + $0x38] sm:$0xff] %v429
  %579 = vst [vmem:[#allocation2 + $0x40] sm:$0xff] %v432
  %580 = vst [vmem:[#allocation2 + $0x48] sm:$0xff] %v434
  %581 = vst [vmem:[#allocation2 + $0x50] sm:$0xff] %v437
  %582 = vst [vmem:[#allocation2 + $0x58] sm:$0xff] %v439
  %583 = vst [vmem:[#allocation2 + $0x60] sm:$0xff] %v442
  %584 = vst [vmem:[#allocation2 + $0x68] sm:$0xff] %v444
  %585 = vst [vmem:[#allocation2 + $0x70] sm:$0xff] %v447
  %586 = vst [vmem:[#allocation2 + $0x78] sm:$0xff] %v449
  %587 = vst [vmem:[#allocation2 + $0x80] sm:$0xff] %v452
  %588 = vst [vmem:[#allocation2 + $0x88] sm:$0xff] %v454
  %589 = vst [vmem:[#allocation2 + $0x90] sm:$0xff] %v457
  %590 = vst [vmem:[#allocation2 + $0x98] sm:$0xff] %v459
  %591 = vst [vmem:[#allocation2 + $0xa0] sm:$0xff] %v462
  %592 = vst [vmem:[#allocation2 + $0xa8] sm:$0xff] %v464
  %593 = vst [vmem:[#allocation2 + $0xb0] sm:$0xff] %v467
  %594 = vst [vmem:[#allocation2 + $0xb8] sm:$0xff] %v469
  %595 = vst [vmem:[#allocation2 + $0xc0] sm:$0xff] %v472
  %596 = vst [vmem:[#allocation2 + $0xc8] sm:$0xff] %v474
  %597 = vst [vmem:[#allocation2 + $0xd0] sm:$0xff] %v477
  %598 = vst [vmem:[#allocation2 + $0xd8] sm:$0xff] %v479
  %599 = vst [vmem:[#allocation2 + $0xe0] sm:$0xff] %v482
  %600 = vst [vmem:[#allocation2 + $0xe8] sm:$0xff] %v484
  %601 = vst [vmem:[#allocation2 + $0xf0] sm:$0xff] %v487
  %602 = vst [vmem:[#allocation2 + $0xf8] sm:$0xff] %v489
  %603 = vst [vmem:[#allocation2 + $0x100] sm:$0xff] %v492
  %604 = vst [vmem:[#allocation2 + $0x108] sm:$0xff] %v494
  %605 = vst [vmem:[#allocation2 + $0x110] sm:$0xff] %v497
  %606 = vst [vmem:[#allocation2 + $0x118] sm:$0xff] %v499
  %607 = vst [vmem:[#allocation2 + $0x120] sm:$0xff] %v502
  %608 = vst [vmem:[#allocation2 + $0x128] sm:$0xff] %v504
  %609 = vst [vmem:[#allocation2 + $0x130] sm:$0xff] %v507
  %610 = vst [vmem:[#allocation2 + $0x138] sm:$0xff] %v509
  %611 = vst [vmem:[#allocation2 + $0x140] sm:$0xff] %v512
  %612 = vst [vmem:[#allocation2 + $0x148] sm:$0xff] %v514
  %613 = vst [vmem:[#allocation2 + $0x150] sm:$0xff] %v517
  %614 = vst [vmem:[#allocation2 + $0x158] sm:$0xff] %v519
  %615 = vst [vmem:[#allocation2 + $0x160] sm:$0xff] %v522
  %616 = vst [vmem:[#allocation2 + $0x168] sm:$0xff] %v524
  %617 = vst [vmem:[#allocation2 + $0x170] sm:$0xff] %v527
  %618 = vst [vmem:[#allocation2 + $0x178] sm:$0xff] %v529
  %619 = vst [vmem:[#allocation2 + $0x180] sm:$0xff] %v532
  %620 = vst [vmem:[#allocation2 + $0x188] sm:$0xff] %v534
  %621 = vst [vmem:[#allocation2 + $0x190] sm:$0xff] %v537
  %622 = vst [vmem:[#allocation2 + $0x198] sm:$0xff] %v539
  %623 = vst [vmem:[#allocation2 + $0x1a0] sm:$0xff] %v542
  %624 = vst [vmem:[#allocation2 + $0x1a8] sm:$0xff] %v544
  %625 = vst [vmem:[#allocation2 + $0x1b0] sm:$0xff] %v547
  %626 = vst [vmem:[#allocation2 + $0x1b8] sm:$0xff] %v549
  %627 = vst [vmem:[#allocation2 + $0x1c0] sm:$0xff] %v552
  %628 = vst [vmem:[#allocation2 + $0x1c8] sm:$0xff] %v554
  %629 = vst [vmem:[#allocation2 + $0x1d0] sm:$0xff] %v557
  %630 = vst [vmem:[#allocation2 + $0x1d8] sm:$0xff] %v559
  %631 = vst [vmem:[#allocation2 + $0x1e0] sm:$0xff] %v562
  %632 = vst [vmem:[#allocation2 + $0x1e8] sm:$0xff] %v564
  %633 = vst [vmem:[#allocation2 + $0x1f0] sm:$0xff] %v567
  %634 = vst [vmem:[#allocation2 + $0x1f8] sm:$0xff] %v569
  %vm635 = vsmask.f32 3328
  %vm636 = vsmask.f32 7440
  %vm637 = vmor %vm635, %vm636
  %v639 = vshrl.u32 %v21, 16
  %v641 = vrot.slane %v639, 4
  %v642 = vshll.u32 %v21, 16
  %v644 = vrot.slane %v642, 5
  %v645 = vor.u32 %v641, %v644
  %v646 = vrot.slane %v645, 4
  %v648 = vshll.u32 %v22, 16
  %v650 = vrot.slane %v648, 5
  %v651 = vsel %vm637, %v646, %v650
  %v652 = vshrl.u32 %v22, 16
  %v654 = vrot.slane %v652, 4
  %v655 = vor.u32 %v654, %v650
  %v656 = vrot.slane %v655, 4
  %v658 = vshll.u32 %v23, 16
  %v660 = vrot.slane %v658, 5
  %v661 = vsel %vm637, %v656, %v660
  %v663 = vshrl.u32 %v24, 16
  %v665 = vrot.slane %v663, 4
  %v666 = vshll.u32 %v24, 16
  %v668 = vrot.slane %v666, 5
  %v669 = vor.u32 %v665, %v668
  %v670 = vrot.slane %v669, 4
  %v672 = vshll.u32 %v25, 16
  %v674 = vrot.slane %v672, 5
  %v675 = vsel %vm637, %v670, %v674
  %v676 = vshrl.u32 %v25, 16
  %v678 = vrot.slane %v676, 4
  %v679 = vor.u32 %v678, %v674
  %v680 = vrot.slane %v679, 4
  %v682 = vshll.u32 %v26, 16
  %v684 = vrot.slane %v682, 5
  %v685 = vsel %vm637, %v680, %v684
  %v687 = vshrl.u32 %v27, 16
  %v689 = vrot.slane %v687, 4
  %v690 = vshll.u32 %v27, 16
  %v692 = vrot.slane %v690, 5
  %v693 = vor.u32 %v689, %v692
  %v694 = vrot.slane %v693, 4
  %v696 = vshll.u32 %v28, 16
  %v698 = vrot.slane %v696, 5
  %v699 = vsel %vm637, %v694, %v698
  %v700 = vshrl.u32 %v28, 16
  %v702 = vrot.slane %v700, 4
  %v703 = vor.u32 %v702, %v698
  %v704 = vrot.slane %v703, 4
  %v706 = vshll.u32 %v29, 16
  %v708 = vrot.slane %v706, 5
  %v709 = vsel %vm637, %v704, %v708
  %v711 = vshrl.u32 %v30, 16
  %v713 = vrot.slane %v711, 4
  %v714 = vshll.u32 %v30, 16
  %v716 = vrot.slane %v714, 5
  %v717 = vor.u32 %v713, %v716
  %v718 = vrot.slane %v717, 4
  %v720 = vshll.u32 %v31, 16
  %v722 = vrot.slane %v720, 5
  %v723 = vsel %vm637, %v718, %v722
  %v724 = vshrl.u32 %v31, 16
  %v726 = vrot.slane %v724, 4
  %v727 = vor.u32 %v726, %v722
  %v728 = vrot.slane %v727, 4
  %v730 = vshll.u32 %v32, 16
  %v732 = vrot.slane %v730, 5
  %v733 = vsel %vm637, %v728, %v732
  %v735 = vshrl.u32 %v33, 16
  %v737 = vrot.slane %v735, 4
  %v738 = vshll.u32 %v33, 16
  %v740 = vrot.slane %v738, 5
  %v741 = vor.u32 %v737, %v740
  %v742 = vrot.slane %v741, 4
  %v744 = vshll.u32 %v34, 16
  %v746 = vrot.slane %v744, 5
  %v747 = vsel %vm637, %v742, %v746
  %v748 = vshrl.u32 %v34, 16
  %v750 = vrot.slane %v748, 4
  %v751 = vor.u32 %v750, %v746
  %v752 = vrot.slane %v751, 4
  %v754 = vshll.u32 %v35, 16
  %v756 = vrot.slane %v754, 5
  %v757 = vsel %vm637, %v752, %v756
  %v759 = vshrl.u32 %v36, 16
  %v761 = vrot.slane %v759, 4
  %v762 = vshll.u32 %v36, 16
  %v764 = vrot.slane %v762, 5
  %v765 = vor.u32 %v761, %v764
  %v766 = vrot.slane %v765, 4
  %v768 = vshll.u32 %v37, 16
  %v770 = vrot.slane %v768, 5
  %v771 = vsel %vm637, %v766, %v770
  %v772 = vshrl.u32 %v37, 16
  %v774 = vrot.slane %v772, 4
  %v775 = vor.u32 %v774, %v770
  %v776 = vrot.slane %v775, 4
  %v778 = vshll.u32 %v38, 16
  %v780 = vrot.slane %v778, 5
  %v781 = vsel %vm637, %v776, %v780
  %v783 = vshrl.u32 %v39, 16
  %v785 = vrot.slane %v783, 4
  %v786 = vshll.u32 %v39, 16
  %v788 = vrot.slane %v786, 5
  %v789 = vor.u32 %v785, %v788
  %v790 = vrot.slane %v789, 4
  %v792 = vshll.u32 %v40, 16
  %v794 = vrot.slane %v792, 5
  %v795 = vsel %vm637, %v790, %v794
  %v796 = vshrl.u32 %v40, 16
  %v798 = vrot.slane %v796, 4
  %v799 = vor.u32 %v798, %v794
  %v800 = vrot.slane %v799, 4
  %v802 = vshll.u32 %v41, 16
  %v804 = vrot.slane %v802, 5
  %v805 = vsel %vm637, %v800, %v804
  %v807 = vshrl.u32 %v42, 16
  %v809 = vrot.slane %v807, 4
  %v810 = vshll.u32 %v42, 16
  %v812 = vrot.slane %v810, 5
  %v813 = vor.u32 %v809, %v812
  %v814 = vrot.slane %v813, 4
  %v816 = vshll.u32 %v43, 16
  %v818 = vrot.slane %v816, 5
  %v819 = vsel %vm637, %v814, %v818
  %v820 = vshrl.u32 %v43, 16
  %v822 = vrot.slane %v820, 4
  %v823 = vor.u32 %v822, %v818
  %v824 = vrot.slane %v823, 4
  %v826 = vshll.u32 %v44, 16
  %v828 = vrot.slane %v826, 5
  %v829 = vsel %vm637, %v824, %v828
  %v831 = vshrl.u32 %v45, 16
  %v833 = vrot.slane %v831, 4
  %v834 = vshll.u32 %v45, 16
  %v836 = vrot.slane %v834, 5
  %v837 = vor.u32 %v833, %v836
  %v838 = vrot.slane %v837, 4
  %v840 = vshll.u32 %v46, 16
  %v842 = vrot.slane %v840, 5
  %v843 = vsel %vm637, %v838, %v842
  %v844 = vshrl.u32 %v46, 16
  %v846 = vrot.slane %v844, 4
  %v847 = vor.u32 %v846, %v842
  %v848 = vrot.slane %v847, 4
  %v850 = vshll.u32 %v47, 16
  %v852 = vrot.slane %v850, 5
  %v853 = vsel %vm637, %v848, %v852
  %v855 = vshrl.u32 %v48, 16
  %v857 = vrot.slane %v855, 4
  %v858 = vshll.u32 %v48, 16
  %v860 = vrot.slane %v858, 5
  %v861 = vor.u32 %v857, %v860
  %v862 = vrot.slane %v861, 4
  %v864 = vshll.u32 %v49, 16
  %v866 = vrot.slane %v864, 5
  %v867 = vsel %vm637, %v862, %v866
  %v868 = vshrl.u32 %v49, 16
  %v870 = vrot.slane %v868, 4
  %v871 = vor.u32 %v870, %v866
  %v872 = vrot.slane %v871, 4
  %v874 = vshll.u32 %v50, 16
  %v876 = vrot.slane %v874, 5
  %v877 = vsel %vm637, %v872, %v876
  %v879 = vshrl.u32 %v51, 16
  %v881 = vrot.slane %v879, 4
  %v882 = vshll.u32 %v51, 16
  %v884 = vrot.slane %v882, 5
  %v885 = vor.u32 %v881, %v884
  %v886 = vrot.slane %v885, 4
  %v888 = vshll.u32 %v52, 16
  %v890 = vrot.slane %v888, 5
  %v891 = vsel %vm637, %v886, %v890
  %v892 = vshrl.u32 %v52, 16
  %v894 = vrot.slane %v892, 4
  %v895 = vor.u32 %v894, %v890
  %v896 = vrot.slane %v895, 4
  %v898 = vshll.u32 %v53, 16
  %v900 = vrot.slane %v898, 5
  %v901 = vsel %vm637, %v896, %v900
  %v903 = vshrl.u32 %v54, 16
  %v905 = vrot.slane %v903, 4
  %v906 = vshll.u32 %v54, 16
  %v908 = vrot.slane %v906, 5
  %v909 = vor.u32 %v905, %v908
  %v910 = vrot.slane %v909, 4
  %v912 = vshll.u32 %v55, 16
  %v914 = vrot.slane %v912, 5
  %v915 = vsel %vm637, %v910, %v914
  %v916 = vshrl.u32 %v55, 16
  %v918 = vrot.slane %v916, 4
  %v919 = vor.u32 %v918, %v914
  %v920 = vrot.slane %v919, 4
  %v922 = vshll.u32 %v56, 16
  %v924 = vrot.slane %v922, 5
  %v925 = vsel %vm637, %v920, %v924
  %v927 = vshrl.u32 %v57, 16
  %v929 = vrot.slane %v927, 4
  %v930 = vshll.u32 %v57, 16
  %v932 = vrot.slane %v930, 5
  %v933 = vor.u32 %v929, %v932
  %v934 = vrot.slane %v933, 4
  %v936 = vshll.u32 %v58, 16
  %v938 = vrot.slane %v936, 5
  %v939 = vsel %vm637, %v934, %v938
  %v940 = vshrl.u32 %v58, 16
  %v942 = vrot.slane %v940, 4
  %v943 = vor.u32 %v942, %v938
  %v944 = vrot.slane %v943, 4
  %v946 = vshll.u32 %v59, 16
  %v948 = vrot.slane %v946, 5
  %v949 = vsel %vm637, %v944, %v948
  %v951 = vshrl.u32 %v60, 16
  %v953 = vrot.slane %v951, 4
  %v954 = vshll.u32 %v60, 16
  %v956 = vrot.slane %v954, 5
  %v957 = vor.u32 %v953, %v956
  %v958 = vrot.slane %v957, 4
  %v960 = vshll.u32 %v61, 16
  %v962 = vrot.slane %v960, 5
  %v963 = vsel %vm637, %v958, %v962
  %v964 = vshrl.u32 %v61, 16
  %v966 = vrot.slane %v964, 4
  %v967 = vor.u32 %v966, %v962
  %v968 = vrot.slane %v967, 4
  %v970 = vshll.u32 %v62, 16
  %v972 = vrot.slane %v970, 5
  %v973 = vsel %vm637, %v968, %v972
  %v975 = vshrl.u32 %v63, 16
  %v977 = vrot.slane %v975, 4
  %v978 = vshll.u32 %v63, 16
  %v980 = vrot.slane %v978, 5
  %v981 = vor.u32 %v977, %v980
  %v982 = vrot.slane %v981, 4
  %v984 = vshll.u32 %v64, 16
  %v986 = vrot.slane %v984, 5
  %v987 = vsel %vm637, %v982, %v986
  %v988 = vshrl.u32 %v64, 16
  %v990 = vrot.slane %v988, 4
  %v991 = vor.u32 %v990, %v986
  %v992 = vrot.slane %v991, 4
  %v994 = vshll.u32 %v65, 16
  %v996 = vrot.slane %v994, 5
  %v997 = vsel %vm637, %v992, %v996
  %v999 = vshrl.u32 %v66, 16
  %v1001 = vrot.slane %v999, 4
  %v1002 = vshll.u32 %v66, 16
  %v1004 = vrot.slane %v1002, 5
  %v1005 = vor.u32 %v1001, %v1004
  %v1006 = vrot.slane %v1005, 4
  %v1008 = vshll.u32 %v67, 16
  %v1010 = vrot.slane %v1008, 5
  %v1011 = vsel %vm637, %v1006, %v1010
  %v1012 = vshrl.u32 %v67, 16
  %v1014 = vrot.slane %v1012, 4
  %v1015 = vor.u32 %v1014, %v1010
  %v1016 = vrot.slane %v1015, 4
  %v1018 = vshll.u32 %v68, 16
  %v1020 = vrot.slane %v1018, 5
  %v1021 = vsel %vm637, %v1016, %v1020
  %v1023 = vshrl.u32 %v75, 16
  %v1025 = vrot.slane %v1023, 4
  %v1026 = vshll.u32 %v75, 16
  %v1028 = vrot.slane %v1026, 5
  %v1029 = vor.u32 %v1025, %v1028
  %v1030 = vrot.slane %v1029, 4
  %v1032 = vshll.u32 %v76, 16
  %v1034 = vrot.slane %v1032, 5
  %v1035 = vsel %vm637, %v1030, %v1034
  %v1036 = vshrl.u32 %v76, 16
  %v1038 = vrot.slane %v1036, 4
  %v1039 = vor.u32 %v1038, %v1034
  %v1040 = vrot.slane %v1039, 4
  %v1042 = vshll.u32 %v77, 16
  %v1044 = vrot.slane %v1042, 5
  %v1045 = vsel %vm637, %v1040, %v1044
  %v1047 = vshrl.u32 %v78, 16
  %v1049 = vrot.slane %v1047, 4
  %v1050 = vshll.u32 %v78, 16
  %v1052 = vrot.slane %v1050, 5
  %v1053 = vor.u32 %v1049, %v1052
  %v1054 = vrot.slane %v1053, 4
  %v1056 = vshll.u32 %v79, 16
  %v1058 = vrot.slane %v1056, 5
  %v1059 = vsel %vm637, %v1054, %v1058
  %v1060 = vshrl.u32 %v79, 16
  %v1062 = vrot.slane %v1060, 4
  %v1063 = vor.u32 %v1062, %v1058
  %v1064 = vrot.slane %v1063, 4
  %v1066 = vshll.u32 %v80, 16
  %v1068 = vrot.slane %v1066, 5
  %v1069 = vsel %vm637, %v1064, %v1068
  %v1071 = vshrl.u32 %v81, 16
  %v1073 = vrot.slane %v1071, 4
  %v1074 = vshll.u32 %v81, 16
  %v1076 = vrot.slane %v1074, 5
  %v1077 = vor.u32 %v1073, %v1076
  %v1078 = vrot.slane %v1077, 4
  %v1080 = vshll.u32 %v82, 16
  %v1082 = vrot.slane %v1080, 5
  %v1083 = vsel %vm637, %v1078, %v1082
  %v1084 = vshrl.u32 %v82, 16
  %v1086 = vrot.slane %v1084, 4
  %v1087 = vor.u32 %v1086, %v1082
  %v1088 = vrot.slane %v1087, 4
  %v1090 = vshll.u32 %v83, 16
  %v1092 = vrot.slane %v1090, 5
  %v1093 = vsel %vm637, %v1088, %v1092
  %v1095 = vshrl.u32 %v84, 16
  %v1097 = vrot.slane %v1095, 4
  %v1098 = vshll.u32 %v84, 16
  %v1100 = vrot.slane %v1098, 5
  %v1101 = vor.u32 %v1097, %v1100
  %v1102 = vrot.slane %v1101, 4
  %v1104 = vshll.u32 %v85, 16
  %v1106 = vrot.slane %v1104, 5
  %v1107 = vsel %vm637, %v1102, %v1106
  %v1108 = vshrl.u32 %v85, 16
  %v1110 = vrot.slane %v1108, 4
  %v1111 = vor.u32 %v1110, %v1106
  %v1112 = vrot.slane %v1111, 4
  %v1114 = vshll.u32 %v86, 16
  %v1116 = vrot.slane %v1114, 5
  %v1117 = vsel %vm637, %v1112, %v1116
  %v1119 = vshrl.u32 %v87, 16
  %v1121 = vrot.slane %v1119, 4
  %v1122 = vshll.u32 %v87, 16
  %v1124 = vrot.slane %v1122, 5
  %v1125 = vor.u32 %v1121, %v1124
  %v1126 = vrot.slane %v1125, 4
  %v1128 = vshll.u32 %v88, 16
  %v1130 = vrot.slane %v1128, 5
  %v1131 = vsel %vm637, %v1126, %v1130
  %v1132 = vshrl.u32 %v88, 16
  %v1134 = vrot.slane %v1132, 4
  %v1135 = vor.u32 %v1134, %v1130
  %v1136 = vrot.slane %v1135, 4
  %v1138 = vshll.u32 %v89, 16
  %v1140 = vrot.slane %v1138, 5
  %v1141 = vsel %vm637, %v1136, %v1140
  %v1143 = vshrl.u32 %v90, 16
  %v1145 = vrot.slane %v1143, 4
  %v1146 = vshll.u32 %v90, 16
  %v1148 = vrot.slane %v1146, 5
  %v1149 = vor.u32 %v1145, %v1148
  %v1150 = vrot.slane %v1149, 4
  %v1152 = vshll.u32 %v91, 16
  %v1154 = vrot.slane %v1152, 5
  %v1155 = vsel %vm637, %v1150, %v1154
  %v1156 = vshrl.u32 %v91, 16
  %v1158 = vrot.slane %v1156, 4
  %v1159 = vor.u32 %v1158, %v1154
  %v1160 = vrot.slane %v1159, 4
  %v1162 = vshll.u32 %v92, 16
  %v1164 = vrot.slane %v1162, 5
  %v1165 = vsel %vm637, %v1160, %v1164
  %v1167 = vshrl.u32 %v93, 16
  %v1169 = vrot.slane %v1167, 4
  %v1170 = vshll.u32 %v93, 16
  %v1172 = vrot.slane %v1170, 5
  %v1173 = vor.u32 %v1169, %v1172
  %v1174 = vrot.slane %v1173, 4
  %v1176 = vshll.u32 %v94, 16
  %v1178 = vrot.slane %v1176, 5
  %v1179 = vsel %vm637, %v1174, %v1178
  %v1180 = vshrl.u32 %v94, 16
  %v1182 = vrot.slane %v1180, 4
  %v1183 = vor.u32 %v1182, %v1178
  %v1184 = vrot.slane %v1183, 4
  %v1186 = vshll.u32 %v95, 16
  %v1188 = vrot.slane %v1186, 5
  %v1189 = vsel %vm637, %v1184, %v1188
  %v1191 = vshrl.u32 %v96, 16
  %v1193 = vrot.slane %v1191, 4
  %v1194 = vshll.u32 %v96, 16
  %v1196 = vrot.slane %v1194, 5
  %v1197 = vor.u32 %v1193, %v1196
  %v1198 = vrot.slane %v1197, 4
  %v1200 = vshll.u32 %v97, 16
  %v1202 = vrot.slane %v1200, 5
  %v1203 = vsel %vm637, %v1198, %v1202
  %v1204 = vshrl.u32 %v97, 16
  %v1206 = vrot.slane %v1204, 4
  %v1207 = vor.u32 %v1206, %v1202
  %v1208 = vrot.slane %v1207, 4
  %v1210 = vshll.u32 %v98, 16
  %v1212 = vrot.slane %v1210, 5
  %v1213 = vsel %vm637, %v1208, %v1212
  %v1215 = vshrl.u32 %v99, 16
  %v1217 = vrot.slane %v1215, 4
  %v1218 = vshll.u32 %v99, 16
  %v1220 = vrot.slane %v1218, 5
  %v1221 = vor.u32 %v1217, %v1220
  %v1222 = vrot.slane %v1221, 4
  %v1224 = vshll.u32 %v100, 16
  %v1226 = vrot.slane %v1224, 5
  %v1227 = vsel %vm637, %v1222, %v1226
  %v1228 = vshrl.u32 %v100, 16
  %v1230 = vrot.slane %v1228, 4
  %v1231 = vor.u32 %v1230, %v1226
  %v1232 = vrot.slane %v1231, 4
  %v1234 = vshll.u32 %v101, 16
  %v1236 = vrot.slane %v1234, 5
  %v1237 = vsel %vm637, %v1232, %v1236
  %v1239 = vshrl.u32 %v102, 16
  %v1241 = vrot.slane %v1239, 4
  %v1242 = vshll.u32 %v102, 16
  %v1244 = vrot.slane %v1242, 5
  %v1245 = vor.u32 %v1241, %v1244
  %v1246 = vrot.slane %v1245, 4
  %v1248 = vshll.u32 %v103, 16
  %v1250 = vrot.slane %v1248, 5
  %v1251 = vsel %vm637, %v1246, %v1250
  %v1252 = vshrl.u32 %v103, 16
  %v1254 = vrot.slane %v1252, 4
  %v1255 = vor.u32 %v1254, %v1250
  %v1256 = vrot.slane %v1255, 4
  %v1258 = vshll.u32 %v104, 16
  %v1260 = vrot.slane %v1258, 5
  %v1261 = vsel %vm637, %v1256, %v1260
  %v1263 = vshrl.u32 %v105, 16
  %v1265 = vrot.slane %v1263, 4
  %v1266 = vshll.u32 %v105, 16
  %v1268 = vrot.slane %v1266, 5
  %v1269 = vor.u32 %v1265, %v1268
  %v1270 = vrot.slane %v1269, 4
  %v1272 = vshll.u32 %v106, 16
  %v1274 = vrot.slane %v1272, 5
  %v1275 = vsel %vm637, %v1270, %v1274
  %v1276 = vshrl.u32 %v106, 16
  %v1278 = vrot.slane %v1276, 4
  %v1279 = vor.u32 %v1278, %v1274
  %v1280 = vrot.slane %v1279, 4
  %v1282 = vshll.u32 %v107, 16
  %v1284 = vrot.slane %v1282, 5
  %v1285 = vsel %vm637, %v1280, %v1284
  %v1287 = vshrl.u32 %v108, 16
  %v1289 = vrot.slane %v1287, 4
  %v1290 = vshll.u32 %v108, 16
  %v1292 = vrot.slane %v1290, 5
  %v1293 = vor.u32 %v1289, %v1292
  %v1294 = vrot.slane %v1293, 4
  %v1296 = vshll.u32 %v109, 16
  %v1298 = vrot.slane %v1296, 5
  %v1299 = vsel %vm637, %v1294, %v1298
  %v1300 = vshrl.u32 %v109, 16
  %v1302 = vrot.slane %v1300, 4
  %v1303 = vor.u32 %v1302, %v1298
  %v1304 = vrot.slane %v1303, 4
  %v1306 = vshll.u32 %v110, 16
  %v1308 = vrot.slane %v1306, 5
  %v1309 = vsel %vm637, %v1304, %v1308
  %v1311 = vshrl.u32 %v111, 16
  %v1313 = vrot.slane %v1311, 4
  %v1314 = vshll.u32 %v111, 16
  %v1316 = vrot.slane %v1314, 5
  %v1317 = vor.u32 %v1313, %v1316
  %v1318 = vrot.slane %v1317, 4
  %v1320 = vshll.u32 %v112, 16
  %v1322 = vrot.slane %v1320, 5
  %v1323 = vsel %vm637, %v1318, %v1322
  %v1324 = vshrl.u32 %v112, 16
  %v1326 = vrot.slane %v1324, 4
  %v1327 = vor.u32 %v1326, %v1322
  %v1328 = vrot.slane %v1327, 4
  %v1330 = vshll.u32 %v113, 16
  %v1332 = vrot.slane %v1330, 5
  %v1333 = vsel %vm637, %v1328, %v1332
  %v1335 = vshrl.u32 %v114, 16
  %v1337 = vrot.slane %v1335, 4
  %v1338 = vshll.u32 %v114, 16
  %v1340 = vrot.slane %v1338, 5
  %v1341 = vor.u32 %v1337, %v1340
  %v1342 = vrot.slane %v1341, 4
  %v1344 = vshll.u32 %v115, 16
  %v1346 = vrot.slane %v1344, 5
  %v1347 = vsel %vm637, %v1342, %v1346
  %v1348 = vshrl.u32 %v115, 16
  %v1350 = vrot.slane %v1348, 4
  %v1351 = vor.u32 %v1350, %v1346
  %v1352 = vrot.slane %v1351, 4
  %v1354 = vshll.u32 %v116, 16
  %v1356 = vrot.slane %v1354, 5
  %v1357 = vsel %vm637, %v1352, %v1356
  %v1359 = vshrl.u32 %v117, 16
  %v1361 = vrot.slane %v1359, 4
  %v1362 = vshll.u32 %v117, 16
  %v1364 = vrot.slane %v1362, 5
  %v1365 = vor.u32 %v1361, %v1364
  %v1366 = vrot.slane %v1365, 4
  %v1368 = vshll.u32 %v118, 16
  %v1370 = vrot.slane %v1368, 5
  %v1371 = vsel %vm637, %v1366, %v1370
  %v1372 = vshrl.u32 %v118, 16
  %v1374 = vrot.slane %v1372, 4
  %v1375 = vor.u32 %v1374, %v1370
  %v1376 = vrot.slane %v1375, 4
  %v1378 = vshll.u32 %v119, 16
  %v1380 = vrot.slane %v1378, 5
  %v1381 = vsel %vm637, %v1376, %v1380
  %v1383 = vshrl.u32 %v120, 16
  %v1385 = vrot.slane %v1383, 4
  %v1386 = vshll.u32 %v120, 16
  %v1388 = vrot.slane %v1386, 5
  %v1389 = vor.u32 %v1385, %v1388
  %v1390 = vrot.slane %v1389, 4
  %v1392 = vshll.u32 %v121, 16
  %v1394 = vrot.slane %v1392, 5
  %v1395 = vsel %vm637, %v1390, %v1394
  %v1396 = vshrl.u32 %v121, 16
  %v1398 = vrot.slane %v1396, 4
  %v1399 = vor.u32 %v1398, %v1394
  %v1400 = vrot.slane %v1399, 4
  %v1402 = vshll.u32 %v122, 16
  %v1404 = vrot.slane %v1402, 5
  %v1405 = vsel %vm637, %v1400, %v1404
  %v1406 = vld [vmem:[%s1 + $0x10] sm:$0xf]
  %v1407 = vld [vmem:[%s1 + $0x14] sm:$0xf]
  %v1408 = vld [vmem:[%s1 + $0x18] sm:$0xf]
  %v1409 = vld [vmem:[%s1 + $0x1c] sm:$0xf]
  %v1410 = vunpack.c.l.b16 %v651
  %v1411 = vunpack.c.l.b16 %v661
  %v1412 = vunpack.c.l.b16 %v675
  %v1413 = vunpack.c.l.b16 %v685
  %v1414 = vunpack.c.l.b16 %v699
  %v1415 = vunpack.c.l.b16 %v709
  %v1416 = vunpack.c.l.b16 %v723
  %v1417 = vunpack.c.l.b16 %v733
  %v1418 = vunpack.c.l.b16 %v747
  %v1419 = vunpack.c.l.b16 %v757
  %v1420 = vunpack.c.l.b16 %v771
  %v1421 = vunpack.c.l.b16 %v781
  %v1422 = vunpack.c.l.b16 %v795
  %v1423 = vunpack.c.l.b16 %v805
  %v1424 = vunpack.c.l.b16 %v819
  %v1425 = vunpack.c.l.b16 %v829
  %v1426 = vunpack.c.l.b16 %v843
  %v1427 = vunpack.c.l.b16 %v853
  %v1428 = vunpack.c.l.b16 %v867
  %v1429 = vunpack.c.l.b16 %v877
  %v1430 = vunpack.c.l.b16 %v891
  %v1431 = vunpack.c.l.b16 %v901
  %v1432 = vunpack.c.l.b16 %v915
  %v1433 = vunpack.c.l.b16 %v925
  %v1434 = vunpack.c.l.b16 %v939
  %v1435 = vunpack.c.l.b16 %v949
  %v1436 = vunpack.c.l.b16 %v963
  %v1437 = vunpack.c.l.b16 %v973
  %v1438 = vunpack.c.l.b16 %v987
  %v1439 = vunpack.c.l.b16 %v997
  %v1440 = vunpack.c.l.b16 %v1011
  %v1441 = vunpack.c.l.b16 %v1021
  %v1442 = vunpack.c.l.b16 %v1035
  %v1443 = vunpack.c.l.b16 %v1045
  %v1444 = vunpack.c.l.b16 %v1059
  %v1445 = vunpack.c.l.b16 %v1069
  %v1446 = vunpack.c.l.b16 %v1083
  %v1447 = vunpack.c.l.b16 %v1093
  %v1448 = vunpack.c.l.b16 %v1107
  %v1449 = vunpack.c.l.b16 %v1117
  %v1450 = vunpack.c.l.b16 %v1131
  %v1451 = vunpack.c.l.b16 %v1141
  %v1452 = vunpack.c.l.b16 %v1155
  %v1453 = vunpack.c.l.b16 %v1165
  %v1454 = vunpack.c.l.b16 %v1179
  %v1455 = vunpack.c.l.b16 %v1189
  %v1456 = vunpack.c.l.b16 %v1203
  %v1457 = vunpack.c.l.b16 %v1213
  %v1458 = vunpack.c.l.b16 %v1227
  %v1459 = vunpack.c.l.b16 %v1237
  %v1460 = vunpack.c.l.b16 %v1251
  %v1461 = vunpack.c.l.b16 %v1261
  %v1462 = vunpack.c.l.b16 %v1275
  %v1463 = vunpack.c.l.b16 %v1285
  %v1464 = vunpack.c.l.b16 %v1299
  %v1465 = vunpack.c.l.b16 %v1309
  %v1466 = vunpack.c.l.b16 %v1323
  %v1467 = vunpack.c.l.b16 %v1333
  %v1468 = vunpack.c.l.b16 %v1347
  %v1469 = vunpack.c.l.b16 %v1357
  %v1470 = vunpack.c.l.b16 %v1371
  %v1471 = vunpack.c.l.b16 %v1381
  %v1472 = vunpack.c.l.b16 %v1395
  %v1473 = vunpack.c.l.b16 %v1405
  %v1474 = vpack.c.b16 %v1411, %v1410
  %v1475 = vpack.c.b16 %v1413, %v1412
  %v1476 = vpack.c.b16 %v1415, %v1414
  %v1477 = vpack.c.b16 %v1417, %v1416
  %v1478 = vpack.c.b16 %v1419, %v1418
  %v1479 = vpack.c.b16 %v1421, %v1420
  %v1480 = vpack.c.b16 %v1423, %v1422
  %v1481 = vpack.c.b16 %v1425, %v1424
  %v1482 = vpack.c.b16 %v1427, %v1426
  %v1483 = vpack.c.b16 %v1429, %v1428
  %v1484 = vpack.c.b16 %v1431, %v1430
  %v1485 = vpack.c.b16 %v1433, %v1432
  %v1486 = vpack.c.b16 %v1435, %v1434
  %v1487 = vpack.c.b16 %v1437, %v1436
  %v1488 = vpack.c.b16 %v1439, %v1438
  %v1489 = vpack.c.b16 %v1441, %v1440
  %v1490 = vpack.c.b16 %v1443, %v1442
  %v1491 = vpack.c.b16 %v1445, %v1444
  %v1492 = vpack.c.b16 %v1447, %v1446
  %v1493 = vpack.c.b16 %v1449, %v1448
  %v1494 = vpack.c.b16 %v1451, %v1450
  %v1495 = vpack.c.b16 %v1453, %v1452
  %v1496 = vpack.c.b16 %v1455, %v1454
  %v1497 = vpack.c.b16 %v1457, %v1456
  %v1498 = vpack.c.b16 %v1459, %v1458
  %v1499 = vpack.c.b16 %v1461, %v1460
  %v1500 = vpack.c.b16 %v1463, %v1462
  %v1501 = vpack.c.b16 %v1465, %v1464
  %v1502 = vpack.c.b16 %v1467, %v1466
  %v1503 = vpack.c.b16 %v1469, %v1468
  %v1504 = vpack.c.b16 %v1471, %v1470
  %v1505 = vpack.c.b16 %v1473, %v1472
  %v1510 = vunpack.c.l.b16 %v1406
  %v1511 = vunpack.c.l.b16 %v1407
  %v1512 = vunpack.c.l.b16 %v1408
  %v1513 = vunpack.c.l.b16 %v1409
  %v1514 = vpack.c.b16 %v1511, %v1510
  %v1515 = vpack.c.b16 %v1513, %v1512
  %v1519 = vsel %vm305, %v1474, 0
  %v1522 = vsel %vm305, %v1475, 0
  %v1525 = vsel %vm305, %v1476, 0
  %v1528 = vsel %vm305, %v1477, 0
  %v1531 = vsel %vm305, %v1478, 0
  %v1534 = vsel %vm305, %v1479, 0
  %v1537 = vsel %vm305, %v1480, 0
  %v1540 = vsel %vm305, %v1481, 0
  %v1543 = vsel %vm305, %v1482, 0
  %v1546 = vsel %vm305, %v1483, 0
  %v1549 = vsel %vm305, %v1484, 0
  %v1552 = vsel %vm305, %v1485, 0
  %v1555 = vsel %vm305, %v1486, 0
  %v1558 = vsel %vm305, %v1487, 0
  %v1561 = vsel %vm305, %v1488, 0
  %v1564 = vsel %vm305, %v1489, 0
  %v1567 = vsel %vm305, %v1490, 0
  %v1570 = vsel %vm305, %v1491, 0
  %v1573 = vsel %vm305, %v1492, 0
  %v1576 = vsel %vm305, %v1493, 0
  %v1579 = vsel %vm305, %v1494, 0
  %v1582 = vsel %vm305, %v1495, 0
  %v1585 = vsel %vm305, %v1496, 0
  %v1588 = vsel %vm305, %v1497, 0
  %v1591 = vsel %vm305, %v1498, 0
  %v1594 = vsel %vm305, %v1499, 0
  %v1597 = vsel %vm305, %v1500, 0
  %v1600 = vsel %vm305, %v1501, 0
  %v1603 = vsel %vm305, %v1502, 0
  %v1606 = vsel %vm305, %v1503, 0
  %v1609 = vsel %vm305, %v1504, 0
  %v1612 = vsel %vm305, %v1505, 0
  %1614 = vmatpush.bf16.msra.mxu0 0
  %1615 = vmatpush.bf16.msra.mxu0 0
  %1616 = vmatpush.bf16.msra.mxu0 0
  %1617 = vmatpush.bf16.msra.mxu0 0
  %1618 = vmatpush.bf16.msra.mxu0 0
  %1619 = vmatpush.bf16.msra.mxu0 0
  %1620 = vmatpush.bf16.msra.mxu0 %v1515
  %1621 = vmatpush.bf16.msra.mxu0 %v1514
  %1622 = vmatmul.bf16.gmra.mxu0 %v1519
  %v1623 = vpop.f32.mrf.mxu0
  %v1624 = vadd.f32 0.0, %v1623
  %v1625 = vpop.f32.mrf.mxu0
  %v1626 = vadd.f32 0.0, %v1625
  %1627 = vmatmul.bf16.gmra.mxu0 %v1522
  %v1628 = vpop.f32.mrf.mxu0
  %v1629 = vadd.f32 0.0, %v1628
  %v1630 = vpop.f32.mrf.mxu0
  %v1631 = vadd.f32 0.0, %v1630
  %1632 = vmatmul.bf16.gmra.mxu0 %v1525
  %v1633 = vpop.f32.mrf.mxu0
  %v1634 = vadd.f32 0.0, %v1633
  %v1635 = vpop.f32.mrf.mxu0
  %v1636 = vadd.f32 0.0, %v1635
  %1637 = vmatmul.bf16.gmra.mxu0 %v1528
  %v1638 = vpop.f32.mrf.mxu0
  %v1639 = vadd.f32 0.0, %v1638
  %v1640 = vpop.f32.mrf.mxu0
  %v1641 = vadd.f32 0.0, %v1640
  %1642 = vmatmul.bf16.gmra.mxu0 %v1531
  %v1643 = vpop.f32.mrf.mxu0
  %v1644 = vadd.f32 0.0, %v1643
  %v1645 = vpop.f32.mrf.mxu0
  %v1646 = vadd.f32 0.0, %v1645
  %1647 = vmatmul.bf16.gmra.mxu0 %v1534
  %v1648 = vpop.f32.mrf.mxu0
  %v1649 = vadd.f32 0.0, %v1648
  %v1650 = vpop.f32.mrf.mxu0
  %v1651 = vadd.f32 0.0, %v1650
  %1652 = vmatmul.bf16.gmra.mxu0 %v1537
  %v1653 = vpop.f32.mrf.mxu0
  %v1654 = vadd.f32 0.0, %v1653
  %v1655 = vpop.f32.mrf.mxu0
  %v1656 = vadd.f32 0.0, %v1655
  %1657 = vmatmul.bf16.gmra.mxu0 %v1540
  %v1658 = vpop.f32.mrf.mxu0
  %v1659 = vadd.f32 0.0, %v1658
  %v1660 = vpop.f32.mrf.mxu0
  %v1661 = vadd.f32 0.0, %v1660
  %1662 = vmatmul.bf16.gmra.mxu0 %v1543
  %v1663 = vpop.f32.mrf.mxu0
  %v1664 = vadd.f32 0.0, %v1663
  %v1665 = vpop.f32.mrf.mxu0
  %v1666 = vadd.f32 0.0, %v1665
  %1667 = vmatmul.bf16.gmra.mxu0 %v1546
  %v1668 = vpop.f32.mrf.mxu0
  %v1669 = vadd.f32 0.0, %v1668
  %v1670 = vpop.f32.mrf.mxu0
  %v1671 = vadd.f32 0.0, %v1670
  %1672 = vmatmul.bf16.gmra.mxu0 %v1549
  %v1673 = vpop.f32.mrf.mxu0
  %v1674 = vadd.f32 0.0, %v1673
  %v1675 = vpop.f32.mrf.mxu0
  %v1676 = vadd.f32 0.0, %v1675
  %1677 = vmatmul.bf16.gmra.mxu0 %v1552
  %v1678 = vpop.f32.mrf.mxu0
  %v1679 = vadd.f32 0.0, %v1678
  %v1680 = vpop.f32.mrf.mxu0
  %v1681 = vadd.f32 0.0, %v1680
  %1682 = vmatmul.bf16.gmra.mxu0 %v1555
  %v1683 = vpop.f32.mrf.mxu0
  %v1684 = vadd.f32 0.0, %v1683
  %v1685 = vpop.f32.mrf.mxu0
  %v1686 = vadd.f32 0.0, %v1685
  %1687 = vmatmul.bf16.gmra.mxu0 %v1558
  %v1688 = vpop.f32.mrf.mxu0
  %v1689 = vadd.f32 0.0, %v1688
  %v1690 = vpop.f32.mrf.mxu0
  %v1691 = vadd.f32 0.0, %v1690
  %1692 = vmatmul.bf16.gmra.mxu0 %v1561
  %v1693 = vpop.f32.mrf.mxu0
  %v1694 = vadd.f32 0.0, %v1693
  %v1695 = vpop.f32.mrf.mxu0
  %v1696 = vadd.f32 0.0, %v1695
  %1697 = vmatmul.bf16.gmra.mxu0 %v1564
  %v1698 = vpop.f32.mrf.mxu0
  %v1699 = vadd.f32 0.0, %v1698
  %v1700 = vpop.f32.mrf.mxu0
  %v1701 = vadd.f32 0.0, %v1700
  %1702 = vmatmul.bf16.gmra.mxu0 %v1567
  %v1703 = vpop.f32.mrf.mxu0
  %v1704 = vadd.f32 0.0, %v1703
  %v1705 = vpop.f32.mrf.mxu0
  %v1706 = vadd.f32 0.0, %v1705
  %1707 = vmatmul.bf16.gmra.mxu0 %v1570
  %v1708 = vpop.f32.mrf.mxu0
  %v1709 = vadd.f32 0.0, %v1708
  %v1710 = vpop.f32.mrf.mxu0
  %v1711 = vadd.f32 0.0, %v1710
  %1712 = vmatmul.bf16.gmra.mxu0 %v1573
  %v1713 = vpop.f32.mrf.mxu0
  %v1714 = vadd.f32 0.0, %v1713
  %v1715 = vpop.f32.mrf.mxu0
  %v1716 = vadd.f32 0.0, %v1715
  %1717 = vmatmul.bf16.gmra.mxu0 %v1576
  %v1718 = vpop.f32.mrf.mxu0
  %v1719 = vadd.f32 0.0, %v1718
  %v1720 = vpop.f32.mrf.mxu0
  %v1721 = vadd.f32 0.0, %v1720
  %1722 = vmatmul.bf16.gmra.mxu0 %v1579
  %v1723 = vpop.f32.mrf.mxu0
  %v1724 = vadd.f32 0.0, %v1723
  %v1725 = vpop.f32.mrf.mxu0
  %v1726 = vadd.f32 0.0, %v1725
  %1727 = vmatmul.bf16.gmra.mxu0 %v1582
  %v1728 = vpop.f32.mrf.mxu0
  %v1729 = vadd.f32 0.0, %v1728
  %v1730 = vpop.f32.mrf.mxu0
  %v1731 = vadd.f32 0.0, %v1730
  %1732 = vmatmul.bf16.gmra.mxu0 %v1585
  %v1733 = vpop.f32.mrf.mxu0
  %v1734 = vadd.f32 0.0, %v1733
  %v1735 = vpop.f32.mrf.mxu0
  %v1736 = vadd.f32 0.0, %v1735
  %1737 = vmatmul.bf16.gmra.mxu0 %v1588
  %v1738 = vpop.f32.mrf.mxu0
  %v1739 = vadd.f32 0.0, %v1738
  %v1740 = vpop.f32.mrf.mxu0
  %v1741 = vadd.f32 0.0, %v1740
  %1742 = vmatmul.bf16.gmra.mxu0 %v1591
  %v1743 = vpop.f32.mrf.mxu0
  %v1744 = vadd.f32 0.0, %v1743
  %v1745 = vpop.f32.mrf.mxu0
  %v1746 = vadd.f32 0.0, %v1745
  %1747 = vmatmul.bf16.gmra.mxu0 %v1594
  %v1748 = vpop.f32.mrf.mxu0
  %v1749 = vadd.f32 0.0, %v1748
  %v1750 = vpop.f32.mrf.mxu0
  %v1751 = vadd.f32 0.0, %v1750
  %1752 = vmatmul.bf16.gmra.mxu0 %v1597
  %v1753 = vpop.f32.mrf.mxu0
  %v1754 = vadd.f32 0.0, %v1753
  %v1755 = vpop.f32.mrf.mxu0
  %v1756 = vadd.f32 0.0, %v1755
  %1757 = vmatmul.bf16.gmra.mxu0 %v1600
  %v1758 = vpop.f32.mrf.mxu0
  %v1759 = vadd.f32 0.0, %v1758
  %v1760 = vpop.f32.mrf.mxu0
  %v1761 = vadd.f32 0.0, %v1760
  %1762 = vmatmul.bf16.gmra.mxu0 %v1603
  %v1763 = vpop.f32.mrf.mxu0
  %v1764 = vadd.f32 0.0, %v1763
  %v1765 = vpop.f32.mrf.mxu0
  %v1766 = vadd.f32 0.0, %v1765
  %1767 = vmatmul.bf16.gmra.mxu0 %v1606
  %v1768 = vpop.f32.mrf.mxu0
  %v1769 = vadd.f32 0.0, %v1768
  %v1770 = vpop.f32.mrf.mxu0
  %v1771 = vadd.f32 0.0, %v1770
  %1772 = vmatmul.bf16.gmra.mxu0 %v1609
  %v1773 = vpop.f32.mrf.mxu0
  %v1774 = vadd.f32 0.0, %v1773
  %v1775 = vpop.f32.mrf.mxu0
  %v1776 = vadd.f32 0.0, %v1775
  %1777 = vmatmul.bf16.gmra.mxu0 %v1612
  %v1778 = vpop.f32.mrf.mxu0
  %v1779 = vadd.f32 0.0, %v1778
  %v1780 = vpop.f32.mrf.mxu0
  %v1781 = vadd.f32 0.0, %v1780
  %1782 = vdwg.mxu0
  %v1783 = vld [vmem:[#allocation2] sm:$0xff]
  %v1784 = vld [vmem:[#allocation2 + $0x8] sm:$0xff]
  %v1785 = vld [vmem:[#allocation2 + $0x10] sm:$0xff]
  %v1786 = vld [vmem:[#allocation2 + $0x18] sm:$0xff]
  %v1787 = vld [vmem:[#allocation2 + $0x20] sm:$0xff]
  %v1788 = vld [vmem:[#allocation2 + $0x28] sm:$0xff]
  %v1789 = vld [vmem:[#allocation2 + $0x30] sm:$0xff]
  %v1790 = vld [vmem:[#allocation2 + $0x38] sm:$0xff]
  %v1791 = vld [vmem:[#allocation2 + $0x40] sm:$0xff]
  %v1792 = vld [vmem:[#allocation2 + $0x48] sm:$0xff]
  %v1793 = vld [vmem:[#allocation2 + $0x50] sm:$0xff]
  %v1794 = vld [vmem:[#allocation2 + $0x58] sm:$0xff]
  %v1795 = vld [vmem:[#allocation2 + $0x60] sm:$0xff]
  %v1796 = vld [vmem:[#allocation2 + $0x68] sm:$0xff]
  %v1797 = vld [vmem:[#allocation2 + $0x70] sm:$0xff]
  %v1798 = vld [vmem:[#allocation2 + $0x78] sm:$0xff]
  %v1799 = vld [vmem:[#allocation2 + $0x80] sm:$0xff]
  %v1800 = vld [vmem:[#allocation2 + $0x88] sm:$0xff]
  %v1801 = vld [vmem:[#allocation2 + $0x90] sm:$0xff]
  %v1802 = vld [vmem:[#allocation2 + $0x98] sm:$0xff]
  %v1803 = vld [vmem:[#allocation2 + $0xa0] sm:$0xff]
  %v1804 = vld [vmem:[#allocation2 + $0xa8] sm:$0xff]
  %v1805 = vld [vmem:[#allocation2 + $0xb0] sm:$0xff]
  %v1806 = vld [vmem:[#allocation2 + $0xb8] sm:$0xff]
  %v1807 = vld [vmem:[#allocation2 + $0xc0] sm:$0xff]
  %v1808 = vld [vmem:[#allocation2 + $0xc8] sm:$0xff]
  %v1809 = vld [vmem:[#allocation2 + $0xd0] sm:$0xff]
  %v1810 = vld [vmem:[#allocation2 + $0xd8] sm:$0xff]
  %v1811 = vld [vmem:[#allocation2 + $0xe0] sm:$0xff]
  %v1812 = vld [vmem:[#allocation2 + $0xe8] sm:$0xff]
  %v1813 = vld [vmem:[#allocation2 + $0xf0] sm:$0xff]
  %v1814 = vld [vmem:[#allocation2 + $0xf8] sm:$0xff]
  %v1815 = vld [vmem:[#allocation2 + $0x100] sm:$0xff]
  %v1816 = vld [vmem:[#allocation2 + $0x108] sm:$0xff]
  %v1817 = vld [vmem:[#allocation2 + $0x110] sm:$0xff]
  %v1818 = vld [vmem:[#allocation2 + $0x118] sm:$0xff]
  %v1819 = vld [vmem:[#allocation2 + $0x120] sm:$0xff]
  %v1820 = vld [vmem:[#allocation2 + $0x128] sm:$0xff]
  %v1821 = vld [vmem:[#allocation2 + $0x130] sm:$0xff]
  %v1822 = vld [vmem:[#allocation2 + $0x138] sm:$0xff]
  %v1823 = vld [vmem:[#allocation2 + $0x140] sm:$0xff]
  %v1824 = vld [vmem:[#allocation2 + $0x148] sm:$0xff]
  %v1825 = vld [vmem:[#allocation2 + $0x150] sm:$0xff]
  %v1826 = vld [vmem:[#allocation2 + $0x158] sm:$0xff]
  %v1827 = vld [vmem:[#allocation2 + $0x160] sm:$0xff]
  %v1828 = vld [vmem:[#allocation2 + $0x168] sm:$0xff]
  %v1829 = vld [vmem:[#allocation2 + $0x170] sm:$0xff]
  %v1830 = vld [vmem:[#allocation2 + $0x178] sm:$0xff]
  %v1831 = vld [vmem:[#allocation2 + $0x180] sm:$0xff]
  %v1832 = vld [vmem:[#allocation2 + $0x188] sm:$0xff]
  %v1833 = vld [vmem:[#allocation2 + $0x190] sm:$0xff]
  %v1834 = vld [vmem:[#allocation2 + $0x198] sm:$0xff]
  %v1835 = vld [vmem:[#allocation2 + $0x1a0] sm:$0xff]
  %v1836 = vld [vmem:[#allocation2 + $0x1a8] sm:$0xff]
  %v1837 = vld [vmem:[#allocation2 + $0x1b0] sm:$0xff]
  %v1838 = vld [vmem:[#allocation2 + $0x1b8] sm:$0xff]
  %v1839 = vld [vmem:[#allocation2 + $0x1c0] sm:$0xff]
  %v1840 = vld [vmem:[#allocation2 + $0x1c8] sm:$0xff]
  %v1841 = vld [vmem:[#allocation2 + $0x1d0] sm:$0xff]
  %v1842 = vld [vmem:[#allocation2 + $0x1d8] sm:$0xff]
  %v1843 = vld [vmem:[#allocation2 + $0x1e0] sm:$0xff]
  %v1844 = vld [vmem:[#allocation2 + $0x1e8] sm:$0xff]
  %v1845 = vld [vmem:[#allocation2 + $0x1f0] sm:$0xff]
  %v1846 = vld [vmem:[#allocation2 + $0x1f8] sm:$0xff]
  %v1847 = vadd.f32 %v1783, %v1624
  %v1848 = vadd.f32 %v1784, %v1626
  %v1849 = vadd.f32 %v1785, %v1629
  %v1850 = vadd.f32 %v1786, %v1631
  %v1851 = vadd.f32 %v1787, %v1634
  %v1852 = vadd.f32 %v1788, %v1636
  %v1853 = vadd.f32 %v1789, %v1639
  %v1854 = vadd.f32 %v1790, %v1641
  %v1855 = vadd.f32 %v1791, %v1644
  %v1856 = vadd.f32 %v1792, %v1646
  %v1857 = vadd.f32 %v1793, %v1649
  %v1858 = vadd.f32 %v1794, %v1651
  %v1859 = vadd.f32 %v1795, %v1654
  %v1860 = vadd.f32 %v1796, %v1656
  %v1861 = vadd.f32 %v1797, %v1659
  %v1862 = vadd.f32 %v1798, %v1661
  %v1863 = vadd.f32 %v1799, %v1664
  %v1864 = vadd.f32 %v1800, %v1666
  %v1865 = vadd.f32 %v1801, %v1669
  %v1866 = vadd.f32 %v1802, %v1671
  %v1867 = vadd.f32 %v1803, %v1674
  %v1868 = vadd.f32 %v1804, %v1676
  %v1869 = vadd.f32 %v1805, %v1679
  %v1870 = vadd.f32 %v1806, %v1681
  %v1871 = vadd.f32 %v1807, %v1684
  %v1872 = vadd.f32 %v1808, %v1686
  %v1873 = vadd.f32 %v1809, %v1689
  %v1874 = vadd.f32 %v1810, %v1691
  %v1875 = vadd.f32 %v1811, %v1694
  %v1876 = vadd.f32 %v1812, %v1696
  %v1877 = vadd.f32 %v1813, %v1699
  %v1878 = vadd.f32 %v1814, %v1701
  %v1879 = vadd.f32 %v1815, %v1704
  %v1880 = vadd.f32 %v1816, %v1706
  %v1881 = vadd.f32 %v1817, %v1709
  %v1882 = vadd.f32 %v1818, %v1711
  %v1883 = vadd.f32 %v1819, %v1714
  %v1884 = vadd.f32 %v1820, %v1716
  %v1885 = vadd.f32 %v1821, %v1719
  %v1886 = vadd.f32 %v1822, %v1721
  %v1887 = vadd.f32 %v1823, %v1724
  %v1888 = vadd.f32 %v1824, %v1726
  %v1889 = vadd.f32 %v1825, %v1729
  %v1890 = vadd.f32 %v1826, %v1731
  %v1891 = vadd.f32 %v1827, %v1734
  %v1892 = vadd.f32 %v1828, %v1736
  %v1893 = vadd.f32 %v1829, %v1739
  %v1894 = vadd.f32 %v1830, %v1741
  %v1895 = vadd.f32 %v1831, %v1744
  %v1896 = vadd.f32 %v1832, %v1746
  %v1897 = vadd.f32 %v1833, %v1749
  %v1898 = vadd.f32 %v1834, %v1751
  %v1899 = vadd.f32 %v1835, %v1754
  %v1900 = vadd.f32 %v1836, %v1756
  %v1901 = vadd.f32 %v1837, %v1759
  %v1902 = vadd.f32 %v1838, %v1761
  %v1903 = vadd.f32 %v1839, %v1764
  %v1904 = vadd.f32 %v1840, %v1766
  %v1905 = vadd.f32 %v1841, %v1769
  %v1906 = vadd.f32 %v1842, %v1771
  %v1907 = vadd.f32 %v1843, %v1774
  %v1908 = vadd.f32 %v1844, %v1776
  %v1909 = vadd.f32 %v1845, %v1779
  %v1910 = vadd.f32 %v1846, %v1781
  %1911 = vst [vmem:[#allocation2] sm:$0xff] %v1847
  %1912 = vst [vmem:[#allocation2 + $0x8] sm:$0xff] %v1848
  %1913 = vst [vmem:[#allocation2 + $0x10] sm:$0xff] %v1849
  %1914 = vst [vmem:[#allocation2 + $0x18] sm:$0xff] %v1850
  %1915 = vst [vmem:[#allocation2 + $0x20] sm:$0xff] %v1851
  %1916 = vst [vmem:[#allocation2 + $0x28] sm:$0xff] %v1852
  %1917 = vst [vmem:[#allocation2 + $0x30] sm:$0xff] %v1853
  %1918 = vst [vmem:[#allocation2 + $0x38] sm:$0xff] %v1854
  %1919 = vst [vmem:[#allocation2 + $0x40] sm:$0xff] %v1855
  %1920 = vst [vmem:[#allocation2 + $0x48] sm:$0xff] %v1856
  %1921 = vst [vmem:[#allocation2 + $0x50] sm:$0xff] %v1857
  %1922 = vst [vmem:[#allocation2 + $0x58] sm:$0xff] %v1858
  %1923 = vst [vmem:[#allocation2 + $0x60] sm:$0xff] %v1859
  %1924 = vst [vmem:[#allocation2 + $0x68] sm:$0xff] %v1860
  %1925 = vst [vmem:[#allocation2 + $0x70] sm:$0xff] %v1861
  %1926 = vst [vmem:[#allocation2 + $0x78] sm:$0xff] %v1862
  %1927 = vst [vmem:[#allocation2 + $0x80] sm:$0xff] %v1863
  %1928 = vst [vmem:[#allocation2 + $0x88] sm:$0xff] %v1864
  %1929 = vst [vmem:[#allocation2 + $0x90] sm:$0xff] %v1865
  %1930 = vst [vmem:[#allocation2 + $0x98] sm:$0xff] %v1866
  %1931 = vst [vmem:[#allocation2 + $0xa0] sm:$0xff] %v1867
  %1932 = vst [vmem:[#allocation2 + $0xa8] sm:$0xff] %v1868
  %1933 = vst [vmem:[#allocation2 + $0xb0] sm:$0xff] %v1869
  %1934 = vst [vmem:[#allocation2 + $0xb8] sm:$0xff] %v1870
  %1935 = vst [vmem:[#allocation2 + $0xc0] sm:$0xff] %v1871
  %1936 = vst [vmem:[#allocation2 + $0xc8] sm:$0xff] %v1872
  %1937 = vst [vmem:[#allocation2 + $0xd0] sm:$0xff] %v1873
  %1938 = vst [vmem:[#allocation2 + $0xd8] sm:$0xff] %v1874
  %1939 = vst [vmem:[#allocation2 + $0xe0] sm:$0xff] %v1875
  %1940 = vst [vmem:[#allocation2 + $0xe8] sm:$0xff] %v1876
  %1941 = vst [vmem:[#allocation2 + $0xf0] sm:$0xff] %v1877
  %1942 = vst [vmem:[#allocation2 + $0xf8] sm:$0xff] %v1878
  %1943 = vst [vmem:[#allocation2 + $0x100] sm:$0xff] %v1879
  %1944 = vst [vmem:[#allocation2 + $0x108] sm:$0xff] %v1880
  %1945 = vst [vmem:[#allocation2 + $0x110] sm:$0xff] %v1881
  %1946 = vst [vmem:[#allocation2 + $0x118] sm:$0xff] %v1882
  %1947 = vst [vmem:[#allocation2 + $0x120] sm:$0xff] %v1883
  %1948 = vst [vmem:[#allocation2 + $0x128] sm:$0xff] %v1884
  %1949 = vst [vmem:[#allocation2 + $0x130] sm:$0xff] %v1885
  %1950 = vst [vmem:[#allocation2 + $0x138] sm:$0xff] %v1886
  %1951 = vst [vmem:[#allocation2 + $0x140] sm:$0xff] %v1887
  %1952 = vst [vmem:[#allocation2 + $0x148] sm:$0xff] %v1888
  %1953 = vst [vmem:[#allocation2 + $0x150] sm:$0xff] %v1889
  %1954 = vst [vmem:[#allocation2 + $0x158] sm:$0xff] %v1890
  %1955 = vst [vmem:[#allocation2 + $0x160] sm:$0xff] %v1891
  %1956 = vst [vmem:[#allocation2 + $0x168] sm:$0xff] %v1892
  %1957 = vst [vmem:[#allocation2 + $0x170] sm:$0xff] %v1893
  %1958 = vst [vmem:[#allocation2 + $0x178] sm:$0xff] %v1894
  %1959 = vst [vmem:[#allocation2 + $0x180] sm:$0xff] %v1895
  %1960 = vst [vmem:[#allocation2 + $0x188] sm:$0xff] %v1896
  %1961 = vst [vmem:[#allocation2 + $0x190] sm:$0xff] %v1897
  %1962 = vst [vmem:[#allocation2 + $0x198] sm:$0xff] %v1898
  %1963 = vst [vmem:[#allocation2 + $0x1a0] sm:$0xff] %v1899
  %1964 = vst [vmem:[#allocation2 + $0x1a8] sm:$0xff] %v1900
  %1965 = vst [vmem:[#allocation2 + $0x1b0] sm:$0xff] %v1901
  %1966 = vst [vmem:[#allocation2 + $0x1b8] sm:$0xff] %v1902
  %1967 = vst [vmem:[#allocation2 + $0x1c0] sm:$0xff] %v1903
  %1968 = vst [vmem:[#allocation2 + $0x1c8] sm:$0xff] %v1904
  %1969 = vst [vmem:[#allocation2 + $0x1d0] sm:$0xff] %v1905
  %1970 = vst [vmem:[#allocation2 + $0x1d8] sm:$0xff] %v1906
  %1971 = vst [vmem:[#allocation2 + $0x1e0] sm:$0xff] %v1907
  %1972 = vst [vmem:[#allocation2 + $0x1e8] sm:$0xff] %v1908
  %1973 = vst [vmem:[#allocation2 + $0x1f0] sm:$0xff] %v1909
  %1974 = vst [vmem:[#allocation2 + $0x1f8] sm:$0xff] %v1910
  %vm2007 = vcmask 1042432
  %vm2008 = vcmask 1046532
  %vm2009 = vmor %vm2007, %vm2008
  %v2010 = vrot.slane %v21, 5
  %v2011 = vrot.slane %v2010, 4
  %v2012 = vrot.slane %v22, 5
  %v2013 = vsel %vm2009, %v2011, %v2012
  %v2014 = vrot.slane %v2012, 4
  %v2015 = vrot.slane %v23, 5
  %v2016 = vsel %vm2009, %v2014, %v2015
  %v2017 = vrot.slane %v24, 5
  %v2018 = vrot.slane %v2017, 4
  %v2019 = vrot.slane %v25, 5
  %v2020 = vsel %vm2009, %v2018, %v2019
  %v2021 = vrot.slane %v2019, 4
  %v2022 = vrot.slane %v26, 5
  %v2023 = vsel %vm2009, %v2021, %v2022
  %v2024 = vrot.slane %v27, 5
  %v2025 = vrot.slane %v2024, 4
  %v2026 = vrot.slane %v28, 5
  %v2027 = vsel %vm2009, %v2025, %v2026
  %v2028 = vrot.slane %v2026, 4
  %v2029 = vrot.slane %v29, 5
  %v2030 = vsel %vm2009, %v2028, %v2029
  %v2031 = vrot.slane %v30, 5
  %v2032 = vrot.slane %v2031, 4
  %v2033 = vrot.slane %v31, 5
  %v2034 = vsel %vm2009, %v2032, %v2033
  %v2035 = vrot.slane %v2033, 4
  %v2036 = vrot.slane %v32, 5
  %v2037 = vsel %vm2009, %v2035, %v2036
  %v2038 = vrot.slane %v33, 5
  %v2039 = vrot.slane %v2038, 4
  %v2040 = vrot.slane %v34, 5
  %v2041 = vsel %vm2009, %v2039, %v2040
  %v2042 = vrot.slane %v2040, 4
  %v2043 = vrot.slane %v35, 5
  %v2044 = vsel %vm2009, %v2042, %v2043
  %v2045 = vrot.slane %v36, 5
  %v2046 = vrot.slane %v2045, 4
  %v2047 = vrot.slane %v37, 5
  %v2048 = vsel %vm2009, %v2046, %v2047
  %v2049 = vrot.slane %v2047, 4
  %v2050 = vrot.slane %v38, 5
  %v2051 = vsel %vm2009, %v2049, %v2050
  %v2052 = vrot.slane %v39, 5
  %v2053 = vrot.slane %v2052, 4
  %v2054 = vrot.slane %v40, 5
  %v2055 = vsel %vm2009, %v2053, %v2054
  %v2056 = vrot.slane %v2054, 4
  %v2057 = vrot.slane %v41, 5
  %v2058 = vsel %vm2009, %v2056, %v2057
  %v2059 = vrot.slane %v42, 5
  %v2060 = vrot.slane %v2059, 4
  %v2061 = vrot.slane %v43, 5
  %v2062 = vsel %vm2009, %v2060, %v2061
  %v2063 = vrot.slane %v2061, 4
  %v2064 = vrot.slane %v44, 5
  %v2065 = vsel %vm2009, %v2063, %v2064
  %v2066 = vrot.slane %v45, 5
  %v2067 = vrot.slane %v2066, 4
  %v2068 = vrot.slane %v46, 5
  %v2069 = vsel %vm2009, %v2067, %v2068
  %v2070 = vrot.slane %v2068, 4
  %v2071 = vrot.slane %v47, 5
  %v2072 = vsel %vm2009, %v2070, %v2071
  %v2073 = vrot.slane %v48, 5
  %v2074 = vrot.slane %v2073, 4
  %v2075 = vrot.slane %v49, 5
  %v2076 = vsel %vm2009, %v2074, %v2075
  %v2077 = vrot.slane %v2075, 4
  %v2078 = vrot.slane %v50, 5
  %v2079 = vsel %vm2009, %v2077, %v2078
  %v2080 = vrot.slane %v51, 5
  %v2081 = vrot.slane %v2080, 4
  %v2082 = vrot.slane %v52, 5
  %v2083 = vsel %vm2009, %v2081, %v2082
  %v2084 = vrot.slane %v2082, 4
  %v2085 = vrot.slane %v53, 5
  %v2086 = vsel %vm2009, %v2084, %v2085
  %v2087 = vrot.slane %v54, 5
  %v2088 = vrot.slane %v2087, 4
  %v2089 = vrot.slane %v55, 5
  %v2090 = vsel %vm2009, %v2088, %v2089
  %v2091 = vrot.slane %v2089, 4
  %v2092 = vrot.slane %v56, 5
  %v2093 = vsel %vm2009, %v2091, %v2092
  %v2094 = vrot.slane %v57, 5
  %v2095 = vrot.slane %v2094, 4
  %v2096 = vrot.slane %v58, 5
  %v2097 = vsel %vm2009, %v2095, %v2096
  %v2098 = vrot.slane %v2096, 4
  %v2099 = vrot.slane %v59, 5
  %v2100 = vsel %vm2009, %v2098, %v2099
  %v2101 = vrot.slane %v60, 5
  %v2102 = vrot.slane %v2101, 4
  %v2103 = vrot.slane %v61, 5
  %v2104 = vsel %vm2009, %v2102, %v2103
  %v2105 = vrot.slane %v2103, 4
  %v2106 = vrot.slane %v62, 5
  %v2107 = vsel %vm2009, %v2105, %v2106
  %v2108 = vrot.slane %v63, 5
  %v2109 = vrot.slane %v2108, 4
  %v2110 = vrot.slane %v64, 5
  %v2111 = vsel %vm2009, %v2109, %v2110
  %v2112 = vrot.slane %v2110, 4
  %v2113 = vrot.slane %v65, 5
  %v2114 = vsel %vm2009, %v2112, %v2113
  %v2115 = vrot.slane %v66, 5
  %v2116 = vrot.slane %v2115, 4
  %v2117 = vrot.slane %v67, 5
  %v2118 = vsel %vm2009, %v2116, %v2117
  %v2119 = vrot.slane %v2117, 4
  %v2120 = vrot.slane %v68, 5
  %v2121 = vsel %vm2009, %v2119, %v2120
  %v2122 = vrot.slane %v75, 5
  %v2123 = vrot.slane %v2122, 4
  %v2124 = vrot.slane %v76, 5
  %v2125 = vsel %vm2009, %v2123, %v2124
  %v2126 = vrot.slane %v2124, 4
  %v2127 = vrot.slane %v77, 5
  %v2128 = vsel %vm2009, %v2126, %v2127
  %v2129 = vrot.slane %v78, 5
  %v2130 = vrot.slane %v2129, 4
  %v2131 = vrot.slane %v79, 5
  %v2132 = vsel %vm2009, %v2130, %v2131
  %v2133 = vrot.slane %v2131, 4
  %v2134 = vrot.slane %v80, 5
  %v2135 = vsel %vm2009, %v2133, %v2134
  %v2136 = vrot.slane %v81, 5
  %v2137 = vrot.slane %v2136, 4
  %v2138 = vrot.slane %v82, 5
  %v2139 = vsel %vm2009, %v2137, %v2138
  %v2140 = vrot.slane %v2138, 4
  %v2141 = vrot.slane %v83, 5
  %v2142 = vsel %vm2009, %v2140, %v2141
  %v2143 = vrot.slane %v84, 5
  %v2144 = vrot.slane %v2143, 4
  %v2145 = vrot.slane %v85, 5
  %v2146 = vsel %vm2009, %v2144, %v2145
  %v2147 = vrot.slane %v2145, 4
  %v2148 = vrot.slane %v86, 5
  %v2149 = vsel %vm2009, %v2147, %v2148
  %v2150 = vrot.slane %v87, 5
  %v2151 = vrot.slane %v2150, 4
  %v2152 = vrot.slane %v88, 5
  %v2153 = vsel %vm2009, %v2151, %v2152
  %v2154 = vrot.slane %v2152, 4
  %v2155 = vrot.slane %v89, 5
  %v2156 = vsel %vm2009, %v2154, %v2155
  %v2157 = vrot.slane %v90, 5
  %v2158 = vrot.slane %v2157, 4
  %v2159 = vrot.slane %v91, 5
  %v2160 = vsel %vm2009, %v2158, %v2159
  %v2161 = vrot.slane %v2159, 4
  %v2162 = vrot.slane %v92, 5
  %v2163 = vsel %vm2009, %v2161, %v2162
  %v2164 = vrot.slane %v93, 5
  %v2165 = vrot.slane %v2164, 4
  %v2166 = vrot.slane %v94, 5
  %v2167 = vsel %vm2009, %v2165, %v2166
  %v2168 = vrot.slane %v2166, 4
  %v2169 = vrot.slane %v95, 5
  %v2170 = vsel %vm2009, %v2168, %v2169
  %v2171 = vrot.slane %v96, 5
  %v2172 = vrot.slane %v2171, 4
  %v2173 = vrot.slane %v97, 5
  %v2174 = vsel %vm2009, %v2172, %v2173
  %v2175 = vrot.slane %v2173, 4
  %v2176 = vrot.slane %v98, 5
  %v2177 = vsel %vm2009, %v2175, %v2176
  %v2178 = vrot.slane %v99, 5
  %v2179 = vrot.slane %v2178, 4
  %v2180 = vrot.slane %v100, 5
  %v2181 = vsel %vm2009, %v2179, %v2180
  %v2182 = vrot.slane %v2180, 4
  %v2183 = vrot.slane %v101, 5
  %v2184 = vsel %vm2009, %v2182, %v2183
  %v2185 = vrot.slane %v102, 5
  %v2186 = vrot.slane %v2185, 4
  %v2187 = vrot.slane %v103, 5
  %v2188 = vsel %vm2009, %v2186, %v2187
  %v2189 = vrot.slane %v2187, 4
  %v2190 = vrot.slane %v104, 5
  %v2191 = vsel %vm2009, %v2189, %v2190
  %v2192 = vrot.slane %v105, 5
  %v2193 = vrot.slane %v2192, 4
  %v2194 = vrot.slane %v106, 5
  %v2195 = vsel %vm2009, %v2193, %v2194
  %v2196 = vrot.slane %v2194, 4
  %v2197 = vrot.slane %v107, 5
  %v2198 = vsel %vm2009, %v2196, %v2197
  %v2199 = vrot.slane %v108, 5
  %v2200 = vrot.slane %v2199, 4
  %v2201 = vrot.slane %v109, 5
  %v2202 = vsel %vm2009, %v2200, %v2201
  %v2203 = vrot.slane %v2201, 4
  %v2204 = vrot.slane %v110, 5
  %v2205 = vsel %vm2009, %v2203, %v2204
  %v2206 = vrot.slane %v111, 5
  %v2207 = vrot.slane %v2206, 4
  %v2208 = vrot.slane %v112, 5
  %v2209 = vsel %vm2009, %v2207, %v2208
  %v2210 = vrot.slane %v2208, 4
  %v2211 = vrot.slane %v113, 5
  %v2212 = vsel %vm2009, %v2210, %v2211
  %v2213 = vrot.slane %v114, 5
  %v2214 = vrot.slane %v2213, 4
  %v2215 = vrot.slane %v115, 5
  %v2216 = vsel %vm2009, %v2214, %v2215
  %v2217 = vrot.slane %v2215, 4
  %v2218 = vrot.slane %v116, 5
  %v2219 = vsel %vm2009, %v2217, %v2218
  %v2220 = vrot.slane %v117, 5
  %v2221 = vrot.slane %v2220, 4
  %v2222 = vrot.slane %v118, 5
  %v2223 = vsel %vm2009, %v2221, %v2222
  %v2224 = vrot.slane %v2222, 4
  %v2225 = vrot.slane %v119, 5
  %v2226 = vsel %vm2009, %v2224, %v2225
  %v2227 = vrot.slane %v120, 5
  %v2228 = vrot.slane %v2227, 4
  %v2229 = vrot.slane %v121, 5
  %v2230 = vsel %vm2009, %v2228, %v2229
  %v2231 = vrot.slane %v2229, 4
  %v2232 = vrot.slane %v122, 5
  %v2233 = vsel %vm2009, %v2231, %v2232
  %v2234 = vld [vmem:[%s1 + $0x20] sm:$0xf]
  %v2235 = vld [vmem:[%s1 + $0x24] sm:$0xf]
  %v2236 = vld [vmem:[%s1 + $0x28] sm:$0xf]
  %v2237 = vld [vmem:[%s1 + $0x2c] sm:$0xf]
  %v2238 = vunpack.c.l.b16 %v2013
  %v2239 = vunpack.c.l.b16 %v2016
  %v2240 = vunpack.c.l.b16 %v2020
  %v2241 = vunpack.c.l.b16 %v2023
  %v2242 = vunpack.c.l.b16 %v2027
  %v2243 = vunpack.c.l.b16 %v2030
  %v2244 = vunpack.c.l.b16 %v2034
  %v2245 = vunpack.c.l.b16 %v2037
  %v2246 = vunpack.c.l.b16 %v2041
  %v2247 = vunpack.c.l.b16 %v2044
  %v2248 = vunpack.c.l.b16 %v2048
  %v2249 = vunpack.c.l.b16 %v2051
  %v2250 = vunpack.c.l.b16 %v2055
  %v2251 = vunpack.c.l.b16 %v2058
  %v2252 = vunpack.c.l.b16 %v2062
  %v2253 = vunpack.c.l.b16 %v2065
  %v2254 = vunpack.c.l.b16 %v2069
  %v2255 = vunpack.c.l.b16 %v2072
  %v2256 = vunpack.c.l.b16 %v2076
  %v2257 = vunpack.c.l.b16 %v2079
  %v2258 = vunpack.c.l.b16 %v2083
  %v2259 = vunpack.c.l.b16 %v2086
  %v2260 = vunpack.c.l.b16 %v2090
  %v2261 = vunpack.c.l.b16 %v2093
  %v2262 = vunpack.c.l.b16 %v2097
  %v2263 = vunpack.c.l.b16 %v2100
  %v2264 = vunpack.c.l.b16 %v2104
  %v2265 = vunpack.c.l.b16 %v2107
  %v2266 = vunpack.c.l.b16 %v2111
  %v2267 = vunpack.c.l.b16 %v2114
  %v2268 = vunpack.c.l.b16 %v2118
  %v2269 = vunpack.c.l.b16 %v2121
  %v2270 = vunpack.c.l.b16 %v2125
  %v2271 = vunpack.c.l.b16 %v2128
  %v2272 = vunpack.c.l.b16 %v2132
  %v2273 = vunpack.c.l.b16 %v2135
  %v2274 = vunpack.c.l.b16 %v2139
  %v2275 = vunpack.c.l.b16 %v2142
  %v2276 = vunpack.c.l.b16 %v2146
  %v2277 = vunpack.c.l.b16 %v2149
  %v2278 = vunpack.c.l.b16 %v2153
  %v2279 = vunpack.c.l.b16 %v2156
  %v2280 = vunpack.c.l.b16 %v2160
  %v2281 = vunpack.c.l.b16 %v2163
  %v2282 = vunpack.c.l.b16 %v2167
  %v2283 = vunpack.c.l.b16 %v2170
  %v2284 = vunpack.c.l.b16 %v2174
  %v2285 = vunpack.c.l.b16 %v2177
  %v2286 = vunpack.c.l.b16 %v2181
  %v2287 = vunpack.c.l.b16 %v2184
  %v2288 = vunpack.c.l.b16 %v2188
  %v2289 = vunpack.c.l.b16 %v2191
  %v2290 = vunpack.c.l.b16 %v2195
  %v2291 = vunpack.c.l.b16 %v2198
  %v2292 = vunpack.c.l.b16 %v2202
  %v2293 = vunpack.c.l.b16 %v2205
  %v2294 = vunpack.c.l.b16 %v2209
  %v2295 = vunpack.c.l.b16 %v2212
  %v2296 = vunpack.c.l.b16 %v2216
  %v2297 = vunpack.c.l.b16 %v2219
  %v2298 = vunpack.c.l.b16 %v2223
  %v2299 = vunpack.c.l.b16 %v2226
  %v2300 = vunpack.c.l.b16 %v2230
  %v2301 = vunpack.c.l.b16 %v2233
  %v2302 = vpack.c.b16 %v2239, %v2238
  %v2303 = vpack.c.b16 %v2241, %v2240
  %v2304 = vpack.c.b16 %v2243, %v2242
  %v2305 = vpack.c.b16 %v2245, %v2244
  %v2306 = vpack.c.b16 %v2247, %v2246
  %v2307 = vpack.c.b16 %v2249, %v2248
  %v2308 = vpack.c.b16 %v2251, %v2250
  %v2309 = vpack.c.b16 %v2253, %v2252
  %v2310 = vpack.c.b16 %v2255, %v2254
  %v2311 = vpack.c.b16 %v2257, %v2256
  %v2312 = vpack.c.b16 %v2259, %v2258
  %v2313 = vpack.c.b16 %v2261, %v2260
  %v2314 = vpack.c.b16 %v2263, %v2262
  %v2315 = vpack.c.b16 %v2265, %v2264
  %v2316 = vpack.c.b16 %v2267, %v2266
  %v2317 = vpack.c.b16 %v2269, %v2268
  %v2318 = vpack.c.b16 %v2271, %v2270
  %v2319 = vpack.c.b16 %v2273, %v2272
  %v2320 = vpack.c.b16 %v2275, %v2274
  %v2321 = vpack.c.b16 %v2277, %v2276
  %v2322 = vpack.c.b16 %v2279, %v2278
  %v2323 = vpack.c.b16 %v2281, %v2280
  %v2324 = vpack.c.b16 %v2283, %v2282
  %v2325 = vpack.c.b16 %v2285, %v2284
  %v2326 = vpack.c.b16 %v2287, %v2286
  %v2327 = vpack.c.b16 %v2289, %v2288
  %v2328 = vpack.c.b16 %v2291, %v2290
  %v2329 = vpack.c.b16 %v2293, %v2292
  %v2330 = vpack.c.b16 %v2295, %v2294
  %v2331 = vpack.c.b16 %v2297, %v2296
  %v2332 = vpack.c.b16 %v2299, %v2298
  %v2333 = vpack.c.b16 %v2301, %v2300
  %v2338 = vunpack.c.l.b16 %v2234
  %v2339 = vunpack.c.l.b16 %v2235
  %v2340 = vunpack.c.l.b16 %v2236
  %v2341 = vunpack.c.l.b16 %v2237
  %v2342 = vpack.c.b16 %v2339, %v2338
  %v2343 = vpack.c.b16 %v2341, %v2340
  %v2347 = vsel %vm305, %v2302, 0
  %v2350 = vsel %vm305, %v2303, 0
  %v2353 = vsel %vm305, %v2304, 0
  %v2356 = vsel %vm305, %v2305, 0
  %v2359 = vsel %vm305, %v2306, 0
  %v2362 = vsel %vm305, %v2307, 0
  %v2365 = vsel %vm305, %v2308, 0
  %v2368 = vsel %vm305, %v2309, 0
  %v2371 = vsel %vm305, %v2310, 0
  %v2374 = vsel %vm305, %v2311, 0
  %v2377 = vsel %vm305, %v2312, 0
  %v2380 = vsel %vm305, %v2313, 0
  %v2383 = vsel %vm305, %v2314, 0
  %v2386 = vsel %vm305, %v2315, 0
  %v2389 = vsel %vm305, %v2316, 0
  %v2392 = vsel %vm305, %v2317, 0
  %v2395 = vsel %vm305, %v2318, 0
  %v2398 = vsel %vm305, %v2319, 0
  %v2401 = vsel %vm305, %v2320, 0
  %v2404 = vsel %vm305, %v2321, 0
  %v2407 = vsel %vm305, %v2322, 0
  %v2410 = vsel %vm305, %v2323, 0
  %v2413 = vsel %vm305, %v2324, 0
  %v2416 = vsel %vm305, %v2325, 0
  %v2419 = vsel %vm305, %v2326, 0
  %v2422 = vsel %vm305, %v2327, 0
  %v2425 = vsel %vm305, %v2328, 0
  %v2428 = vsel %vm305, %v2329, 0
  %v2431 = vsel %vm305, %v2330, 0
  %v2434 = vsel %vm305, %v2331, 0
  %v2437 = vsel %vm305, %v2332, 0
  %v2440 = vsel %vm305, %v2333, 0
  %2442 = vmatpush.bf16.msra.mxu0 0
  %2443 = vmatpush.bf16.msra.mxu0 0
  %2444 = vmatpush.bf16.msra.mxu0 0
  %2445 = vmatpush.bf16.msra.mxu0 0
  %2446 = vmatpush.bf16.msra.mxu0 0
  %2447 = vmatpush.bf16.msra.mxu0 0
  %2448 = vmatpush.bf16.msra.mxu0 %v2343
  %2449 = vmatpush.bf16.msra.mxu0 %v2342
  %2450 = vmatmul.bf16.gmra.mxu0 %v2347
  %v2451 = vpop.f32.mrf.mxu0
  %v2452 = vadd.f32 0.0, %v2451
  %v2453 = vpop.f32.mrf.mxu0
  %v2454 = vadd.f32 0.0, %v2453
  %2455 = vmatmul.bf16.gmra.mxu0 %v2350
  %v2456 = vpop.f32.mrf.mxu0
  %v2457 = vadd.f32 0.0, %v2456
  %v2458 = vpop.f32.mrf.mxu0
  %v2459 = vadd.f32 0.0, %v2458
  %2460 = vmatmul.bf16.gmra.mxu0 %v2353
  %v2461 = vpop.f32.mrf.mxu0
  %v2462 = vadd.f32 0.0, %v2461
  %v2463 = vpop.f32.mrf.mxu0
  %v2464 = vadd.f32 0.0, %v2463
  %2465 = vmatmul.bf16.gmra.mxu0 %v2356
  %v2466 = vpop.f32.mrf.mxu0
  %v2467 = vadd.f32 0.0, %v2466
  %v2468 = vpop.f32.mrf.mxu0
  %v2469 = vadd.f32 0.0, %v2468
  %2470 = vmatmul.bf16.gmra.mxu0 %v2359
  %v2471 = vpop.f32.mrf.mxu0
  %v2472 = vadd.f32 0.0, %v2471
  %v2473 = vpop.f32.mrf.mxu0
  %v2474 = vadd.f32 0.0, %v2473
  %2475 = vmatmul.bf16.gmra.mxu0 %v2362
  %v2476 = vpop.f32.mrf.mxu0
  %v2477 = vadd.f32 0.0, %v2476
  %v2478 = vpop.f32.mrf.mxu0
  %v2479 = vadd.f32 0.0, %v2478
  %2480 = vmatmul.bf16.gmra.mxu0 %v2365
  %v2481 = vpop.f32.mrf.mxu0
  %v2482 = vadd.f32 0.0, %v2481
  %v2483 = vpop.f32.mrf.mxu0
  %v2484 = vadd.f32 0.0, %v2483
  %2485 = vmatmul.bf16.gmra.mxu0 %v2368
  %v2486 = vpop.f32.mrf.mxu0
  %v2487 = vadd.f32 0.0, %v2486
  %v2488 = vpop.f32.mrf.mxu0
  %v2489 = vadd.f32 0.0, %v2488
  %2490 = vmatmul.bf16.gmra.mxu0 %v2371
  %v2491 = vpop.f32.mrf.mxu0
  %v2492 = vadd.f32 0.0, %v2491
  %v2493 = vpop.f32.mrf.mxu0
  %v2494 = vadd.f32 0.0, %v2493
  %2495 = vmatmul.bf16.gmra.mxu0 %v2374
  %v2496 = vpop.f32.mrf.mxu0
  %v2497 = vadd.f32 0.0, %v2496
  %v2498 = vpop.f32.mrf.mxu0
  %v2499 = vadd.f32 0.0, %v2498
  %2500 = vmatmul.bf16.gmra.mxu0 %v2377
  %v2501 = vpop.f32.mrf.mxu0
  %v2502 = vadd.f32 0.0, %v2501
  %v2503 = vpop.f32.mrf.mxu0
  %v2504 = vadd.f32 0.0, %v2503
  %2505 = vmatmul.bf16.gmra.mxu0 %v2380
  %v2506 = vpop.f32.mrf.mxu0
  %v2507 = vadd.f32 0.0, %v2506
  %v2508 = vpop.f32.mrf.mxu0
  %v2509 = vadd.f32 0.0, %v2508
  %2510 = vmatmul.bf16.gmra.mxu0 %v2383
  %v2511 = vpop.f32.mrf.mxu0
  %v2512 = vadd.f32 0.0, %v2511
  %v2513 = vpop.f32.mrf.mxu0
  %v2514 = vadd.f32 0.0, %v2513
  %2515 = vmatmul.bf16.gmra.mxu0 %v2386
  %v2516 = vpop.f32.mrf.mxu0
  %v2517 = vadd.f32 0.0, %v2516
  %v2518 = vpop.f32.mrf.mxu0
  %v2519 = vadd.f32 0.0, %v2518
  %2520 = vmatmul.bf16.gmra.mxu0 %v2389
  %v2521 = vpop.f32.mrf.mxu0
  %v2522 = vadd.f32 0.0, %v2521
  %v2523 = vpop.f32.mrf.mxu0
  %v2524 = vadd.f32 0.0, %v2523
  %2525 = vmatmul.bf16.gmra.mxu0 %v2392
  %v2526 = vpop.f32.mrf.mxu0
  %v2527 = vadd.f32 0.0, %v2526
  %v2528 = vpop.f32.mrf.mxu0
  %v2529 = vadd.f32 0.0, %v2528
  %2530 = vmatmul.bf16.gmra.mxu0 %v2395
  %v2531 = vpop.f32.mrf.mxu0
  %v2532 = vadd.f32 0.0, %v2531
  %v2533 = vpop.f32.mrf.mxu0
  %v2534 = vadd.f32 0.0, %v2533
  %2535 = vmatmul.bf16.gmra.mxu0 %v2398
  %v2536 = vpop.f32.mrf.mxu0
  %v2537 = vadd.f32 0.0, %v2536
  %v2538 = vpop.f32.mrf.mxu0
  %v2539 = vadd.f32 0.0, %v2538
  %2540 = vmatmul.bf16.gmra.mxu0 %v2401
  %v2541 = vpop.f32.mrf.mxu0
  %v2542 = vadd.f32 0.0, %v2541
  %v2543 = vpop.f32.mrf.mxu0
  %v2544 = vadd.f32 0.0, %v2543
  %2545 = vmatmul.bf16.gmra.mxu0 %v2404
  %v2546 = vpop.f32.mrf.mxu0
  %v2547 = vadd.f32 0.0, %v2546
  %v2548 = vpop.f32.mrf.mxu0
  %v2549 = vadd.f32 0.0, %v2548
  %2550 = vmatmul.bf16.gmra.mxu0 %v2407
  %v2551 = vpop.f32.mrf.mxu0
  %v2552 = vadd.f32 0.0, %v2551
  %v2553 = vpop.f32.mrf.mxu0
  %v2554 = vadd.f32 0.0, %v2553
  %2555 = vmatmul.bf16.gmra.mxu0 %v2410
  %v2556 = vpop.f32.mrf.mxu0
  %v2557 = vadd.f32 0.0, %v2556
  %v2558 = vpop.f32.mrf.mxu0
  %v2559 = vadd.f32 0.0, %v2558
  %2560 = vmatmul.bf16.gmra.mxu0 %v2413
  %v2561 = vpop.f32.mrf.mxu0
  %v2562 = vadd.f32 0.0, %v2561
  %v2563 = vpop.f32.mrf.mxu0
  %v2564 = vadd.f32 0.0, %v2563
  %2565 = vmatmul.bf16.gmra.mxu0 %v2416
  %v2566 = vpop.f32.mrf.mxu0
  %v2567 = vadd.f32 0.0, %v2566
  %v2568 = vpop.f32.mrf.mxu0
  %v2569 = vadd.f32 0.0, %v2568
  %2570 = vmatmul.bf16.gmra.mxu0 %v2419
  %v2571 = vpop.f32.mrf.mxu0
  %v2572 = vadd.f32 0.0, %v2571
  %v2573 = vpop.f32.mrf.mxu0
  %v2574 = vadd.f32 0.0, %v2573
  %2575 = vmatmul.bf16.gmra.mxu0 %v2422
  %v2576 = vpop.f32.mrf.mxu0
  %v2577 = vadd.f32 0.0, %v2576
  %v2578 = vpop.f32.mrf.mxu0
  %v2579 = vadd.f32 0.0, %v2578
  %2580 = vmatmul.bf16.gmra.mxu0 %v2425
  %v2581 = vpop.f32.mrf.mxu0
  %v2582 = vadd.f32 0.0, %v2581
  %v2583 = vpop.f32.mrf.mxu0
  %v2584 = vadd.f32 0.0, %v2583
  %2585 = vmatmul.bf16.gmra.mxu0 %v2428
  %v2586 = vpop.f32.mrf.mxu0
  %v2587 = vadd.f32 0.0, %v2586
  %v2588 = vpop.f32.mrf.mxu0
  %v2589 = vadd.f32 0.0, %v2588
  %2590 = vmatmul.bf16.gmra.mxu0 %v2431
  %v2591 = vpop.f32.mrf.mxu0
  %v2592 = vadd.f32 0.0, %v2591
  %v2593 = vpop.f32.mrf.mxu0
  %v2594 = vadd.f32 0.0, %v2593
  %2595 = vmatmul.bf16.gmra.mxu0 %v2434
  %v2596 = vpop.f32.mrf.mxu0
  %v2597 = vadd.f32 0.0, %v2596
  %v2598 = vpop.f32.mrf.mxu0
  %v2599 = vadd.f32 0.0, %v2598
  %2600 = vmatmul.bf16.gmra.mxu0 %v2437
  %v2601 = vpop.f32.mrf.mxu0
  %v2602 = vadd.f32 0.0, %v2601
  %v2603 = vpop.f32.mrf.mxu0
  %v2604 = vadd.f32 0.0, %v2603
  %2605 = vmatmul.bf16.gmra.mxu0 %v2440
  %v2606 = vpop.f32.mrf.mxu0
  %v2607 = vadd.f32 0.0, %v2606
  %v2608 = vpop.f32.mrf.mxu0
  %v2609 = vadd.f32 0.0, %v2608
  %2610 = vdwg.mxu0
  %v2611 = vld [vmem:[#allocation2] sm:$0xff]
  %v2612 = vld [vmem:[#allocation2 + $0x8] sm:$0xff]
  %v2613 = vld [vmem:[#allocation2 + $0x10] sm:$0xff]
  %v2614 = vld [vmem:[#allocation2 + $0x18] sm:$0xff]
  %v2615 = vld [vmem:[#allocation2 + $0x20] sm:$0xff]
  %v2616 = vld [vmem:[#allocation2 + $0x28] sm:$0xff]
  %v2617 = vld [vmem:[#allocation2 + $0x30] sm:$0xff]
  %v2618 = vld [vmem:[#allocation2 + $0x38] sm:$0xff]
  %v2619 = vld [vmem:[#allocation2 + $0x40] sm:$0xff]
  %v2620 = vld [vmem:[#allocation2 + $0x48] sm:$0xff]
  %v2621 = vld [vmem:[#allocation2 + $0x50] sm:$0xff]
  %v2622 = vld [vmem:[#allocation2 + $0x58] sm:$0xff]
  %v2623 = vld [vmem:[#allocation2 + $0x60] sm:$0xff]
  %v2624 = vld [vmem:[#allocation2 + $0x68] sm:$0xff]
  %v2625 = vld [vmem:[#allocation2 + $0x70] sm:$0xff]
  %v2626 = vld [vmem:[#allocation2 + $0x78] sm:$0xff]
  %v2627 = vld [vmem:[#allocation2 + $0x80] sm:$0xff]
  %v2628 = vld [vmem:[#allocation2 + $0x88] sm:$0xff]
  %v2629 = vld [vmem:[#allocation2 + $0x90] sm:$0xff]
  %v2630 = vld [vmem:[#allocation2 + $0x98] sm:$0xff]
  %v2631 = vld [vmem:[#allocation2 + $0xa0] sm:$0xff]
  %v2632 = vld [vmem:[#allocation2 + $0xa8] sm:$0xff]
  %v2633 = vld [vmem:[#allocation2 + $0xb0] sm:$0xff]
  %v2634 = vld [vmem:[#allocation2 + $0xb8] sm:$0xff]
  %v2635 = vld [vmem:[#allocation2 + $0xc0] sm:$0xff]
  %v2636 = vld [vmem:[#allocation2 + $0xc8] sm:$0xff]
  %v2637 = vld [vmem:[#allocation2 + $0xd0] sm:$0xff]
  %v2638 = vld [vmem:[#allocation2 + $0xd8] sm:$0xff]
  %v2639 = vld [vmem:[#allocation2 + $0xe0] sm:$0xff]
  %v2640 = vld [vmem:[#allocation2 + $0xe8] sm:$0xff]
  %v2641 = vld [vmem:[#allocation2 + $0xf0] sm:$0xff]
  %v2642 = vld [vmem:[#allocation2 + $0xf8] sm:$0xff]
  %v2643 = vld [vmem:[#allocation2 + $0x100] sm:$0xff]
  %v2644 = vld [vmem:[#allocation2 + $0x108] sm:$0xff]
  %v2645 = vld [vmem:[#allocation2 + $0x110] sm:$0xff]
  %v2646 = vld [vmem:[#allocation2 + $0x118] sm:$0xff]
  %v2647 = vld [vmem:[#allocation2 + $0x120] sm:$0xff]
  %v2648 = vld [vmem:[#allocation2 + $0x128] sm:$0xff]
  %v2649 = vld [vmem:[#allocation2 + $0x130] sm:$0xff]
  %v2650 = vld [vmem:[#allocation2 + $0x138] sm:$0xff]
  %v2651 = vld [vmem:[#allocation2 + $0x140] sm:$0xff]
  %v2652 = vld [vmem:[#allocation2 + $0x148] sm:$0xff]
  %v2653 = vld [vmem:[#allocation2 + $0x150] sm:$0xff]
  %v2654 = vld [vmem:[#allocation2 + $0x158] sm:$0xff]
  %v2655 = vld [vmem:[#allocation2 + $0x160] sm:$0xff]
  %v2656 = vld [vmem:[#allocation2 + $0x168] sm:$0xff]
  %v2657 = vld [vmem:[#allocation2 + $0x170] sm:$0xff]
  %v2658 = vld [vmem:[#allocation2 + $0x178] sm:$0xff]
  %v2659 = vld [vmem:[#allocation2 + $0x180] sm:$0xff]
  %v2660 = vld [vmem:[#allocation2 + $0x188] sm:$0xff]
  %v2661 = vld [vmem:[#allocation2 + $0x190] sm:$0xff]
  %v2662 = vld [vmem:[#allocation2 + $0x198] sm:$0xff]
  %v2663 = vld [vmem:[#allocation2 + $0x1a0] sm:$0xff]
  %v2664 = vld [vmem:[#allocation2 + $0x1a8] sm:$0xff]
  %v2665 = vld [vmem:[#allocation2 + $0x1b0] sm:$0xff]
  %v2666 = vld [vmem:[#allocation2 + $0x1b8] sm:$0xff]
  %v2667 = vld [vmem:[#allocation2 + $0x1c0] sm:$0xff]
  %v2668 = vld [vmem:[#allocation2 + $0x1c8] sm:$0xff]
  %v2669 = vld [vmem:[#allocation2 + $0x1d0] sm:$0xff]
  %v2670 = vld [vmem:[#allocation2 + $0x1d8] sm:$0xff]
  %v2671 = vld [vmem:[#allocation2 + $0x1e0] sm:$0xff]
  %v2672 = vld [vmem:[#allocation2 + $0x1e8] sm:$0xff]
  %v2673 = vld [vmem:[#allocation2 + $0x1f0] sm:$0xff]
  %v2674 = vld [vmem:[#allocation2 + $0x1f8] sm:$0xff]
  %v2675 = vadd.f32 %v2611, %v2452
  %v2676 = vadd.f32 %v2612, %v2454
  %v2677 = vadd.f32 %v2613, %v2457
  %v2678 = vadd.f32 %v2614, %v2459
  %v2679 = vadd.f32 %v2615, %v2462
  %v2680 = vadd.f32 %v2616, %v2464
  %v2681 = vadd.f32 %v2617, %v2467
  %v2682 = vadd.f32 %v2618, %v2469
  %v2683 = vadd.f32 %v2619, %v2472
  %v2684 = vadd.f32 %v2620, %v2474
  %v2685 = vadd.f32 %v2621, %v2477
  %v2686 = vadd.f32 %v2622, %v2479
  %v2687 = vadd.f32 %v2623, %v2482
  %v2688 = vadd.f32 %v2624, %v2484
  %v2689 = vadd.f32 %v2625, %v2487
  %v2690 = vadd.f32 %v2626, %v2489
  %v2691 = vadd.f32 %v2627, %v2492
  %v2692 = vadd.f32 %v2628, %v2494
  %v2693 = vadd.f32 %v2629, %v2497
  %v2694 = vadd.f32 %v2630, %v2499
  %v2695 = vadd.f32 %v2631, %v2502
  %v2696 = vadd.f32 %v2632, %v2504
  %v2697 = vadd.f32 %v2633, %v2507
  %v2698 = vadd.f32 %v2634, %v2509
  %v2699 = vadd.f32 %v2635, %v2512
  %v2700 = vadd.f32 %v2636, %v2514
  %v2701 = vadd.f32 %v2637, %v2517
  %v2702 = vadd.f32 %v2638, %v2519
  %v2703 = vadd.f32 %v2639, %v2522
  %v2704 = vadd.f32 %v2640, %v2524
  %v2705 = vadd.f32 %v2641, %v2527
  %v2706 = vadd.f32 %v2642, %v2529
  %v2707 = vadd.f32 %v2643, %v2532
  %v2708 = vadd.f32 %v2644, %v2534
  %v2709 = vadd.f32 %v2645, %v2537
  %v2710 = vadd.f32 %v2646, %v2539
  %v2711 = vadd.f32 %v2647, %v2542
  %v2712 = vadd.f32 %v2648, %v2544
  %v2713 = vadd.f32 %v2649, %v2547
  %v2714 = vadd.f32 %v2650, %v2549
  %v2715 = vadd.f32 %v2651, %v2552
  %v2716 = vadd.f32 %v2652, %v2554
  %v2717 = vadd.f32 %v2653, %v2557
  %v2718 = vadd.f32 %v2654, %v2559
  %v2719 = vadd.f32 %v2655, %v2562
  %v2720 = vadd.f32 %v2656, %v2564
  %v2721 = vadd.f32 %v2657, %v2567
  %v2722 = vadd.f32 %v2658, %v2569
  %v2723 = vadd.f32 %v2659, %v2572
  %v2724 = vadd.f32 %v2660, %v2574
  %v2725 = vadd.f32 %v2661, %v2577
  %v2726 = vadd.f32 %v2662, %v2579
  %v2727 = vadd.f32 %v2663, %v2582
  %v2728 = vadd.f32 %v2664, %v2584
  %v2729 = vadd.f32 %v2665, %v2587
  %v2730 = vadd.f32 %v2666, %v2589
  %v2731 = vadd.f32 %v2667, %v2592
  %v2732 = vadd.f32 %v2668, %v2594
  %v2733 = vadd.f32 %v2669, %v2597
  %v2734 = vadd.f32 %v2670, %v2599
  %v2735 = vadd.f32 %v2671, %v2602
  %v2736 = vadd.f32 %v2672, %v2604
  %v2737 = vadd.f32 %v2673, %v2607
  %v2738 = vadd.f32 %v2674, %v2609
  %2739 = vst [vmem:[#allocation2] sm:$0xff] %v2675
  %2740 = vst [vmem:[#allocation2 + $0x8] sm:$0xff] %v2676
  %2741 = vst [vmem:[#allocation2 + $0x10] sm:$0xff] %v2677
  %2742 = vst [vmem:[#allocation2 + $0x18] sm:$0xff] %v2678
  %2743 = vst [vmem:[#allocation2 + $0x20] sm:$0xff] %v2679
  %2744 = vst [vmem:[#allocation2 + $0x28] sm:$0xff] %v2680
  %2745 = vst [vmem:[#allocation2 + $0x30] sm:$0xff] %v2681
  %2746 = vst [vmem:[#allocation2 + $0x38] sm:$0xff] %v2682
  %2747 = vst [vmem:[#allocation2 + $0x40] sm:$0xff] %v2683
  %2748 = vst [vmem:[#allocation2 + $0x48] sm:$0xff] %v2684
  %2749 = vst [vmem:[#allocation2 + $0x50] sm:$0xff] %v2685
  %2750 = vst [vmem:[#allocation2 + $0x58] sm:$0xff] %v2686
  %2751 = vst [vmem:[#allocation2 + $0x60] sm:$0xff] %v2687
  %2752 = vst [vmem:[#allocation2 + $0x68] sm:$0xff] %v2688
  %2753 = vst [vmem:[#allocation2 + $0x70] sm:$0xff] %v2689
  %2754 = vst [vmem:[#allocation2 + $0x78] sm:$0xff] %v2690
  %2755 = vst [vmem:[#allocation2 + $0x80] sm:$0xff] %v2691
  %2756 = vst [vmem:[#allocation2 + $0x88] sm:$0xff] %v2692
  %2757 = vst [vmem:[#allocation2 + $0x90] sm:$0xff] %v2693
  %2758 = vst [vmem:[#allocation2 + $0x98] sm:$0xff] %v2694
  %2759 = vst [vmem:[#allocation2 + $0xa0] sm:$0xff] %v2695
  %2760 = vst [vmem:[#allocation2 + $0xa8] sm:$0xff] %v2696
  %2761 = vst [vmem:[#allocation2 + $0xb0] sm:$0xff] %v2697
  %2762 = vst [vmem:[#allocation2 + $0xb8] sm:$0xff] %v2698
  %2763 = vst [vmem:[#allocation2 + $0xc0] sm:$0xff] %v2699
  %2764 = vst [vmem:[#allocation2 + $0xc8] sm:$0xff] %v2700
  %2765 = vst [vmem:[#allocation2 + $0xd0] sm:$0xff] %v2701
  %2766 = vst [vmem:[#allocation2 + $0xd8] sm:$0xff] %v2702
  %2767 = vst [vmem:[#allocation2 + $0xe0] sm:$0xff] %v2703
  %2768 = vst [vmem:[#allocation2 + $0xe8] sm:$0xff] %v2704
  %2769 = vst [vmem:[#allocation2 + $0xf0] sm:$0xff] %v2705
  %2770 = vst [vmem:[#allocation2 + $0xf8] sm:$0xff] %v2706
  %2771 = vst [vmem:[#allocation2 + $0x100] sm:$0xff] %v2707
  %2772 = vst [vmem:[#allocation2 + $0x108] sm:$0xff] %v2708
  %2773 = vst [vmem:[#allocation2 + $0x110] sm:$0xff] %v2709
  %2774 = vst [vmem:[#allocation2 + $0x118] sm:$0xff] %v2710
  %2775 = vst [vmem:[#allocation2 + $0x120] sm:$0xff] %v2711
  %2776 = vst [vmem:[#allocation2 + $0x128] sm:$0xff] %v2712
  %2777 = vst [vmem:[#allocation2 + $0x130] sm:$0xff] %v2713
  %2778 = vst [vmem:[#allocation2 + $0x138] sm:$0xff] %v2714
  %2779 = vst [vmem:[#allocation2 + $0x140] sm:$0xff] %v2715
  %2780 = vst [vmem:[#allocation2 + $0x148] sm:$0xff] %v2716
  %2781 = vst [vmem:[#allocation2 + $0x150] sm:$0xff] %v2717
  %2782 = vst [vmem:[#allocation2 + $0x158] sm:$0xff] %v2718
  %2783 = vst [vmem:[#allocation2 + $0x160] sm:$0xff] %v2719
  %2784 = vst [vmem:[#allocation2 + $0x168] sm:$0xff] %v2720
  %2785 = vst [vmem:[#allocation2 + $0x170] sm:$0xff] %v2721
  %2786 = vst [vmem:[#allocation2 + $0x178] sm:$0xff] %v2722
  %2787 = vst [vmem:[#allocation2 + $0x180] sm:$0xff] %v2723
  %2788 = vst [vmem:[#allocation2 + $0x188] sm:$0xff] %v2724
  %2789 = vst [vmem:[#allocation2 + $0x190] sm:$0xff] %v2725
  %2790 = vst [vmem:[#allocation2 + $0x198] sm:$0xff] %v2726
  %2791 = vst [vmem:[#allocation2 + $0x1a0] sm:$0xff] %v2727
  %2792 = vst [vmem:[#allocation2 + $0x1a8] sm:$0xff] %v2728
  %2793 = vst [vmem:[#allocation2 + $0x1b0] sm:$0xff] %v2729
  %2794 = vst [vmem:[#allocation2 + $0x1b8] sm:$0xff] %v2730
  %2795 = vst [vmem:[#allocation2 + $0x1c0] sm:$0xff] %v2731
  %2796 = vst [vmem:[#allocation2 + $0x1c8] sm:$0xff] %v2732
  %2797 = vst [vmem:[#allocation2 + $0x1d0] sm:$0xff] %v2733
  %2798 = vst [vmem:[#allocation2 + $0x1d8] sm:$0xff] %v2734
  %2799 = vst [vmem:[#allocation2 + $0x1e0] sm:$0xff] %v2735
  %2800 = vst [vmem:[#allocation2 + $0x1e8] sm:$0xff] %v2736
  %2801 = vst [vmem:[#allocation2 + $0x1f0] sm:$0xff] %v2737
  %2802 = vst [vmem:[#allocation2 + $0x1f8] sm:$0xff] %v2738
  %v2803 = vld [vmem:[%s1 + $0x30] sm:$0xf]
  %v2804 = vld [vmem:[%s1 + $0x34] sm:$0xf]
  %v2805 = vld [vmem:[%s1 + $0x38] sm:$0xf]
  %v2806 = vld [vmem:[%s1 + $0x3c] sm:$0xf]
  %v2811 = vunpack.c.l.b16 %v69
  %v2812 = vunpack.c.l.b16 %v70
  %v2813 = vunpack.c.l.b16 %v123
  %v2814 = vunpack.c.l.b16 %v124
  %v2815 = vpack.c.b16 %v2812, %v2811
  %v2816 = vpack.c.b16 %v2814, %v2813
  %v2821 = vunpack.c.l.b16 %v2803
  %v2822 = vunpack.c.l.b16 %v2804
  %v2823 = vunpack.c.l.b16 %v2805
  %v2824 = vunpack.c.l.b16 %v2806
  %v2825 = vpack.c.b16 %v2822, %v2821
  %v2826 = vpack.c.b16 %v2824, %v2823
  %v2830 = vsel %vm305, %v2815, 0
  %v2833 = vsel %vm305, %v2816, 0
  %2835 = vmatpush.bf16.msra.mxu0 0
  %2836 = vmatpush.bf16.msra.mxu0 0
  %2837 = vmatpush.bf16.msra.mxu0 0
  %2838 = vmatpush.bf16.msra.mxu0 0
  %2839 = vmatpush.bf16.msra.mxu0 0
  %2840 = vmatpush.bf16.msra.mxu0 0
  %2841 = vmatpush.bf16.msra.mxu0 %v2826
  %2842 = vmatpush.bf16.msra.mxu0 %v2825
  %2843 = vmatmul.bf16.gmra.mxu0 %v310
  %v2844 = vpop.f32.mrf.mxu0
  %v2845 = vadd.f32 0.0, %v2844
  %v2846 = vpop.f32.mrf.mxu0
  %v2847 = vadd.f32 0.0, %v2846
  %2848 = vmatmul.bf16.gmra.mxu0 %v313
  %v2849 = vpop.f32.mrf.mxu0
  %v2850 = vadd.f32 0.0, %v2849
  %v2851 = vpop.f32.mrf.mxu0
  %v2852 = vadd.f32 0.0, %v2851
  %2853 = vmatmul.bf16.gmra.mxu0 %v316
  %v2854 = vpop.f32.mrf.mxu0
  %v2855 = vadd.f32 0.0, %v2854
  %v2856 = vpop.f32.mrf.mxu0
  %v2857 = vadd.f32 0.0, %v2856
  %2858 = vmatmul.bf16.gmra.mxu0 %v319
  %v2859 = vpop.f32.mrf.mxu0
  %v2860 = vadd.f32 0.0, %v2859
  %v2861 = vpop.f32.mrf.mxu0
  %v2862 = vadd.f32 0.0, %v2861
  %2863 = vmatmul.bf16.gmra.mxu0 %v322
  %v2864 = vpop.f32.mrf.mxu0
  %v2865 = vadd.f32 0.0, %v2864
  %v2866 = vpop.f32.mrf.mxu0
  %v2867 = vadd.f32 0.0, %v2866
  %2868 = vmatmul.bf16.gmra.mxu0 %v325
  %v2869 = vpop.f32.mrf.mxu0
  %v2870 = vadd.f32 0.0, %v2869
  %v2871 = vpop.f32.mrf.mxu0
  %v2872 = vadd.f32 0.0, %v2871
  %2873 = vmatmul.bf16.gmra.mxu0 %v328
  %v2874 = vpop.f32.mrf.mxu0
  %v2875 = vadd.f32 0.0, %v2874
  %v2876 = vpop.f32.mrf.mxu0
  %v2877 = vadd.f32 0.0, %v2876
  %2878 = vmatmul.bf16.gmra.mxu0 %v331
  %v2879 = vpop.f32.mrf.mxu0
  %v2880 = vadd.f32 0.0, %v2879
  %v2881 = vpop.f32.mrf.mxu0
  %v2882 = vadd.f32 0.0, %v2881
  %2883 = vmatmul.bf16.gmra.mxu0 %v334
  %v2884 = vpop.f32.mrf.mxu0
  %v2885 = vadd.f32 0.0, %v2884
  %v2886 = vpop.f32.mrf.mxu0
  %v2887 = vadd.f32 0.0, %v2886
  %2888 = vmatmul.bf16.gmra.mxu0 %v337
  %v2889 = vpop.f32.mrf.mxu0
  %v2890 = vadd.f32 0.0, %v2889
  %v2891 = vpop.f32.mrf.mxu0
  %v2892 = vadd.f32 0.0, %v2891
  %2893 = vmatmul.bf16.gmra.mxu0 %v340
  %v2894 = vpop.f32.mrf.mxu0
  %v2895 = vadd.f32 0.0, %v2894
  %v2896 = vpop.f32.mrf.mxu0
  %v2897 = vadd.f32 0.0, %v2896
  %2898 = vmatmul.bf16.gmra.mxu0 %v343
  %v2899 = vpop.f32.mrf.mxu0
  %v2900 = vadd.f32 0.0, %v2899
  %v2901 = vpop.f32.mrf.mxu0
  %v2902 = vadd.f32 0.0, %v2901
  %2903 = vmatmul.bf16.gmra.mxu0 %v346
  %v2904 = vpop.f32.mrf.mxu0
  %v2905 = vadd.f32 0.0, %v2904
  %v2906 = vpop.f32.mrf.mxu0
  %v2907 = vadd.f32 0.0, %v2906
  %2908 = vmatmul.bf16.gmra.mxu0 %v349
  %v2909 = vpop.f32.mrf.mxu0
  %v2910 = vadd.f32 0.0, %v2909
  %v2911 = vpop.f32.mrf.mxu0
  %v2912 = vadd.f32 0.0, %v2911
  %2913 = vmatmul.bf16.gmra.mxu0 %v352
  %v2914 = vpop.f32.mrf.mxu0
  %v2915 = vadd.f32 0.0, %v2914
  %v2916 = vpop.f32.mrf.mxu0
  %v2917 = vadd.f32 0.0, %v2916
  %2918 = vmatmul.bf16.gmra.mxu0 %v2830
  %v2919 = vpop.f32.mrf.mxu0
  %v2920 = vadd.f32 0.0, %v2919
  %v2921 = vpop.f32.mrf.mxu0
  %v2922 = vadd.f32 0.0, %v2921
  %2923 = vmatmul.bf16.gmra.mxu0 %v358
  %v2924 = vpop.f32.mrf.mxu0
  %v2925 = vadd.f32 0.0, %v2924
  %v2926 = vpop.f32.mrf.mxu0
  %v2927 = vadd.f32 0.0, %v2926
  %2928 = vmatmul.bf16.gmra.mxu0 %v361
  %v2929 = vpop.f32.mrf.mxu0
  %v2930 = vadd.f32 0.0, %v2929
  %v2931 = vpop.f32.mrf.mxu0
  %v2932 = vadd.f32 0.0, %v2931
  %2933 = vmatmul.bf16.gmra.mxu0 %v364
  %v2934 = vpop.f32.mrf.mxu0
  %v2935 = vadd.f32 0.0, %v2934
  %v2936 = vpop.f32.mrf.mxu0
  %v2937 = vadd.f32 0.0, %v2936
  %2938 = vmatmul.bf16.gmra.mxu0 %v367
  %v2939 = vpop.f32.mrf.mxu0
  %v2940 = vadd.f32 0.0, %v2939
  %v2941 = vpop.f32.mrf.mxu0
  %v2942 = vadd.f32 0.0, %v2941
  %2943 = vmatmul.bf16.gmra.mxu0 %v370
  %v2944 = vpop.f32.mrf.mxu0
  %v2945 = vadd.f32 0.0, %v2944
  %v2946 = vpop.f32.mrf.mxu0
  %v2947 = vadd.f32 0.0, %v2946
  %2948 = vmatmul.bf16.gmra.mxu0 %v373
  %v2949 = vpop.f32.mrf.mxu0
  %v2950 = vadd.f32 0.0, %v2949
  %v2951 = vpop.f32.mrf.mxu0
  %v2952 = vadd.f32 0.0, %v2951
  %2953 = vmatmul.bf16.gmra.mxu0 %v376
  %v2954 = vpop.f32.mrf.mxu0
  %v2955 = vadd.f32 0.0, %v2954
  %v2956 = vpop.f32.mrf.mxu0
  %v2957 = vadd.f32 0.0, %v2956
  %2958 = vmatmul.bf16.gmra.mxu0 %v379
  %v2959 = vpop.f32.mrf.mxu0
  %v2960 = vadd.f32 0.0, %v2959
  %v2961 = vpop.f32.mrf.mxu0
  %v2962 = vadd.f32 0.0, %v2961
  %2963 = vmatmul.bf16.gmra.mxu0 %v382
  %v2964 = vpop.f32.mrf.mxu0
  %v2965 = vadd.f32 0.0, %v2964
  %v2966 = vpop.f32.mrf.mxu0
  %v2967 = vadd.f32 0.0, %v2966
  %2968 = vmatmul.bf16.gmra.mxu0 %v385
  %v2969 = vpop.f32.mrf.mxu0
  %v2970 = vadd.f32 0.0, %v2969
  %v2971 = vpop.f32.mrf.mxu0
  %v2972 = vadd.f32 0.0, %v2971
  %2973 = vmatmul.bf16.gmra.mxu0 %v388
  %v2974 = vpop.f32.mrf.mxu0
  %v2975 = vadd.f32 0.0, %v2974
  %v2976 = vpop.f32.mrf.mxu0
  %v2977 = vadd.f32 0.0, %v2976
  %2978 = vmatmul.bf16.gmra.mxu0 %v391
  %v2979 = vpop.f32.mrf.mxu0
  %v2980 = vadd.f32 0.0, %v2979
  %v2981 = vpop.f32.mrf.mxu0
  %v2982 = vadd.f32 0.0, %v2981
  %2983 = vmatmul.bf16.gmra.mxu0 %v394
  %v2984 = vpop.f32.mrf.mxu0
  %v2985 = vadd.f32 0.0, %v2984
  %v2986 = vpop.f32.mrf.mxu0
  %v2987 = vadd.f32 0.0, %v2986
  %2988 = vmatmul.bf16.gmra.mxu0 %v397
  %v2989 = vpop.f32.mrf.mxu0
  %v2990 = vadd.f32 0.0, %v2989
  %v2991 = vpop.f32.mrf.mxu0
  %v2992 = vadd.f32 0.0, %v2991
  %2993 = vmatmul.bf16.gmra.mxu0 %v400
  %v2994 = vpop.f32.mrf.mxu0
  %v2995 = vadd.f32 0.0, %v2994
  %v2996 = vpop.f32.mrf.mxu0
  %v2997 = vadd.f32 0.0, %v2996
  %2998 = vmatmul.bf16.gmra.mxu0 %v2833
  %v2999 = vpop.f32.mrf.mxu0
  %v3000 = vadd.f32 0.0, %v2999
  %v3001 = vpop.f32.mrf.mxu0
  %v3002 = vadd.f32 0.0, %v3001
  %3003 = vdwg.mxu0
  %v3004 = vld [vmem:[#allocation2] sm:$0xff]
  %v3005 = vld [vmem:[#allocation2 + $0x8] sm:$0xff]
  %v3006 = vld [vmem:[#allocation2 + $0x10] sm:$0xff]
  %v3007 = vld [vmem:[#allocation2 + $0x18] sm:$0xff]
  %v3008 = vld [vmem:[#allocation2 + $0x20] sm:$0xff]
  %v3009 = vld [vmem:[#allocation2 + $0x28] sm:$0xff]
  %v3010 = vld [vmem:[#allocation2 + $0x30] sm:$0xff]
  %v3011 = vld [vmem:[#allocation2 + $0x38] sm:$0xff]
  %v3012 = vld [vmem:[#allocation2 + $0x40] sm:$0xff]
  %v3013 = vld [vmem:[#allocation2 + $0x48] sm:$0xff]
  %v3014 = vld [vmem:[#allocation2 + $0x50] sm:$0xff]
  %v3015 = vld [vmem:[#allocation2 + $0x58] sm:$0xff]
  %v3016 = vld [vmem:[#allocation2 + $0x60] sm:$0xff]
  %v3017 = vld [vmem:[#allocation2 + $0x68] sm:$0xff]
  %v3018 = vld [vmem:[#allocation2 + $0x70] sm:$0xff]
  %v3019 = vld [vmem:[#allocation2 + $0x78] sm:$0xff]
  %v3020 = vld [vmem:[#allocation2 + $0x80] sm:$0xff]
  %v3021 = vld [vmem:[#allocation2 + $0x88] sm:$0xff]
  %v3022 = vld [vmem:[#allocation2 + $0x90] sm:$0xff]
  %v3023 = vld [vmem:[#allocation2 + $0x98] sm:$0xff]
  %v3024 = vld [vmem:[#allocation2 + $0xa0] sm:$0xff]
  %v3025 = vld [vmem:[#allocation2 + $0xa8] sm:$0xff]
  %v3026 = vld [vmem:[#allocation2 + $0xb0] sm:$0xff]
  %v3027 = vld [vmem:[#allocation2 + $0xb8] sm:$0xff]
  %v3028 = vld [vmem:[#allocation2 + $0xc0] sm:$0xff]
  %v3029 = vld [vmem:[#allocation2 + $0xc8] sm:$0xff]
  %v3030 = vld [vmem:[#allocation2 + $0xd0] sm:$0xff]
  %v3031 = vld [vmem:[#allocation2 + $0xd8] sm:$0xff]
  %v3032 = vld [vmem:[#allocation2 + $0xe0] sm:$0xff]
  %v3033 = vld [vmem:[#allocation2 + $0xe8] sm:$0xff]
  %v3034 = vld [vmem:[#allocation2 + $0xf0] sm:$0xff]
  %v3035 = vld [vmem:[#allocation2 + $0xf8] sm:$0xff]
  %v3036 = vld [vmem:[#allocation2 + $0x100] sm:$0xff]
  %v3037 = vld [vmem:[#allocation2 + $0x108] sm:$0xff]
  %v3038 = vld [vmem:[#allocation2 + $0x110] sm:$0xff]
  %v3039 = vld [vmem:[#allocation2 + $0x118] sm:$0xff]
  %v3040 = vld [vmem:[#allocation2 + $0x120] sm:$0xff]
  %v3041 = vld [vmem:[#allocation2 + $0x128] sm:$0xff]
  %v3042 = vld [vmem:[#allocation2 + $0x130] sm:$0xff]
  %v3043 = vld [vmem:[#allocation2 + $0x138] sm:$0xff]
  %v3044 = vld [vmem:[#allocation2 + $0x140] sm:$0xff]
  %v3045 = vld [vmem:[#allocation2 + $0x148] sm:$0xff]
  %v3046 = vld [vmem:[#allocation2 + $0x150] sm:$0xff]
  %v3047 = vld [vmem:[#allocation2 + $0x158] sm:$0xff]
  %v3048 = vld [vmem:[#allocation2 + $0x160] sm:$0xff]
  %v3049 = vld [vmem:[#allocation2 + $0x168] sm:$0xff]
  %v3050 = vld [vmem:[#allocation2 + $0x170] sm:$0xff]
  %v3051 = vld [vmem:[#allocation2 + $0x178] sm:$0xff]
  %v3052 = vld [vmem:[#allocation2 + $0x180] sm:$0xff]
  %v3053 = vld [vmem:[#allocation2 + $0x188] sm:$0xff]
  %v3054 = vld [vmem:[#allocation2 + $0x190] sm:$0xff]
  %v3055 = vld [vmem:[#allocation2 + $0x198] sm:$0xff]
  %v3056 = vld [vmem:[#allocation2 + $0x1a0] sm:$0xff]
  %v3057 = vld [vmem:[#allocation2 + $0x1a8] sm:$0xff]
  %v3058 = vld [vmem:[#allocation2 + $0x1b0] sm:$0xff]
  %v3059 = vld [vmem:[#allocation2 + $0x1b8] sm:$0xff]
  %v3060 = vld [vmem:[#allocation2 + $0x1c0] sm:$0xff]
  %v3061 = vld [vmem:[#allocation2 + $0x1c8] sm:$0xff]
  %v3062 = vld [vmem:[#allocation2 + $0x1d0] sm:$0xff]
  %v3063 = vld [vmem:[#allocation2 + $0x1d8] sm:$0xff]
  %v3064 = vld [vmem:[#allocation2 + $0x1e0] sm:$0xff]
  %v3065 = vld [vmem:[#allocation2 + $0x1e8] sm:$0xff]
  %v3066 = vld [vmem:[#allocation2 + $0x1f0] sm:$0xff]
  %v3067 = vld [vmem:[#allocation2 + $0x1f8] sm:$0xff]
  %v3068 = vadd.f32 %v3004, %v2845
  %v3069 = vadd.f32 %v3005, %v2847
  %v3070 = vadd.f32 %v3006, %v2850
  %v3071 = vadd.f32 %v3007, %v2852
  %v3072 = vadd.f32 %v3008, %v2855
  %v3073 = vadd.f32 %v3009, %v2857
  %v3074 = vadd.f32 %v3010, %v2860
  %v3075 = vadd.f32 %v3011, %v2862
  %v3076 = vadd.f32 %v3012, %v2865
  %v3077 = vadd.f32 %v3013, %v2867
  %v3078 = vadd.f32 %v3014, %v2870
  %v3079 = vadd.f32 %v3015, %v2872
  %v3080 = vadd.f32 %v3016, %v2875
  %v3081 = vadd.f32 %v3017, %v2877
  %v3082 = vadd.f32 %v3018, %v2880
  %v3083 = vadd.f32 %v3019, %v2882
  %v3084 = vadd.f32 %v3020, %v2885
  %v3085 = vadd.f32 %v3021, %v2887
  %v3086 = vadd.f32 %v3022, %v2890
  %v3087 = vadd.f32 %v3023, %v2892
  %v3088 = vadd.f32 %v3024, %v2895
  %v3089 = vadd.f32 %v3025, %v2897
  %v3090 = vadd.f32 %v3026, %v2900
  %v3091 = vadd.f32 %v3027, %v2902
  %v3092 = vadd.f32 %v3028, %v2905
  %v3093 = vadd.f32 %v3029, %v2907
  %v3094 = vadd.f32 %v3030, %v2910
  %v3095 = vadd.f32 %v3031, %v2912
  %v3096 = vadd.f32 %v3032, %v2915
  %v3097 = vadd.f32 %v3033, %v2917
  %v3098 = vadd.f32 %v3034, %v2920
  %v3099 = vadd.f32 %v3035, %v2922
  %v3100 = vadd.f32 %v3036, %v2925
  %v3101 = vadd.f32 %v3037, %v2927
  %v3102 = vadd.f32 %v3038, %v2930
  %v3103 = vadd.f32 %v3039, %v2932
  %v3104 = vadd.f32 %v3040, %v2935
  %v3105 = vadd.f32 %v3041, %v2937
  %v3106 = vadd.f32 %v3042, %v2940
  %v3107 = vadd.f32 %v3043, %v2942
  %v3108 = vadd.f32 %v3044, %v2945
  %v3109 = vadd.f32 %v3045, %v2947
  %v3110 = vadd.f32 %v3046, %v2950
  %v3111 = vadd.f32 %v3047, %v2952
  %v3112 = vadd.f32 %v3048, %v2955
  %v3113 = vadd.f32 %v3049, %v2957
  %v3114 = vadd.f32 %v3050, %v2960
  %v3115 = vadd.f32 %v3051, %v2962
  %v3116 = vadd.f32 %v3052, %v2965
  %v3117 = vadd.f32 %v3053, %v2967
  %v3118 = vadd.f32 %v3054, %v2970
  %v3119 = vadd.f32 %v3055, %v2972
  %v3120 = vadd.f32 %v3056, %v2975
  %v3121 = vadd.f32 %v3057, %v2977
  %v3122 = vadd.f32 %v3058, %v2980
  %v3123 = vadd.f32 %v3059, %v2982
  %v3124 = vadd.f32 %v3060, %v2985
  %v3125 = vadd.f32 %v3061, %v2987
  %v3126 = vadd.f32 %v3062, %v2990
  %v3127 = vadd.f32 %v3063, %v2992
  %v3128 = vadd.f32 %v3064, %v2995
  %v3129 = vadd.f32 %v3065, %v2997
  %v3130 = vadd.f32 %v3066, %v3000
  %v3131 = vadd.f32 %v3067, %v3002
  %3132 = vst [vmem:[#allocation2] sm:$0xff] %v3068
  %3133 = vst [vmem:[#allocation2 + $0x8] sm:$0xff] %v3069
  %3134 = vst [vmem:[#allocation2 + $0x10] sm:$0xff] %v3070
  %3135 = vst [vmem:[#allocation2 + $0x18] sm:$0xff] %v3071
  %3136 = vst [vmem:[#allocation2 + $0x20] sm:$0xff] %v3072
  %3137 = vst [vmem:[#allocation2 + $0x28] sm:$0xff] %v3073
  %3138 = vst [vmem:[#allocation2 + $0x30] sm:$0xff] %v3074
  %3139 = vst [vmem:[#allocation2 + $0x38] sm:$0xff] %v3075
  %3140 = vst [vmem:[#allocation2 + $0x40] sm:$0xff] %v3076
  %3141 = vst [vmem:[#allocation2 + $0x48] sm:$0xff] %v3077
  %3142 = vst [vmem:[#allocation2 + $0x50] sm:$0xff] %v3078
  %3143 = vst [vmem:[#allocation2 + $0x58] sm:$0xff] %v3079
  %3144 = vst [vmem:[#allocation2 + $0x60] sm:$0xff] %v3080
  %3145 = vst [vmem:[#allocation2 + $0x68] sm:$0xff] %v3081
  %3146 = vst [vmem:[#allocation2 + $0x70] sm:$0xff] %v3082
  %3147 = vst [vmem:[#allocation2 + $0x78] sm:$0xff] %v3083
  %3148 = vst [vmem:[#allocation2 + $0x80] sm:$0xff] %v3084
  %3149 = vst [vmem:[#allocation2 + $0x88] sm:$0xff] %v3085
  %3150 = vst [vmem:[#allocation2 + $0x90] sm:$0xff] %v3086
  %3151 = vst [vmem:[#allocation2 + $0x98] sm:$0xff] %v3087
  %3152 = vst [vmem:[#allocation2 + $0xa0] sm:$0xff] %v3088
  %3153 = vst [vmem:[#allocation2 + $0xa8] sm:$0xff] %v3089
  %3154 = vst [vmem:[#allocation2 + $0xb0] sm:$0xff] %v3090
  %3155 = vst [vmem:[#allocation2 + $0xb8] sm:$0xff] %v3091
  %3156 = vst [vmem:[#allocation2 + $0xc0] sm:$0xff] %v3092
  %3157 = vst [vmem:[#allocation2 + $0xc8] sm:$0xff] %v3093
  %3158 = vst [vmem:[#allocation2 + $0xd0] sm:$0xff] %v3094
  %3159 = vst [vmem:[#allocation2 + $0xd8] sm:$0xff] %v3095
  %3160 = vst [vmem:[#allocation2 + $0xe0] sm:$0xff] %v3096
  %3161 = vst [vmem:[#allocation2 + $0xe8] sm:$0xff] %v3097
  %3162 = vst [vmem:[#allocation2 + $0xf0] sm:$0xff] %v3098
  %3163 = vst [vmem:[#allocation2 + $0xf8] sm:$0xff] %v3099
  %3164 = vst [vmem:[#allocation2 + $0x100] sm:$0xff] %v3100
  %3165 = vst [vmem:[#allocation2 + $0x108] sm:$0xff] %v3101
  %3166 = vst [vmem:[#allocation2 + $0x110] sm:$0xff] %v3102
  %3167 = vst [vmem:[#allocation2 + $0x118] sm:$0xff] %v3103
  %3168 = vst [vmem:[#allocation2 + $0x120] sm:$0xff] %v3104
  %3169 = vst [vmem:[#allocation2 + $0x128] sm:$0xff] %v3105
  %3170 = vst [vmem:[#allocation2 + $0x130] sm:$0xff] %v3106
  %3171 = vst [vmem:[#allocation2 + $0x138] sm:$0xff] %v3107
  %3172 = vst [vmem:[#allocation2 + $0x140] sm:$0xff] %v3108
  %3173 = vst [vmem:[#allocation2 + $0x148] sm:$0xff] %v3109
  %3174 = vst [vmem:[#allocation2 + $0x150] sm:$0xff] %v3110
  %3175 = vst [vmem:[#allocation2 + $0x158] sm:$0xff] %v3111
  %3176 = vst [vmem:[#allocation2 + $0x160] sm:$0xff] %v3112
  %3177 = vst [vmem:[#allocation2 + $0x168] sm:$0xff] %v3113
  %3178 = vst [vmem:[#allocation2 + $0x170] sm:$0xff] %v3114
  %3179 = vst [vmem:[#allocation2 + $0x178] sm:$0xff] %v3115
  %3180 = vst [vmem:[#allocation2 + $0x180] sm:$0xff] %v3116
  %3181 = vst [vmem:[#allocation2 + $0x188] sm:$0xff] %v3117
  %3182 = vst [vmem:[#allocation2 + $0x190] sm:$0xff] %v3118
  %3183 = vst [vmem:[#allocation2 + $0x198] sm:$0xff] %v3119
  %3184 = vst [vmem:[#allocation2 + $0x1a0] sm:$0xff] %v3120
  %3185 = vst [vmem:[#allocation2 + $0x1a8] sm:$0xff] %v3121
  %3186 = vst [vmem:[#allocation2 + $0x1b0] sm:$0xff] %v3122
  %3187 = vst [vmem:[#allocation2 + $0x1b8] sm:$0xff] %v3123
  %3188 = vst [vmem:[#allocation2 + $0x1c0] sm:$0xff] %v3124
  %3189 = vst [vmem:[#allocation2 + $0x1c8] sm:$0xff] %v3125
  %3190 = vst [vmem:[#allocation2 + $0x1d0] sm:$0xff] %v3126
  %3191 = vst [vmem:[#allocation2 + $0x1d8] sm:$0xff] %v3127
  %3192 = vst [vmem:[#allocation2 + $0x1e0] sm:$0xff] %v3128
  %3193 = vst [vmem:[#allocation2 + $0x1e8] sm:$0xff] %v3129
  %3194 = vst [vmem:[#allocation2 + $0x1f0] sm:$0xff] %v3130
  %3195 = vst [vmem:[#allocation2 + $0x1f8] sm:$0xff] %v3131
  %v3197 = vshrl.u32 %v69, 16
  %v3199 = vrot.slane %v3197, 4
  %v3200 = vshll.u32 %v69, 16
  %v3202 = vrot.slane %v3200, 5
  %v3203 = vor.u32 %v3199, %v3202
  %v3204 = vrot.slane %v3203, 4
  %v3206 = vshll.u32 %v70, 16
  %v3208 = vrot.slane %v3206, 5
  %v3209 = vsel %vm637, %v3204, %v3208
  %v3210 = vshrl.u32 %v70, 16
  %v3212 = vrot.slane %v3210, 4
  %v3213 = vor.u32 %v3212, %v3208
  %v3214 = vrot.slane %v3213, 4
  %v3216 = vshll.u32 %v71, 16
  %v3218 = vrot.slane %v3216, 5
  %v3219 = vsel %vm637, %v3214, %v3218
  %v3221 = vshrl.u32 %v123, 16
  %v3223 = vrot.slane %v3221, 4
  %v3224 = vshll.u32 %v123, 16
  %v3226 = vrot.slane %v3224, 5
  %v3227 = vor.u32 %v3223, %v3226
  %v3228 = vrot.slane %v3227, 4
  %v3230 = vshll.u32 %v124, 16
  %v3232 = vrot.slane %v3230, 5
  %v3233 = vsel %vm637, %v3228, %v3232
  %v3234 = vshrl.u32 %v124, 16
  %v3236 = vrot.slane %v3234, 4
  %v3237 = vor.u32 %v3236, %v3232
  %v3238 = vrot.slane %v3237, 4
  %v3240 = vshll.u32 %v125, 16
  %v3242 = vrot.slane %v3240, 5
  %v3243 = vsel %vm637, %v3238, %v3242
  %v3244 = vld [vmem:[%s1 + $0x40] sm:$0xf]
  %v3245 = vld [vmem:[%s1 + $0x44] sm:$0xf]
  %v3246 = vld [vmem:[%s1 + $0x48] sm:$0xf]
  %v3247 = vld [vmem:[%s1 + $0x4c] sm:$0xf]
  %v3248 = vunpack.c.l.b16 %v3209
  %v3249 = vunpack.c.l.b16 %v3219
  %v3250 = vunpack.c.l.b16 %v3233
  %v3251 = vunpack.c.l.b16 %v3243
  %v3252 = vpack.c.b16 %v3249, %v3248
  %v3253 = vpack.c.b16 %v3251, %v3250
  %v3258 = vunpack.c.l.b16 %v3244
  %v3259 = vunpack.c.l.b16 %v3245
  %v3260 = vunpack.c.l.b16 %v3246
  %v3261 = vunpack.c.l.b16 %v3247
  %v3262 = vpack.c.b16 %v3259, %v3258
  %v3263 = vpack.c.b16 %v3261, %v3260
  %v3267 = vsel %vm305, %v3252, 0
  %v3270 = vsel %vm305, %v3253, 0
  %3272 = vmatpush.bf16.msra.mxu0 0
  %3273 = vmatpush.bf16.msra.mxu0 0
  %3274 = vmatpush.bf16.msra.mxu0 0
  %3275 = vmatpush.bf16.msra.mxu0 0
  %3276 = vmatpush.bf16.msra.mxu0 0
  %3277 = vmatpush.bf16.msra.mxu0 0
  %3278 = vmatpush.bf16.msra.mxu0 %v3263
  %3279 = vmatpush.bf16.msra.mxu0 %v3262
  %3280 = vmatmul.bf16.gmra.mxu0 %v1522
  %v3281 = vpop.f32.mrf.mxu0
  %v3282 = vadd.f32 0.0, %v3281
  %v3283 = vpop.f32.mrf.mxu0
  %v3284 = vadd.f32 0.0, %v3283
  %3285 = vmatmul.bf16.gmra.mxu0 %v1525
  %v3286 = vpop.f32.mrf.mxu0
  %v3287 = vadd.f32 0.0, %v3286
  %v3288 = vpop.f32.mrf.mxu0
  %v3289 = vadd.f32 0.0, %v3288
  %3290 = vmatmul.bf16.gmra.mxu0 %v1528
  %v3291 = vpop.f32.mrf.mxu0
  %v3292 = vadd.f32 0.0, %v3291
  %v3293 = vpop.f32.mrf.mxu0
  %v3294 = vadd.f32 0.0, %v3293
  %3295 = vmatmul.bf16.gmra.mxu0 %v1531
  %v3296 = vpop.f32.mrf.mxu0
  %v3297 = vadd.f32 0.0, %v3296
  %v3298 = vpop.f32.mrf.mxu0
  %v3299 = vadd.f32 0.0, %v3298
  %3300 = vmatmul.bf16.gmra.mxu0 %v1534
  %v3301 = vpop.f32.mrf.mxu0
  %v3302 = vadd.f32 0.0, %v3301
  %v3303 = vpop.f32.mrf.mxu0
  %v3304 = vadd.f32 0.0, %v3303
  %3305 = vmatmul.bf16.gmra.mxu0 %v1537
  %v3306 = vpop.f32.mrf.mxu0
  %v3307 = vadd.f32 0.0, %v3306
  %v3308 = vpop.f32.mrf.mxu0
  %v3309 = vadd.f32 0.0, %v3308
  %3310 = vmatmul.bf16.gmra.mxu0 %v1540
  %v3311 = vpop.f32.mrf.mxu0
  %v3312 = vadd.f32 0.0, %v3311
  %v3313 = vpop.f32.mrf.mxu0
  %v3314 = vadd.f32 0.0, %v3313
  %3315 = vmatmul.bf16.gmra.mxu0 %v1543
  %v3316 = vpop.f32.mrf.mxu0
  %v3317 = vadd.f32 0.0, %v3316
  %v3318 = vpop.f32.mrf.mxu0
  %v3319 = vadd.f32 0.0, %v3318
  %3320 = vmatmul.bf16.gmra.mxu0 %v1546
  %v3321 = vpop.f32.mrf.mxu0
  %v3322 = vadd.f32 0.0, %v3321
  %v3323 = vpop.f32.mrf.mxu0
  %v3324 = vadd.f32 0.0, %v3323
  %3325 = vmatmul.bf16.gmra.mxu0 %v1549
  %v3326 = vpop.f32.mrf.mxu0
  %v3327 = vadd.f32 0.0, %v3326
  %v3328 = vpop.f32.mrf.mxu0
  %v3329 = vadd.f32 0.0, %v3328
  %3330 = vmatmul.bf16.gmra.mxu0 %v1552
  %v3331 = vpop.f32.mrf.mxu0
  %v3332 = vadd.f32 0.0, %v3331
  %v3333 = vpop.f32.mrf.mxu0
  %v3334 = vadd.f32 0.0, %v3333
  %3335 = vmatmul.bf16.gmra.mxu0 %v1555
  %v3336 = vpop.f32.mrf.mxu0
  %v3337 = vadd.f32 0.0, %v3336
  %v3338 = vpop.f32.mrf.mxu0
  %v3339 = vadd.f32 0.0, %v3338
  %3340 = vmatmul.bf16.gmra.mxu0 %v1558
  %v3341 = vpop.f32.mrf.mxu0
  %v3342 = vadd.f32 0.0, %v3341
  %v3343 = vpop.f32.mrf.mxu0
  %v3344 = vadd.f32 0.0, %v3343
  %3345 = vmatmul.bf16.gmra.mxu0 %v1561
  %v3346 = vpop.f32.mrf.mxu0
  %v3347 = vadd.f32 0.0, %v3346
  %v3348 = vpop.f32.mrf.mxu0
  %v3349 = vadd.f32 0.0, %v3348
  %3350 = vmatmul.bf16.gmra.mxu0 %v1564
  %v3351 = vpop.f32.mrf.mxu0
  %v3352 = vadd.f32 0.0, %v3351
  %v3353 = vpop.f32.mrf.mxu0
  %v3354 = vadd.f32 0.0, %v3353
  %3355 = vmatmul.bf16.gmra.mxu0 %v3267
  %v3356 = vpop.f32.mrf.mxu0
  %v3357 = vadd.f32 0.0, %v3356
  %v3358 = vpop.f32.mrf.mxu0
  %v3359 = vadd.f32 0.0, %v3358
  %3360 = vmatmul.bf16.gmra.mxu0 %v1570
  %v3361 = vpop.f32.mrf.mxu0
  %v3362 = vadd.f32 0.0, %v3361
  %v3363 = vpop.f32.mrf.mxu0
  %v3364 = vadd.f32 0.0, %v3363
  %3365 = vmatmul.bf16.gmra.mxu0 %v1573
  %v3366 = vpop.f32.mrf.mxu0
  %v3367 = vadd.f32 0.0, %v3366
  %v3368 = vpop.f32.mrf.mxu0
  %v3369 = vadd.f32 0.0, %v3368
  %3370 = vmatmul.bf16.gmra.mxu0 %v1576
  %v3371 = vpop.f32.mrf.mxu0
  %v3372 = vadd.f32 0.0, %v3371
  %v3373 = vpop.f32.mrf.mxu0
  %v3374 = vadd.f32 0.0, %v3373
  %3375 = vmatmul.bf16.gmra.mxu0 %v1579
  %v3376 = vpop.f32.mrf.mxu0
  %v3377 = vadd.f32 0.0, %v3376
  %v3378 = vpop.f32.mrf.mxu0
  %v3379 = vadd.f32 0.0, %v3378
  %3380 = vmatmul.bf16.gmra.mxu0 %v1582
  %v3381 = vpop.f32.mrf.mxu0
  %v3382 = vadd.f32 0.0, %v3381
  %v3383 = vpop.f32.mrf.mxu0
  %v3384 = vadd.f32 0.0, %v3383
  %3385 = vmatmul.bf16.gmra.mxu0 %v1585
  %v3386 = vpop.f32.mrf.mxu0
  %v3387 = vadd.f32 0.0, %v3386
  %v3388 = vpop.f32.mrf.mxu0
  %v3389 = vadd.f32 0.0, %v3388
  %3390 = vmatmul.bf16.gmra.mxu0 %v1588
  %v3391 = vpop.f32.mrf.mxu0
  %v3392 = vadd.f32 0.0, %v3391
  %v3393 = vpop.f32.mrf.mxu0
  %v3394 = vadd.f32 0.0, %v3393
  %3395 = vmatmul.bf16.gmra.mxu0 %v1591
  %v3396 = vpop.f32.mrf.mxu0
  %v3397 = vadd.f32 0.0, %v3396
  %v3398 = vpop.f32.mrf.mxu0
  %v3399 = vadd.f32 0.0, %v3398
  %3400 = vmatmul.bf16.gmra.mxu0 %v1594
  %v3401 = vpop.f32.mrf.mxu0
  %v3402 = vadd.f32 0.0, %v3401
  %v3403 = vpop.f32.mrf.mxu0
  %v3404 = vadd.f32 0.0, %v3403
  %3405 = vmatmul.bf16.gmra.mxu0 %v1597
  %v3406 = vpop.f32.mrf.mxu0
  %v3407 = vadd.f32 0.0, %v3406
  %v3408 = vpop.f32.mrf.mxu0
  %v3409 = vadd.f32 0.0, %v3408
  %3410 = vmatmul.bf16.gmra.mxu0 %v1600
  %v3411 = vpop.f32.mrf.mxu0
  %v3412 = vadd.f32 0.0, %v3411
  %v3413 = vpop.f32.mrf.mxu0
  %v3414 = vadd.f32 0.0, %v3413
  %3415 = vmatmul.bf16.gmra.mxu0 %v1603
  %v3416 = vpop.f32.mrf.mxu0
  %v3417 = vadd.f32 0.0, %v3416
  %v3418 = vpop.f32.mrf.mxu0
  %v3419 = vadd.f32 0.0, %v3418
  %3420 = vmatmul.bf16.gmra.mxu0 %v1606
  %v3421 = vpop.f32.mrf.mxu0
  %v3422 = vadd.f32 0.0, %v3421
  %v3423 = vpop.f32.mrf.mxu0
  %v3424 = vadd.f32 0.0, %v3423
  %3425 = vmatmul.bf16.gmra.mxu0 %v1609
  %v3426 = vpop.f32.mrf.mxu0
  %v3427 = vadd.f32 0.0, %v3426
  %v3428 = vpop.f32.mrf.mxu0
  %v3429 = vadd.f32 0.0, %v3428
  %3430 = vmatmul.bf16.gmra.mxu0 %v1612
  %v3431 = vpop.f32.mrf.mxu0
  %v3432 = vadd.f32 0.0, %v3431
  %v3433 = vpop.f32.mrf.mxu0
  %v3434 = vadd.f32 0.0, %v3433
  %3435 = vmatmul.bf16.gmra.mxu0 %v3270
  %v3436 = vpop.f32.mrf.mxu0
  %v3437 = vadd.f32 0.0, %v3436
  %v3438 = vpop.f32.mrf.mxu0
  %v3439 = vadd.f32 0.0, %v3438
  %3440 = vdwg.mxu0
  %v3441 = vld [vmem:[#allocation2] sm:$0xff]
  %v3442 = vld [vmem:[#allocation2 + $0x8] sm:$0xff]
  %v3443 = vld [vmem:[#allocation2 + $0x10] sm:$0xff]
  %v3444 = vld [vmem:[#allocation2 + $0x18] sm:$0xff]
  %v3445 = vld [vmem:[#allocation2 + $0x20] sm:$0xff]
  %v3446 = vld [vmem:[#allocation2 + $0x28] sm:$0xff]
  %v3447 = vld [vmem:[#allocation2 + $0x30] sm:$0xff]
  %v3448 = vld [vmem:[#allocation2 + $0x38] sm:$0xff]
  %v3449 = vld [vmem:[#allocation2 + $0x40] sm:$0xff]
  %v3450 = vld [vmem:[#allocation2 + $0x48] sm:$0xff]
  %v3451 = vld [vmem:[#allocation2 + $0x50] sm:$0xff]
  %v3452 = vld [vmem:[#allocation2 + $0x58] sm:$0xff]
  %v3453 = vld [vmem:[#allocation2 + $0x60] sm:$0xff]
  %v3454 = vld [vmem:[#allocation2 + $0x68] sm:$0xff]
  %v3455 = vld [vmem:[#allocation2 + $0x70] sm:$0xff]
  %v3456 = vld [vmem:[#allocation2 + $0x78] sm:$0xff]
  %v3457 = vld [vmem:[#allocation2 + $0x80] sm:$0xff]
  %v3458 = vld [vmem:[#allocation2 + $0x88] sm:$0xff]
  %v3459 = vld [vmem:[#allocation2 + $0x90] sm:$0xff]
  %v3460 = vld [vmem:[#allocation2 + $0x98] sm:$0xff]
  %v3461 = vld [vmem:[#allocation2 + $0xa0] sm:$0xff]
  %v3462 = vld [vmem:[#allocation2 + $0xa8] sm:$0xff]
  %v3463 = vld [vmem:[#allocation2 + $0xb0] sm:$0xff]
  %v3464 = vld [vmem:[#allocation2 + $0xb8] sm:$0xff]
  %v3465 = vld [vmem:[#allocation2 + $0xc0] sm:$0xff]
  %v3466 = vld [vmem:[#allocation2 + $0xc8] sm:$0xff]
  %v3467 = vld [vmem:[#allocation2 + $0xd0] sm:$0xff]
  %v3468 = vld [vmem:[#allocation2 + $0xd8] sm:$0xff]
  %v3469 = vld [vmem:[#allocation2 + $0xe0] sm:$0xff]
  %v3470 = vld [vmem:[#allocation2 + $0xe8] sm:$0xff]
  %v3471 = vld [vmem:[#allocation2 + $0xf0] sm:$0xff]
  %v3472 = vld [vmem:[#allocation2 + $0xf8] sm:$0xff]
  %v3473 = vld [vmem:[#allocation2 + $0x100] sm:$0xff]
  %v3474 = vld [vmem:[#allocation2 + $0x108] sm:$0xff]
  %v3475 = vld [vmem:[#allocation2 + $0x110] sm:$0xff]
  %v3476 = vld [vmem:[#allocation2 + $0x118] sm:$0xff]
  %v3477 = vld [vmem:[#allocation2 + $0x120] sm:$0xff]
  %v3478 = vld [vmem:[#allocation2 + $0x128] sm:$0xff]
  %v3479 = vld [vmem:[#allocation2 + $0x130] sm:$0xff]
  %v3480 = vld [vmem:[#allocation2 + $0x138] sm:$0xff]
  %v3481 = vld [vmem:[#allocation2 + $0x140] sm:$0xff]
  %v3482 = vld [vmem:[#allocation2 + $0x148] sm:$0xff]
  %v3483 = vld [vmem:[#allocation2 + $0x150] sm:$0xff]
  %v3484 = vld [vmem:[#allocation2 + $0x158] sm:$0xff]
  %v3485 = vld [vmem:[#allocation2 + $0x160] sm:$0xff]
  %v3486 = vld [vmem:[#allocation2 + $0x168] sm:$0xff]
  %v3487 = vld [vmem:[#allocation2 + $0x170] sm:$0xff]
  %v3488 = vld [vmem:[#allocation2 + $0x178] sm:$0xff]
  %v3489 = vld [vmem:[#allocation2 + $0x180] sm:$0xff]
  %v3490 = vld [vmem:[#allocation2 + $0x188] sm:$0xff]
  %v3491 = vld [vmem:[#allocation2 + $0x190] sm:$0xff]
  %v3492 = vld [vmem:[#allocation2 + $0x198] sm:$0xff]
  %v3493 = vld [vmem:[#allocation2 + $0x1a0] sm:$0xff]
  %v3494 = vld [vmem:[#allocation2 + $0x1a8] sm:$0xff]
  %v3495 = vld [vmem:[#allocation2 + $0x1b0] sm:$0xff]
  %v3496 = vld [vmem:[#allocation2 + $0x1b8] sm:$0xff]
  %v3497 = vld [vmem:[#allocation2 + $0x1c0] sm:$0xff]
  %v3498 = vld [vmem:[#allocation2 + $0x1c8] sm:$0xff]
  %v3499 = vld [vmem:[#allocation2 + $0x1d0] sm:$0xff]
  %v3500 = vld [vmem:[#allocation2 + $0x1d8] sm:$0xff]
  %v3501 = vld [vmem:[#allocation2 + $0x1e0] sm:$0xff]
  %v3502 = vld [vmem:[#allocation2 + $0x1e8] sm:$0xff]
  %v3503 = vld [vmem:[#allocation2 + $0x1f0] sm:$0xff]
  %v3504 = vld [vmem:[#allocation2 + $0x1f8] sm:$0xff]
  %v3505 = vadd.f32 %v3441, %v3282
  %v3506 = vadd.f32 %v3442, %v3284
  %v3507 = vadd.f32 %v3443, %v3287
  %v3508 = vadd.f32 %v3444, %v3289
  %v3509 = vadd.f32 %v3445, %v3292
  %v3510 = vadd.f32 %v3446, %v3294
  %v3511 = vadd.f32 %v3447, %v3297
  %v3512 = vadd.f32 %v3448, %v3299
  %v3513 = vadd.f32 %v3449, %v3302
  %v3514 = vadd.f32 %v3450, %v3304
  %v3515 = vadd.f32 %v3451, %v3307
  %v3516 = vadd.f32 %v3452, %v3309
  %v3517 = vadd.f32 %v3453, %v3312
  %v3518 = vadd.f32 %v3454, %v3314
  %v3519 = vadd.f32 %v3455, %v3317
  %v3520 = vadd.f32 %v3456, %v3319
  %v3521 = vadd.f32 %v3457, %v3322
  %v3522 = vadd.f32 %v3458, %v3324
  %v3523 = vadd.f32 %v3459, %v3327
  %v3524 = vadd.f32 %v3460, %v3329
  %v3525 = vadd.f32 %v3461, %v3332
  %v3526 = vadd.f32 %v3462, %v3334
  %v3527 = vadd.f32 %v3463, %v3337
  %v3528 = vadd.f32 %v3464, %v3339
  %v3529 = vadd.f32 %v3465, %v3342
  %v3530 = vadd.f32 %v3466, %v3344
  %v3531 = vadd.f32 %v3467, %v3347
  %v3532 = vadd.f32 %v3468, %v3349
  %v3533 = vadd.f32 %v3469, %v3352
  %v3534 = vadd.f32 %v3470, %v3354
  %v3535 = vadd.f32 %v3471, %v3357
  %v3536 = vadd.f32 %v3472, %v3359
  %v3537 = vadd.f32 %v3473, %v3362
  %v3538 = vadd.f32 %v3474, %v3364
  %v3539 = vadd.f32 %v3475, %v3367
  %v3540 = vadd.f32 %v3476, %v3369
  %v3541 = vadd.f32 %v3477, %v3372
  %v3542 = vadd.f32 %v3478, %v3374
  %v3543 = vadd.f32 %v3479, %v3377
  %v3544 = vadd.f32 %v3480, %v3379
  %v3545 = vadd.f32 %v3481, %v3382
  %v3546 = vadd.f32 %v3482, %v3384
  %v3547 = vadd.f32 %v3483, %v3387
  %v3548 = vadd.f32 %v3484, %v3389
  %v3549 = vadd.f32 %v3485, %v3392
  %v3550 = vadd.f32 %v3486, %v3394
  %v3551 = vadd.f32 %v3487, %v3397
  %v3552 = vadd.f32 %v3488, %v3399
  %v3553 = vadd.f32 %v3489, %v3402
  %v3554 = vadd.f32 %v3490, %v3404
  %v3555 = vadd.f32 %v3491, %v3407
  %v3556 = vadd.f32 %v3492, %v3409
  %v3557 = vadd.f32 %v3493, %v3412
  %v3558 = vadd.f32 %v3494, %v3414
  %v3559 = vadd.f32 %v3495, %v3417
  %v3560 = vadd.f32 %v3496, %v3419
  %v3561 = vadd.f32 %v3497, %v3422
  %v3562 = vadd.f32 %v3498, %v3424
  %v3563 = vadd.f32 %v3499, %v3427
  %v3564 = vadd.f32 %v3500, %v3429
  %v3565 = vadd.f32 %v3501, %v3432
  %v3566 = vadd.f32 %v3502, %v3434
  %v3567 = vadd.f32 %v3503, %v3437
  %v3568 = vadd.f32 %v3504, %v3439
  %3569 = vst [vmem:[#allocation2] sm:$0xff] %v3505
  %3570 = vst [vmem:[#allocation2 + $0x8] sm:$0xff] %v3506
  %3571 = vst [vmem:[#allocation2 + $0x10] sm:$0xff] %v3507
  %3572 = vst [vmem:[#allocation2 + $0x18] sm:$0xff] %v3508
  %3573 = vst [vmem:[#allocation2 + $0x20] sm:$0xff] %v3509
  %3574 = vst [vmem:[#allocation2 + $0x28] sm:$0xff] %v3510
  %3575 = vst [vmem:[#allocation2 + $0x30] sm:$0xff] %v3511
  %3576 = vst [vmem:[#allocation2 + $0x38] sm:$0xff] %v3512
  %3577 = vst [vmem:[#allocation2 + $0x40] sm:$0xff] %v3513
  %3578 = vst [vmem:[#allocation2 + $0x48] sm:$0xff] %v3514
  %3579 = vst [vmem:[#allocation2 + $0x50] sm:$0xff] %v3515
  %3580 = vst [vmem:[#allocation2 + $0x58] sm:$0xff] %v3516
  %3581 = vst [vmem:[#allocation2 + $0x60] sm:$0xff] %v3517
  %3582 = vst [vmem:[#allocation2 + $0x68] sm:$0xff] %v3518
  %3583 = vst [vmem:[#allocation2 + $0x70] sm:$0xff] %v3519
  %3584 = vst [vmem:[#allocation2 + $0x78] sm:$0xff] %v3520
  %3585 = vst [vmem:[#allocation2 + $0x80] sm:$0xff] %v3521
  %3586 = vst [vmem:[#allocation2 + $0x88] sm:$0xff] %v3522
  %3587 = vst [vmem:[#allocation2 + $0x90] sm:$0xff] %v3523
  %3588 = vst [vmem:[#allocation2 + $0x98] sm:$0xff] %v3524
  %3589 = vst [vmem:[#allocation2 + $0xa0] sm:$0xff] %v3525
  %3590 = vst [vmem:[#allocation2 + $0xa8] sm:$0xff] %v3526
  %3591 = vst [vmem:[#allocation2 + $0xb0] sm:$0xff] %v3527
  %3592 = vst [vmem:[#allocation2 + $0xb8] sm:$0xff] %v3528
  %3593 = vst [vmem:[#allocation2 + $0xc0] sm:$0xff] %v3529
  %3594 = vst [vmem:[#allocation2 + $0xc8] sm:$0xff] %v3530
  %3595 = vst [vmem:[#allocation2 + $0xd0] sm:$0xff] %v3531
  %3596 = vst [vmem:[#allocation2 + $0xd8] sm:$0xff] %v3532
  %3597 = vst [vmem:[#allocation2 + $0xe0] sm:$0xff] %v3533
  %3598 = vst [vmem:[#allocation2 + $0xe8] sm:$0xff] %v3534
  %3599 = vst [vmem:[#allocation2 + $0xf0] sm:$0xff] %v3535
  %3600 = vst [vmem:[#allocation2 + $0xf8] sm:$0xff] %v3536
  %3601 = vst [vmem:[#allocation2 + $0x100] sm:$0xff] %v3537
  %3602 = vst [vmem:[#allocation2 + $0x108] sm:$0xff] %v3538
  %3603 = vst [vmem:[#allocation2 + $0x110] sm:$0xff] %v3539
  %3604 = vst [vmem:[#allocation2 + $0x118] sm:$0xff] %v3540
  %3605 = vst [vmem:[#allocation2 + $0x120] sm:$0xff] %v3541
  %3606 = vst [vmem:[#allocation2 + $0x128] sm:$0xff] %v3542
  %3607 = vst [vmem:[#allocation2 + $0x130] sm:$0xff] %v3543
  %3608 = vst [vmem:[#allocation2 + $0x138] sm:$0xff] %v3544
  %3609 = vst [vmem:[#allocation2 + $0x140] sm:$0xff] %v3545
  %3610 = vst [vmem:[#allocation2 + $0x148] sm:$0xff] %v3546
  %3611 = vst [vmem:[#allocation2 + $0x150] sm:$0xff] %v3547
  %3612 = vst [vmem:[#allocation2 + $0x158] sm:$0xff] %v3548
  %3613 = vst [vmem:[#allocation2 + $0x160] sm:$0xff] %v3549
  %3614 = vst [vmem:[#allocation2 + $0x168] sm:$0xff] %v3550
  %3615 = vst [vmem:[#allocation2 + $0x170] sm:$0xff] %v3551
  %3616 = vst [vmem:[#allocation2 + $0x178] sm:$0xff] %v3552
  %3617 = vst [vmem:[#allocation2 + $0x180] sm:$0xff] %v3553
  %3618 = vst [vmem:[#allocation2 + $0x188] sm:$0xff] %v3554
  %3619 = vst [vmem:[#allocation2 + $0x190] sm:$0xff] %v3555
  %3620 = vst [vmem:[#allocation2 + $0x198] sm:$0xff] %v3556
  %3621 = vst [vmem:[#allocation2 + $0x1a0] sm:$0xff] %v3557
  %3622 = vst [vmem:[#allocation2 + $0x1a8] sm:$0xff] %v3558
  %3623 = vst [vmem:[#allocation2 + $0x1b0] sm:$0xff] %v3559
  %3624 = vst [vmem:[#allocation2 + $0x1b8] sm:$0xff] %v3560
  %3625 = vst [vmem:[#allocation2 + $0x1c0] sm:$0xff] %v3561
  %3626 = vst [vmem:[#allocation2 + $0x1c8] sm:$0xff] %v3562
  %3627 = vst [vmem:[#allocation2 + $0x1d0] sm:$0xff] %v3563
  %3628 = vst [vmem:[#allocation2 + $0x1d8] sm:$0xff] %v3564
  %3629 = vst [vmem:[#allocation2 + $0x1e0] sm:$0xff] %v3565
  %3630 = vst [vmem:[#allocation2 + $0x1e8] sm:$0xff] %v3566
  %3631 = vst [vmem:[#allocation2 + $0x1f0] sm:$0xff] %v3567
  %3632 = vst [vmem:[#allocation2 + $0x1f8] sm:$0xff] %v3568
  %v3635 = vrot.slane %v69, 5
  %v3636 = vrot.slane %v3635, 4
  %v3637 = vrot.slane %v70, 5
  %v3638 = vsel %vm2009, %v3636, %v3637
  %v3639 = vrot.slane %v3637, 4
  %v3640 = vrot.slane %v71, 5
  %v3641 = vsel %vm2009, %v3639, %v3640
  %v3642 = vrot.slane %v123, 5
  %v3643 = vrot.slane %v3642, 4
  %v3644 = vrot.slane %v124, 5
  %v3645 = vsel %vm2009, %v3643, %v3644
  %v3646 = vrot.slane %v3644, 4
  %v3647 = vrot.slane %v125, 5
  %v3648 = vsel %vm2009, %v3646, %v3647
  %v3649 = vld [vmem:[%s1 + $0x50] sm:$0xf]
  %v3650 = vld [vmem:[%s1 + $0x54] sm:$0xf]
  %v3651 = vld [vmem:[%s1 + $0x58] sm:$0xf]
  %v3652 = vld [vmem:[%s1 + $0x5c] sm:$0xf]
  %v3653 = vunpack.c.l.b16 %v3638
  %v3654 = vunpack.c.l.b16 %v3641
  %v3655 = vunpack.c.l.b16 %v3645
  %v3656 = vunpack.c.l.b16 %v3648
  %v3657 = vpack.c.b16 %v3654, %v3653
  %v3658 = vpack.c.b16 %v3656, %v3655
  %v3663 = vunpack.c.l.b16 %v3649
  %v3664 = vunpack.c.l.b16 %v3650
  %v3665 = vunpack.c.l.b16 %v3651
  %v3666 = vunpack.c.l.b16 %v3652
  %v3667 = vpack.c.b16 %v3664, %v3663
  %v3668 = vpack.c.b16 %v3666, %v3665
  %v3672 = vsel %vm305, %v3657, 0
  %v3675 = vsel %vm305, %v3658, 0
  %3677 = vmatpush.bf16.msra.mxu0 0
  %3678 = vmatpush.bf16.msra.mxu0 0
  %3679 = vmatpush.bf16.msra.mxu0 0
  %3680 = vmatpush.bf16.msra.mxu0 0
  %3681 = vmatpush.bf16.msra.mxu0 0
  %3682 = vmatpush.bf16.msra.mxu0 0
  %3683 = vmatpush.bf16.msra.mxu0 %v3668
  %3684 = vmatpush.bf16.msra.mxu0 %v3667
  %3685 = vmatmul.bf16.gmra.mxu0 %v2350
  %v3686 = vpop.f32.mrf.mxu0
  %v3687 = vadd.f32 0.0, %v3686
  %v3688 = vpop.f32.mrf.mxu0
  %v3689 = vadd.f32 0.0, %v3688
  %3690 = vmatmul.bf16.gmra.mxu0 %v2353
  %v3691 = vpop.f32.mrf.mxu0
  %v3692 = vadd.f32 0.0, %v3691
  %v3693 = vpop.f32.mrf.mxu0
  %v3694 = vadd.f32 0.0, %v3693
  %3695 = vmatmul.bf16.gmra.mxu0 %v2356
  %v3696 = vpop.f32.mrf.mxu0
  %v3697 = vadd.f32 0.0, %v3696
  %v3698 = vpop.f32.mrf.mxu0
  %v3699 = vadd.f32 0.0, %v3698
  %3700 = vmatmul.bf16.gmra.mxu0 %v2359
  %v3701 = vpop.f32.mrf.mxu0
  %v3702 = vadd.f32 0.0, %v3701
  %v3703 = vpop.f32.mrf.mxu0
  %v3704 = vadd.f32 0.0, %v3703
  %3705 = vmatmul.bf16.gmra.mxu0 %v2362
  %v3706 = vpop.f32.mrf.mxu0
  %v3707 = vadd.f32 0.0, %v3706
  %v3708 = vpop.f32.mrf.mxu0
  %v3709 = vadd.f32 0.0, %v3708
  %3710 = vmatmul.bf16.gmra.mxu0 %v2365
  %v3711 = vpop.f32.mrf.mxu0
  %v3712 = vadd.f32 0.0, %v3711
  %v3713 = vpop.f32.mrf.mxu0
  %v3714 = vadd.f32 0.0, %v3713
  %3715 = vmatmul.bf16.gmra.mxu0 %v2368
  %v3716 = vpop.f32.mrf.mxu0
  %v3717 = vadd.f32 0.0, %v3716
  %v3718 = vpop.f32.mrf.mxu0
  %v3719 = vadd.f32 0.0, %v3718
  %3720 = vmatmul.bf16.gmra.mxu0 %v2371
  %v3721 = vpop.f32.mrf.mxu0
  %v3722 = vadd.f32 0.0, %v3721
  %v3723 = vpop.f32.mrf.mxu0
  %v3724 = vadd.f32 0.0, %v3723
  %3725 = vmatmul.bf16.gmra.mxu0 %v2374
  %v3726 = vpop.f32.mrf.mxu0
  %v3727 = vadd.f32 0.0, %v3726
  %v3728 = vpop.f32.mrf.mxu0
  %v3729 = vadd.f32 0.0, %v3728
  %3730 = vmatmul.bf16.gmra.mxu0 %v2377
  %v3731 = vpop.f32.mrf.mxu0
  %v3732 = vadd.f32 0.0, %v3731
  %v3733 = vpop.f32.mrf.mxu0
  %v3734 = vadd.f32 0.0, %v3733
  %3735 = vmatmul.bf16.gmra.mxu0 %v2380
  %v3736 = vpop.f32.mrf.mxu0
  %v3737 = vadd.f32 0.0, %v3736
  %v3738 = vpop.f32.mrf.mxu0
  %v3739 = vadd.f32 0.0, %v3738
  %3740 = vmatmul.bf16.gmra.mxu0 %v2383
  %v3741 = vpop.f32.mrf.mxu0
  %v3742 = vadd.f32 0.0, %v3741
  %v3743 = vpop.f32.mrf.mxu0
  %v3744 = vadd.f32 0.0, %v3743
  %3745 = vmatmul.bf16.gmra.mxu0 %v2386
  %v3746 = vpop.f32.mrf.mxu0
  %v3747 = vadd.f32 0.0, %v3746
  %v3748 = vpop.f32.mrf.mxu0
  %v3749 = vadd.f32 0.0, %v3748
  %3750 = vmatmul.bf16.gmra.mxu0 %v2389
  %v3751 = vpop.f32.mrf.mxu0
  %v3752 = vadd.f32 0.0, %v3751
  %v3753 = vpop.f32.mrf.mxu0
  %v3754 = vadd.f32 0.0, %v3753
  %3755 = vmatmul.bf16.gmra.mxu0 %v2392
  %v3756 = vpop.f32.mrf.mxu0
  %v3757 = vadd.f32 0.0, %v3756
  %v3758 = vpop.f32.mrf.mxu0
  %v3759 = vadd.f32 0.0, %v3758
  %3760 = vmatmul.bf16.gmra.mxu0 %v3672
  %v3761 = vpop.f32.mrf.mxu0
  %v3762 = vadd.f32 0.0, %v3761
  %v3763 = vpop.f32.mrf.mxu0
  %v3764 = vadd.f32 0.0, %v3763
  %3765 = vmatmul.bf16.gmra.mxu0 %v2398
  %v3766 = vpop.f32.mrf.mxu0
  %v3767 = vadd.f32 0.0, %v3766
  %v3768 = vpop.f32.mrf.mxu0
  %v3769 = vadd.f32 0.0, %v3768
  %3770 = vmatmul.bf16.gmra.mxu0 %v2401
  %v3771 = vpop.f32.mrf.mxu0
  %v3772 = vadd.f32 0.0, %v3771
  %v3773 = vpop.f32.mrf.mxu0
  %v3774 = vadd.f32 0.0, %v3773
  %3775 = vmatmul.bf16.gmra.mxu0 %v2404
  %v3776 = vpop.f32.mrf.mxu0
  %v3777 = vadd.f32 0.0, %v3776
  %v3778 = vpop.f32.mrf.mxu0
  %v3779 = vadd.f32 0.0, %v3778
  %3780 = vmatmul.bf16.gmra.mxu0 %v2407
  %v3781 = vpop.f32.mrf.mxu0
  %v3782 = vadd.f32 0.0, %v3781
  %v3783 = vpop.f32.mrf.mxu0
  %v3784 = vadd.f32 0.0, %v3783
  %3785 = vmatmul.bf16.gmra.mxu0 %v2410
  %v3786 = vpop.f32.mrf.mxu0
  %v3787 = vadd.f32 0.0, %v3786
  %v3788 = vpop.f32.mrf.mxu0
  %v3789 = vadd.f32 0.0, %v3788
  %3790 = vmatmul.bf16.gmra.mxu0 %v2413
  %v3791 = vpop.f32.mrf.mxu0
  %v3792 = vadd.f32 0.0, %v3791
  %v3793 = vpop.f32.mrf.mxu0
  %v3794 = vadd.f32 0.0, %v3793
  %3795 = vmatmul.bf16.gmra.mxu0 %v2416
  %v3796 = vpop.f32.mrf.mxu0
  %v3797 = vadd.f32 0.0, %v3796
  %v3798 = vpop.f32.mrf.mxu0
  %v3799 = vadd.f32 0.0, %v3798
  %3800 = vmatmul.bf16.gmra.mxu0 %v2419
  %v3801 = vpop.f32.mrf.mxu0
  %v3802 = vadd.f32 0.0, %v3801
  %v3803 = vpop.f32.mrf.mxu0
  %v3804 = vadd.f32 0.0, %v3803
  %3805 = vmatmul.bf16.gmra.mxu0 %v2422
  %v3806 = vpop.f32.mrf.mxu0
  %v3807 = vadd.f32 0.0, %v3806
  %v3808 = vpop.f32.mrf.mxu0
  %v3809 = vadd.f32 0.0, %v3808
  %3810 = vmatmul.bf16.gmra.mxu0 %v2425
  %v3811 = vpop.f32.mrf.mxu0
  %v3812 = vadd.f32 0.0, %v3811
  %v3813 = vpop.f32.mrf.mxu0
  %v3814 = vadd.f32 0.0, %v3813
  %3815 = vmatmul.bf16.gmra.mxu0 %v2428
  %v3816 = vpop.f32.mrf.mxu0
  %v3817 = vadd.f32 0.0, %v3816
  %v3818 = vpop.f32.mrf.mxu0
  %v3819 = vadd.f32 0.0, %v3818
  %3820 = vmatmul.bf16.gmra.mxu0 %v2431
  %v3821 = vpop.f32.mrf.mxu0
  %v3822 = vadd.f32 0.0, %v3821
  %v3823 = vpop.f32.mrf.mxu0
  %v3824 = vadd.f32 0.0, %v3823
  %3825 = vmatmul.bf16.gmra.mxu0 %v2434
  %v3826 = vpop.f32.mrf.mxu0
  %v3827 = vadd.f32 0.0, %v3826
  %v3828 = vpop.f32.mrf.mxu0
  %v3829 = vadd.f32 0.0, %v3828
  %3830 = vmatmul.bf16.gmra.mxu0 %v2437
  %v3831 = vpop.f32.mrf.mxu0
  %v3832 = vadd.f32 0.0, %v3831
  %v3833 = vpop.f32.mrf.mxu0
  %v3834 = vadd.f32 0.0, %v3833
  %3835 = vmatmul.bf16.gmra.mxu0 %v2440
  %v3836 = vpop.f32.mrf.mxu0
  %v3837 = vadd.f32 0.0, %v3836
  %v3838 = vpop.f32.mrf.mxu0
  %v3839 = vadd.f32 0.0, %v3838
  %3840 = vmatmul.bf16.gmra.mxu0 %v3675
  %v3841 = vpop.f32.mrf.mxu0
  %v3842 = vadd.f32 0.0, %v3841
  %v3843 = vpop.f32.mrf.mxu0
  %v3844 = vadd.f32 0.0, %v3843
  %3845 = vdwg.mxu0
  %v3846 = vld [vmem:[#allocation2] sm:$0xff]
  %v3847 = vld [vmem:[#allocation2 + $0x8] sm:$0xff]
  %v3848 = vld [vmem:[#allocation2 + $0x10] sm:$0xff]
  %v3849 = vld [vmem:[#allocation2 + $0x18] sm:$0xff]
  %v3850 = vld [vmem:[#allocation2 + $0x20] sm:$0xff]
  %v3851 = vld [vmem:[#allocation2 + $0x28] sm:$0xff]
  %v3852 = vld [vmem:[#allocation2 + $0x30] sm:$0xff]
  %v3853 = vld [vmem:[#allocation2 + $0x38] sm:$0xff]
  %v3854 = vld [vmem:[#allocation2 + $0x40] sm:$0xff]
  %v3855 = vld [vmem:[#allocation2 + $0x48] sm:$0xff]
  %v3856 = vld [vmem:[#allocation2 + $0x50] sm:$0xff]
  %v3857 = vld [vmem:[#allocation2 + $0x58] sm:$0xff]
  %v3858 = vld [vmem:[#allocation2 + $0x60] sm:$0xff]
  %v3859 = vld [vmem:[#allocation2 + $0x68] sm:$0xff]
  %v3860 = vld [vmem:[#allocation2 + $0x70] sm:$0xff]
  %v3861 = vld [vmem:[#allocation2 + $0x78] sm:$0xff]
  %v3862 = vld [vmem:[#allocation2 + $0x80] sm:$0xff]
  %v3863 = vld [vmem:[#allocation2 + $0x88] sm:$0xff]
  %v3864 = vld [vmem:[#allocation2 + $0x90] sm:$0xff]
  %v3865 = vld [vmem:[#allocation2 + $0x98] sm:$0xff]
  %v3866 = vld [vmem:[#allocation2 + $0xa0] sm:$0xff]
  %v3867 = vld [vmem:[#allocation2 + $0xa8] sm:$0xff]
  %v3868 = vld [vmem:[#allocation2 + $0xb0] sm:$0xff]
  %v3869 = vld [vmem:[#allocation2 + $0xb8] sm:$0xff]
  %v3870 = vld [vmem:[#allocation2 + $0xc0] sm:$0xff]
  %v3871 = vld [vmem:[#allocation2 + $0xc8] sm:$0xff]
  %v3872 = vld [vmem:[#allocation2 + $0xd0] sm:$0xff]
  %v3873 = vld [vmem:[#allocation2 + $0xd8] sm:$0xff]
  %v3874 = vld [vmem:[#allocation2 + $0xe0] sm:$0xff]
  %v3875 = vld [vmem:[#allocation2 + $0xe8] sm:$0xff]
  %v3876 = vld [vmem:[#allocation2 + $0xf0] sm:$0xff]
  %v3877 = vld [vmem:[#allocation2 + $0xf8] sm:$0xff]
  %v3878 = vld [vmem:[#allocation2 + $0x100] sm:$0xff]
  %v3879 = vld [vmem:[#allocation2 + $0x108] sm:$0xff]
  %v3880 = vld [vmem:[#allocation2 + $0x110] sm:$0xff]
  %v3881 = vld [vmem:[#allocation2 + $0x118] sm:$0xff]
  %v3882 = vld [vmem:[#allocation2 + $0x120] sm:$0xff]
  %v3883 = vld [vmem:[#allocation2 + $0x128] sm:$0xff]
  %v3884 = vld [vmem:[#allocation2 + $0x130] sm:$0xff]
  %v3885 = vld [vmem:[#allocation2 + $0x138] sm:$0xff]
  %v3886 = vld [vmem:[#allocation2 + $0x140] sm:$0xff]
  %v3887 = vld [vmem:[#allocation2 + $0x148] sm:$0xff]
  %v3888 = vld [vmem:[#allocation2 + $0x150] sm:$0xff]
  %v3889 = vld [vmem:[#allocation2 + $0x158] sm:$0xff]
  %v3890 = vld [vmem:[#allocation2 + $0x160] sm:$0xff]
  %v3891 = vld [vmem:[#allocation2 + $0x168] sm:$0xff]
  %v3892 = vld [vmem:[#allocation2 + $0x170] sm:$0xff]
  %v3893 = vld [vmem:[#allocation2 + $0x178] sm:$0xff]
  %v3894 = vld [vmem:[#allocation2 + $0x180] sm:$0xff]
  %v3895 = vld [vmem:[#allocation2 + $0x188] sm:$0xff]
  %v3896 = vld [vmem:[#allocation2 + $0x190] sm:$0xff]
  %v3897 = vld [vmem:[#allocation2 + $0x198] sm:$0xff]
  %v3898 = vld [vmem:[#allocation2 + $0x1a0] sm:$0xff]
  %v3899 = vld [vmem:[#allocation2 + $0x1a8] sm:$0xff]
  %v3900 = vld [vmem:[#allocation2 + $0x1b0] sm:$0xff]
  %v3901 = vld [vmem:[#allocation2 + $0x1b8] sm:$0xff]
  %v3902 = vld [vmem:[#allocation2 + $0x1c0] sm:$0xff]
  %v3903 = vld [vmem:[#allocation2 + $0x1c8] sm:$0xff]
  %v3904 = vld [vmem:[#allocation2 + $0x1d0] sm:$0xff]
  %v3905 = vld [vmem:[#allocation2 + $0x1d8] sm:$0xff]
  %v3906 = vld [vmem:[#allocation2 + $0x1e0] sm:$0xff]
  %v3907 = vld [vmem:[#allocation2 + $0x1e8] sm:$0xff]
  %v3908 = vld [vmem:[#allocation2 + $0x1f0] sm:$0xff]
  %v3909 = vld [vmem:[#allocation2 + $0x1f8] sm:$0xff]
  %v3910 = vadd.f32 %v3846, %v3687
  %v3911 = vadd.f32 %v3847, %v3689
  %v3912 = vadd.f32 %v3848, %v3692
  %v3913 = vadd.f32 %v3849, %v3694
  %v3914 = vadd.f32 %v3850, %v3697
  %v3915 = vadd.f32 %v3851, %v3699
  %v3916 = vadd.f32 %v3852, %v3702
  %v3917 = vadd.f32 %v3853, %v3704
  %v3918 = vadd.f32 %v3854, %v3707
  %v3919 = vadd.f32 %v3855, %v3709
  %v3920 = vadd.f32 %v3856, %v3712
  %v3921 = vadd.f32 %v3857, %v3714
  %v3922 = vadd.f32 %v3858, %v3717
  %v3923 = vadd.f32 %v3859, %v3719
  %v3924 = vadd.f32 %v3860, %v3722
  %v3925 = vadd.f32 %v3861, %v3724
  %v3926 = vadd.f32 %v3862, %v3727
  %v3927 = vadd.f32 %v3863, %v3729
  %v3928 = vadd.f32 %v3864, %v3732
  %v3929 = vadd.f32 %v3865, %v3734
  %v3930 = vadd.f32 %v3866, %v3737
  %v3931 = vadd.f32 %v3867, %v3739
  %v3932 = vadd.f32 %v3868, %v3742
  %v3933 = vadd.f32 %v3869, %v3744
  %v3934 = vadd.f32 %v3870, %v3747
  %v3935 = vadd.f32 %v3871, %v3749
  %v3936 = vadd.f32 %v3872, %v3752
  %v3937 = vadd.f32 %v3873, %v3754
  %v3938 = vadd.f32 %v3874, %v3757
  %v3939 = vadd.f32 %v3875, %v3759
  %v3940 = vadd.f32 %v3876, %v3762
  %v3941 = vadd.f32 %v3877, %v3764
  %v3942 = vadd.f32 %v3878, %v3767
  %v3943 = vadd.f32 %v3879, %v3769
  %v3944 = vadd.f32 %v3880, %v3772
  %v3945 = vadd.f32 %v3881, %v3774
  %v3946 = vadd.f32 %v3882, %v3777
  %v3947 = vadd.f32 %v3883, %v3779
  %v3948 = vadd.f32 %v3884, %v3782
  %v3949 = vadd.f32 %v3885, %v3784
  %v3950 = vadd.f32 %v3886, %v3787
  %v3951 = vadd.f32 %v3887, %v3789
  %v3952 = vadd.f32 %v3888, %v3792
  %v3953 = vadd.f32 %v3889, %v3794
  %v3954 = vadd.f32 %v3890, %v3797
  %v3955 = vadd.f32 %v3891, %v3799
  %v3956 = vadd.f32 %v3892, %v3802
  %v3957 = vadd.f32 %v3893, %v3804
  %v3958 = vadd.f32 %v3894, %v3807
  %v3959 = vadd.f32 %v3895, %v3809
  %v3960 = vadd.f32 %v3896, %v3812
  %v3961 = vadd.f32 %v3897, %v3814
  %v3962 = vadd.f32 %v3898, %v3817
  %v3963 = vadd.f32 %v3899, %v3819
  %v3964 = vadd.f32 %v3900, %v3822
  %v3965 = vadd.f32 %v3901, %v3824
  %v3966 = vadd.f32 %v3902, %v3827
  %v3967 = vadd.f32 %v3903, %v3829
  %v3968 = vadd.f32 %v3904, %v3832
  %v3969 = vadd.f32 %v3905, %v3834
  %v3970 = vadd.f32 %v3906, %v3837
  %v3971 = vadd.f32 %v3907, %v3839
  %v3972 = vadd.f32 %v3908, %v3842
  %v3973 = vadd.f32 %v3909, %v3844
  %3974 = vst [vmem:[#allocation2] sm:$0xff] %v3910
  %3975 = vst [vmem:[#allocation2 + $0x8] sm:$0xff] %v3911
  %3976 = vst [vmem:[#allocation2 + $0x10] sm:$0xff] %v3912
  %3977 = vst [vmem:[#allocation2 + $0x18] sm:$0xff] %v3913
  %3978 = vst [vmem:[#allocation2 + $0x20] sm:$0xff] %v3914
  %3979 = vst [vmem:[#allocation2 + $0x28] sm:$0xff] %v3915
  %3980 = vst [vmem:[#allocation2 + $0x30] sm:$0xff] %v3916
  %3981 = vst [vmem:[#allocation2 + $0x38] sm:$0xff] %v3917
  %3982 = vst [vmem:[#allocation2 + $0x40] sm:$0xff] %v3918
  %3983 = vst [vmem:[#allocation2 + $0x48] sm:$0xff] %v3919
  %3984 = vst [vmem:[#allocation2 + $0x50] sm:$0xff] %v3920
  %3985 = vst [vmem:[#allocation2 + $0x58] sm:$0xff] %v3921
  %3986 = vst [vmem:[#allocation2 + $0x60] sm:$0xff] %v3922
  %3987 = vst [vmem:[#allocation2 + $0x68] sm:$0xff] %v3923
  %3988 = vst [vmem:[#allocation2 + $0x70] sm:$0xff] %v3924
  %3989 = vst [vmem:[#allocation2 + $0x78] sm:$0xff] %v3925
  %3990 = vst [vmem:[#allocation2 + $0x80] sm:$0xff] %v3926
  %3991 = vst [vmem:[#allocation2 + $0x88] sm:$0xff] %v3927
  %3992 = vst [vmem:[#allocation2 + $0x90] sm:$0xff] %v3928
  %3993 = vst [vmem:[#allocation2 + $0x98] sm:$0xff] %v3929
  %3994 = vst [vmem:[#allocation2 + $0xa0] sm:$0xff] %v3930
  %3995 = vst [vmem:[#allocation2 + $0xa8] sm:$0xff] %v3931
  %3996 = vst [vmem:[#allocation2 + $0xb0] sm:$0xff] %v3932
  %3997 = vst [vmem:[#allocation2 + $0xb8] sm:$0xff] %v3933
  %3998 = vst [vmem:[#allocation2 + $0xc0] sm:$0xff] %v3934
  %3999 = vst [vmem:[#allocation2 + $0xc8] sm:$0xff] %v3935
  %4000 = vst [vmem:[#allocation2 + $0xd0] sm:$0xff] %v3936
  %4001 = vst [vmem:[#allocation2 + $0xd8] sm:$0xff] %v3937
  %4002 = vst [vmem:[#allocation2 + $0xe0] sm:$0xff] %v3938
  %4003 = vst [vmem:[#allocation2 + $0xe8] sm:$0xff] %v3939
  %4004 = vst [vmem:[#allocation2 + $0xf0] sm:$0xff] %v3940
  %4005 = vst [vmem:[#allocation2 + $0xf8] sm:$0xff] %v3941
  %4006 = vst [vmem:[#allocation2 + $0x100] sm:$0xff] %v3942
  %4007 = vst [vmem:[#allocation2 + $0x108] sm:$0xff] %v3943
  %4008 = vst [vmem:[#allocation2 + $0x110] sm:$0xff] %v3944
  %4009 = vst [vmem:[#allocation2 + $0x118] sm:$0xff] %v3945
  %4010 = vst [vmem:[#allocation2 + $0x120] sm:$0xff] %v3946
  %4011 = vst [vmem:[#allocation2 + $0x128] sm:$0xff] %v3947
  %4012 = vst [vmem:[#allocation2 + $0x130] sm:$0xff] %v3948
  %4013 = vst [vmem:[#allocation2 + $0x138] sm:$0xff] %v3949
  %4014 = vst [vmem:[#allocation2 + $0x140] sm:$0xff] %v3950
  %4015 = vst [vmem:[#allocation2 + $0x148] sm:$0xff] %v3951
  %4016 = vst [vmem:[#allocation2 + $0x150] sm:$0xff] %v3952
  %4017 = vst [vmem:[#allocation2 + $0x158] sm:$0xff] %v3953
  %4018 = vst [vmem:[#allocation2 + $0x160] sm:$0xff] %v3954
  %4019 = vst [vmem:[#allocation2 + $0x168] sm:$0xff] %v3955
  %4020 = vst [vmem:[#allocation2 + $0x170] sm:$0xff] %v3956
  %4021 = vst [vmem:[#allocation2 + $0x178] sm:$0xff] %v3957
  %4022 = vst [vmem:[#allocation2 + $0x180] sm:$0xff] %v3958
  %4023 = vst [vmem:[#allocation2 + $0x188] sm:$0xff] %v3959
  %4024 = vst [vmem:[#allocation2 + $0x190] sm:$0xff] %v3960
  %4025 = vst [vmem:[#allocation2 + $0x198] sm:$0xff] %v3961
  %4026 = vst [vmem:[#allocation2 + $0x1a0] sm:$0xff] %v3962
  %4027 = vst [vmem:[#allocation2 + $0x1a8] sm:$0xff] %v3963
  %4028 = vst [vmem:[#allocation2 + $0x1b0] sm:$0xff] %v3964
  %4029 = vst [vmem:[#allocation2 + $0x1b8] sm:$0xff] %v3965
  %4030 = vst [vmem:[#allocation2 + $0x1c0] sm:$0xff] %v3966
  %4031 = vst [vmem:[#allocation2 + $0x1c8] sm:$0xff] %v3967
  %4032 = vst [vmem:[#allocation2 + $0x1d0] sm:$0xff] %v3968
  %4033 = vst [vmem:[#allocation2 + $0x1d8] sm:$0xff] %v3969
  %4034 = vst [vmem:[#allocation2 + $0x1e0] sm:$0xff] %v3970
  %4035 = vst [vmem:[#allocation2 + $0x1e8] sm:$0xff] %v3971
  %4036 = vst [vmem:[#allocation2 + $0x1f0] sm:$0xff] %v3972
  %4037 = vst [vmem:[#allocation2 + $0x1f8] sm:$0xff] %v3973
  %v4038 = vld [vmem:[%s1 + $0x60] sm:$0xf]
  %v4039 = vld [vmem:[%s1 + $0x64] sm:$0xf]
  %v4040 = vld [vmem:[%s1 + $0x68] sm:$0xf]
  %v4041 = vld [vmem:[%s1 + $0x6c] sm:$0xf]
  %v4046 = vunpack.c.l.b16 %v72
  %v4047 = vunpack.c.l.b16 %v73
  %v4048 = vunpack.c.l.b16 %v126
  %v4049 = vunpack.c.l.b16 %v127
  %v4050 = vpack.c.b16 %v4047, %v4046
  %v4051 = vpack.c.b16 %v4049, %v4048
  %v4056 = vunpack.c.l.b16 %v4038
  %v4057 = vunpack.c.l.b16 %v4039
  %v4058 = vunpack.c.l.b16 %v4040
  %v4059 = vunpack.c.l.b16 %v4041
  %v4060 = vpack.c.b16 %v4057, %v4056
  %v4061 = vpack.c.b16 %v4059, %v4058
  %v4065 = vsel %vm305, %v4050, 0
  %v4068 = vsel %vm305, %v4051, 0
  %4070 = vmatpush.bf16.msra.mxu0 0
  %4071 = vmatpush.bf16.msra.mxu0 0
  %4072 = vmatpush.bf16.msra.mxu0 0
  %4073 = vmatpush.bf16.msra.mxu0 0
  %4074 = vmatpush.bf16.msra.mxu0 0
  %4075 = vmatpush.bf16.msra.mxu0 0
  %4076 = vmatpush.bf16.msra.mxu0 %v4061
  %4077 = vmatpush.bf16.msra.mxu0 %v4060
  %4078 = vmatmul.bf16.gmra.mxu0 %v313
  %v4079 = vpop.f32.mrf.mxu0
  %v4080 = vadd.f32 0.0, %v4079
  %v4081 = vpop.f32.mrf.mxu0
  %v4082 = vadd.f32 0.0, %v4081
  %4083 = vmatmul.bf16.gmra.mxu0 %v316
  %v4084 = vpop.f32.mrf.mxu0
  %v4085 = vadd.f32 0.0, %v4084
  %v4086 = vpop.f32.mrf.mxu0
  %v4087 = vadd.f32 0.0, %v4086
  %4088 = vmatmul.bf16.gmra.mxu0 %v319
  %v4089 = vpop.f32.mrf.mxu0
  %v4090 = vadd.f32 0.0, %v4089
  %v4091 = vpop.f32.mrf.mxu0
  %v4092 = vadd.f32 0.0, %v4091
  %4093 = vmatmul.bf16.gmra.mxu0 %v322
  %v4094 = vpop.f32.mrf.mxu0
  %v4095 = vadd.f32 0.0, %v4094
  %v4096 = vpop.f32.mrf.mxu0
  %v4097 = vadd.f32 0.0, %v4096
  %4098 = vmatmul.bf16.gmra.mxu0 %v325
  %v4099 = vpop.f32.mrf.mxu0
  %v4100 = vadd.f32 0.0, %v4099
  %v4101 = vpop.f32.mrf.mxu0
  %v4102 = vadd.f32 0.0, %v4101
  %4103 = vmatmul.bf16.gmra.mxu0 %v328
  %v4104 = vpop.f32.mrf.mxu0
  %v4105 = vadd.f32 0.0, %v4104
  %v4106 = vpop.f32.mrf.mxu0
  %v4107 = vadd.f32 0.0, %v4106
  %4108 = vmatmul.bf16.gmra.mxu0 %v331
  %v4109 = vpop.f32.mrf.mxu0
  %v4110 = vadd.f32 0.0, %v4109
  %v4111 = vpop.f32.mrf.mxu0
  %v4112 = vadd.f32 0.0, %v4111
  %4113 = vmatmul.bf16.gmra.mxu0 %v334
  %v4114 = vpop.f32.mrf.mxu0
  %v4115 = vadd.f32 0.0, %v4114
  %v4116 = vpop.f32.mrf.mxu0
  %v4117 = vadd.f32 0.0, %v4116
  %4118 = vmatmul.bf16.gmra.mxu0 %v337
  %v4119 = vpop.f32.mrf.mxu0
  %v4120 = vadd.f32 0.0, %v4119
  %v4121 = vpop.f32.mrf.mxu0
  %v4122 = vadd.f32 0.0, %v4121
  %4123 = vmatmul.bf16.gmra.mxu0 %v340
  %v4124 = vpop.f32.mrf.mxu0
  %v4125 = vadd.f32 0.0, %v4124
  %v4126 = vpop.f32.mrf.mxu0
  %v4127 = vadd.f32 0.0, %v4126
  %4128 = vmatmul.bf16.gmra.mxu0 %v343
  %v4129 = vpop.f32.mrf.mxu0
  %v4130 = vadd.f32 0.0, %v4129
  %v4131 = vpop.f32.mrf.mxu0
  %v4132 = vadd.f32 0.0, %v4131
  %4133 = vmatmul.bf16.gmra.mxu0 %v346
  %v4134 = vpop.f32.mrf.mxu0
  %v4135 = vadd.f32 0.0, %v4134
  %v4136 = vpop.f32.mrf.mxu0
  %v4137 = vadd.f32 0.0, %v4136
  %4138 = vmatmul.bf16.gmra.mxu0 %v349
  %v4139 = vpop.f32.mrf.mxu0
  %v4140 = vadd.f32 0.0, %v4139
  %v4141 = vpop.f32.mrf.mxu0
  %v4142 = vadd.f32 0.0, %v4141
  %4143 = vmatmul.bf16.gmra.mxu0 %v352
  %v4144 = vpop.f32.mrf.mxu0
  %v4145 = vadd.f32 0.0, %v4144
  %v4146 = vpop.f32.mrf.mxu0
  %v4147 = vadd.f32 0.0, %v4146
  %4148 = vmatmul.bf16.gmra.mxu0 %v2830
  %v4149 = vpop.f32.mrf.mxu0
  %v4150 = vadd.f32 0.0, %v4149
  %v4151 = vpop.f32.mrf.mxu0
  %v4152 = vadd.f32 0.0, %v4151
  %4153 = vmatmul.bf16.gmra.mxu0 %v4065
  %v4154 = vpop.f32.mrf.mxu0
  %v4155 = vadd.f32 0.0, %v4154
  %v4156 = vpop.f32.mrf.mxu0
  %v4157 = vadd.f32 0.0, %v4156
  %4158 = vmatmul.bf16.gmra.mxu0 %v361
  %v4159 = vpop.f32.mrf.mxu0
  %v4160 = vadd.f32 0.0, %v4159
  %v4161 = vpop.f32.mrf.mxu0
  %v4162 = vadd.f32 0.0, %v4161
  %4163 = vmatmul.bf16.gmra.mxu0 %v364
  %v4164 = vpop.f32.mrf.mxu0
  %v4165 = vadd.f32 0.0, %v4164
  %v4166 = vpop.f32.mrf.mxu0
  %v4167 = vadd.f32 0.0, %v4166
  %4168 = vmatmul.bf16.gmra.mxu0 %v367
  %v4169 = vpop.f32.mrf.mxu0
  %v4170 = vadd.f32 0.0, %v4169
  %v4171 = vpop.f32.mrf.mxu0
  %v4172 = vadd.f32 0.0, %v4171
  %4173 = vmatmul.bf16.gmra.mxu0 %v370
  %v4174 = vpop.f32.mrf.mxu0
  %v4175 = vadd.f32 0.0, %v4174
  %v4176 = vpop.f32.mrf.mxu0
  %v4177 = vadd.f32 0.0, %v4176
  %4178 = vmatmul.bf16.gmra.mxu0 %v373
  %v4179 = vpop.f32.mrf.mxu0
  %v4180 = vadd.f32 0.0, %v4179
  %v4181 = vpop.f32.mrf.mxu0
  %v4182 = vadd.f32 0.0, %v4181
  %4183 = vmatmul.bf16.gmra.mxu0 %v376
  %v4184 = vpop.f32.mrf.mxu0
  %v4185 = vadd.f32 0.0, %v4184
  %v4186 = vpop.f32.mrf.mxu0
  %v4187 = vadd.f32 0.0, %v4186
  %4188 = vmatmul.bf16.gmra.mxu0 %v379
  %v4189 = vpop.f32.mrf.mxu0
  %v4190 = vadd.f32 0.0, %v4189
  %v4191 = vpop.f32.mrf.mxu0
  %v4192 = vadd.f32 0.0, %v4191
  %4193 = vmatmul.bf16.gmra.mxu0 %v382
  %v4194 = vpop.f32.mrf.mxu0
  %v4195 = vadd.f32 0.0, %v4194
  %v4196 = vpop.f32.mrf.mxu0
  %v4197 = vadd.f32 0.0, %v4196
  %4198 = vmatmul.bf16.gmra.mxu0 %v385
  %v4199 = vpop.f32.mrf.mxu0
  %v4200 = vadd.f32 0.0, %v4199
  %v4201 = vpop.f32.mrf.mxu0
  %v4202 = vadd.f32 0.0, %v4201
  %4203 = vmatmul.bf16.gmra.mxu0 %v388
  %v4204 = vpop.f32.mrf.mxu0
  %v4205 = vadd.f32 0.0, %v4204
  %v4206 = vpop.f32.mrf.mxu0
  %v4207 = vadd.f32 0.0, %v4206
  %4208 = vmatmul.bf16.gmra.mxu0 %v391
  %v4209 = vpop.f32.mrf.mxu0
  %v4210 = vadd.f32 0.0, %v4209
  %v4211 = vpop.f32.mrf.mxu0
  %v4212 = vadd.f32 0.0, %v4211
  %4213 = vmatmul.bf16.gmra.mxu0 %v394
  %v4214 = vpop.f32.mrf.mxu0
  %v4215 = vadd.f32 0.0, %v4214
  %v4216 = vpop.f32.mrf.mxu0
  %v4217 = vadd.f32 0.0, %v4216
  %4218 = vmatmul.bf16.gmra.mxu0 %v397
  %v4219 = vpop.f32.mrf.mxu0
  %v4220 = vadd.f32 0.0, %v4219
  %v4221 = vpop.f32.mrf.mxu0
  %v4222 = vadd.f32 0.0, %v4221
  %4223 = vmatmul.bf16.gmra.mxu0 %v400
  %v4224 = vpop.f32.mrf.mxu0
  %v4225 = vadd.f32 0.0, %v4224
  %v4226 = vpop.f32.mrf.mxu0
  %v4227 = vadd.f32 0.0, %v4226
  %4228 = vmatmul.bf16.gmra.mxu0 %v2833
  %v4229 = vpop.f32.mrf.mxu0
  %v4230 = vadd.f32 0.0, %v4229
  %v4231 = vpop.f32.mrf.mxu0
  %v4232 = vadd.f32 0.0, %v4231
  %4233 = vmatmul.bf16.gmra.mxu0 %v4068
  %v4234 = vpop.f32.mrf.mxu0
  %v4235 = vadd.f32 0.0, %v4234
  %v4236 = vpop.f32.mrf.mxu0
  %v4237 = vadd.f32 0.0, %v4236
  %4238 = vdwg.mxu0
  %v4239 = vld [vmem:[#allocation2] sm:$0xff]
  %v4240 = vld [vmem:[#allocation2 + $0x8] sm:$0xff]
  %v4241 = vld [vmem:[#allocation2 + $0x10] sm:$0xff]
  %v4242 = vld [vmem:[#allocation2 + $0x18] sm:$0xff]
  %v4243 = vld [vmem:[#allocation2 + $0x20] sm:$0xff]
  %v4244 = vld [vmem:[#allocation2 + $0x28] sm:$0xff]
  %v4245 = vld [vmem:[#allocation2 + $0x30] sm:$0xff]
  %v4246 = vld [vmem:[#allocation2 + $0x38] sm:$0xff]
  %v4247 = vld [vmem:[#allocation2 + $0x40] sm:$0xff]
  %v4248 = vld [vmem:[#allocation2 + $0x48] sm:$0xff]
  %v4249 = vld [vmem:[#allocation2 + $0x50] sm:$0xff]
  %v4250 = vld [vmem:[#allocation2 + $0x58] sm:$0xff]
  %v4251 = vld [vmem:[#allocation2 + $0x60] sm:$0xff]
  %v4252 = vld [vmem:[#allocation2 + $0x68] sm:$0xff]
  %v4253 = vld [vmem:[#allocation2 + $0x70] sm:$0xff]
  %v4254 = vld [vmem:[#allocation2 + $0x78] sm:$0xff]
  %v4255 = vld [vmem:[#allocation2 + $0x80] sm:$0xff]
  %v4256 = vld [vmem:[#allocation2 + $0x88] sm:$0xff]
  %v4257 = vld [vmem:[#allocation2 + $0x90] sm:$0xff]
  %v4258 = vld [vmem:[#allocation2 + $0x98] sm:$0xff]
  %v4259 = vld [vmem:[#allocation2 + $0xa0] sm:$0xff]
  %v4260 = vld [vmem:[#allocation2 + $0xa8] sm:$0xff]
  %v4261 = vld [vmem:[#allocation2 + $0xb0] sm:$0xff]
  %v4262 = vld [vmem:[#allocation2 + $0xb8] sm:$0xff]
  %v4263 = vld [vmem:[#allocation2 + $0xc0] sm:$0xff]
  %v4264 = vld [vmem:[#allocation2 + $0xc8] sm:$0xff]
  %v4265 = vld [vmem:[#allocation2 + $0xd0] sm:$0xff]
  %v4266 = vld [vmem:[#allocation2 + $0xd8] sm:$0xff]
  %v4267 = vld [vmem:[#allocation2 + $0xe0] sm:$0xff]
  %v4268 = vld [vmem:[#allocation2 + $0xe8] sm:$0xff]
  %v4269 = vld [vmem:[#allocation2 + $0xf0] sm:$0xff]
  %v4270 = vld [vmem:[#allocation2 + $0xf8] sm:$0xff]
  %v4271 = vld [vmem:[#allocation2 + $0x100] sm:$0xff]
  %v4272 = vld [vmem:[#allocation2 + $0x108] sm:$0xff]
  %v4273 = vld [vmem:[#allocation2 + $0x110] sm:$0xff]
  %v4274 = vld [vmem:[#allocation2 + $0x118] sm:$0xff]
  %v4275 = vld [vmem:[#allocation2 + $0x120] sm:$0xff]
  %v4276 = vld [vmem:[#allocation2 + $0x128] sm:$0xff]
  %v4277 = vld [vmem:[#allocation2 + $0x130] sm:$0xff]
  %v4278 = vld [vmem:[#allocation2 + $0x138] sm:$0xff]
  %v4279 = vld [vmem:[#allocation2 + $0x140] sm:$0xff]
  %v4280 = vld [vmem:[#allocation2 + $0x148] sm:$0xff]
  %v4281 = vld [vmem:[#allocation2 + $0x150] sm:$0xff]
  %v4282 = vld [vmem:[#allocation2 + $0x158] sm:$0xff]
  %v4283 = vld [vmem:[#allocation2 + $0x160] sm:$0xff]
  %v4284 = vld [vmem:[#allocation2 + $0x168] sm:$0xff]
  %v4285 = vld [vmem:[#allocation2 + $0x170] sm:$0xff]
  %v4286 = vld [vmem:[#allocation2 + $0x178] sm:$0xff]
  %v4287 = vld [vmem:[#allocation2 + $0x180] sm:$0xff]
  %v4288 = vld [vmem:[#allocation2 + $0x188] sm:$0xff]
  %v4289 = vld [vmem:[#allocation2 + $0x190] sm:$0xff]
  %v4290 = vld [vmem:[#allocation2 + $0x198] sm:$0xff]
  %v4291 = vld [vmem:[#allocation2 + $0x1a0] sm:$0xff]
  %v4292 = vld [vmem:[#allocation2 + $0x1a8] sm:$0xff]
  %v4293 = vld [vmem:[#allocation2 + $0x1b0] sm:$0xff]
  %v4294 = vld [vmem:[#allocation2 + $0x1b8] sm:$0xff]
  %v4295 = vld [vmem:[#allocation2 + $0x1c0] sm:$0xff]
  %v4296 = vld [vmem:[#allocation2 + $0x1c8] sm:$0xff]
  %v4297 = vld [vmem:[#allocation2 + $0x1d0] sm:$0xff]
  %v4298 = vld [vmem:[#allocation2 + $0x1d8] sm:$0xff]
  %v4299 = vld [vmem:[#allocation2 + $0x1e0] sm:$0xff]
  %v4300 = vld [vmem:[#allocation2 + $0x1e8] sm:$0xff]
  %v4301 = vld [vmem:[#allocation2 + $0x1f0] sm:$0xff]
  %v4302 = vld [vmem:[#allocation2 + $0x1f8] sm:$0xff]
  %v4303 = vadd.f32 %v4239, %v4080
  %v4304 = vadd.f32 %v4240, %v4082
  %v4305 = vadd.f32 %v4241, %v4085
  %v4306 = vadd.f32 %v4242, %v4087
  %v4307 = vadd.f32 %v4243, %v4090
  %v4308 = vadd.f32 %v4244, %v4092
  %v4309 = vadd.f32 %v4245, %v4095
  %v4310 = vadd.f32 %v4246, %v4097
  %v4311 = vadd.f32 %v4247, %v4100
  %v4312 = vadd.f32 %v4248, %v4102
  %v4313 = vadd.f32 %v4249, %v4105
  %v4314 = vadd.f32 %v4250, %v4107
  %v4315 = vadd.f32 %v4251, %v4110
  %v4316 = vadd.f32 %v4252, %v4112
  %v4317 = vadd.f32 %v4253, %v4115
  %v4318 = vadd.f32 %v4254, %v4117
  %v4319 = vadd.f32 %v4255, %v4120
  %v4320 = vadd.f32 %v4256, %v4122
  %v4321 = vadd.f32 %v4257, %v4125
  %v4322 = vadd.f32 %v4258, %v4127
  %v4323 = vadd.f32 %v4259, %v4130
  %v4324 = vadd.f32 %v4260, %v4132
  %v4325 = vadd.f32 %v4261, %v4135
  %v4326 = vadd.f32 %v4262, %v4137
  %v4327 = vadd.f32 %v4263, %v4140
  %v4328 = vadd.f32 %v4264, %v4142
  %v4329 = vadd.f32 %v4265, %v4145
  %v4330 = vadd.f32 %v4266, %v4147
  %v4331 = vadd.f32 %v4267, %v4150
  %v4332 = vadd.f32 %v4268, %v4152
  %v4333 = vadd.f32 %v4269, %v4155
  %v4334 = vadd.f32 %v4270, %v4157
  %v4335 = vadd.f32 %v4271, %v4160
  %v4336 = vadd.f32 %v4272, %v4162
  %v4337 = vadd.f32 %v4273, %v4165
  %v4338 = vadd.f32 %v4274, %v4167
  %v4339 = vadd.f32 %v4275, %v4170
  %v4340 = vadd.f32 %v4276, %v4172
  %v4341 = vadd.f32 %v4277, %v4175
  %v4342 = vadd.f32 %v4278, %v4177
  %v4343 = vadd.f32 %v4279, %v4180
  %v4344 = vadd.f32 %v4280, %v4182
  %v4345 = vadd.f32 %v4281, %v4185
  %v4346 = vadd.f32 %v4282, %v4187
  %v4347 = vadd.f32 %v4283, %v4190
  %v4348 = vadd.f32 %v4284, %v4192
  %v4349 = vadd.f32 %v4285, %v4195
  %v4350 = vadd.f32 %v4286, %v4197
  %v4351 = vadd.f32 %v4287, %v4200
  %v4352 = vadd.f32 %v4288, %v4202
  %v4353 = vadd.f32 %v4289, %v4205
  %v4354 = vadd.f32 %v4290, %v4207
  %v4355 = vadd.f32 %v4291, %v4210
  %v4356 = vadd.f32 %v4292, %v4212
  %v4357 = vadd.f32 %v4293, %v4215
  %v4358 = vadd.f32 %v4294, %v4217
  %v4359 = vadd.f32 %v4295, %v4220
  %v4360 = vadd.f32 %v4296, %v4222
  %v4361 = vadd.f32 %v4297, %v4225
  %v4362 = vadd.f32 %v4298, %v4227
  %v4363 = vadd.f32 %v4299, %v4230
  %v4364 = vadd.f32 %v4300, %v4232
  %v4365 = vadd.f32 %v4301, %v4235
  %v4366 = vadd.f32 %v4302, %v4237
  %4367 = vst [vmem:[#allocation2] sm:$0xff] %v4303
  %4368 = vst [vmem:[#allocation2 + $0x8] sm:$0xff] %v4304
  %4369 = vst [vmem:[#allocation2 + $0x10] sm:$0xff] %v4305
  %4370 = vst [vmem:[#allocation2 + $0x18] sm:$0xff] %v4306
  %4371 = vst [vmem:[#allocation2 + $0x20] sm:$0xff] %v4307
  %4372 = vst [vmem:[#allocation2 + $0x28] sm:$0xff] %v4308
  %4373 = vst [vmem:[#allocation2 + $0x30] sm:$0xff] %v4309
  %4374 = vst [vmem:[#allocation2 + $0x38] sm:$0xff] %v4310
  %4375 = vst [vmem:[#allocation2 + $0x40] sm:$0xff] %v4311
  %4376 = vst [vmem:[#allocation2 + $0x48] sm:$0xff] %v4312
  %4377 = vst [vmem:[#allocation2 + $0x50] sm:$0xff] %v4313
  %4378 = vst [vmem:[#allocation2 + $0x58] sm:$0xff] %v4314
  %4379 = vst [vmem:[#allocation2 + $0x60] sm:$0xff] %v4315
  %4380 = vst [vmem:[#allocation2 + $0x68] sm:$0xff] %v4316
  %4381 = vst [vmem:[#allocation2 + $0x70] sm:$0xff] %v4317
  %4382 = vst [vmem:[#allocation2 + $0x78] sm:$0xff] %v4318
  %4383 = vst [vmem:[#allocation2 + $0x80] sm:$0xff] %v4319
  %4384 = vst [vmem:[#allocation2 + $0x88] sm:$0xff] %v4320
  %4385 = vst [vmem:[#allocation2 + $0x90] sm:$0xff] %v4321
  %4386 = vst [vmem:[#allocation2 + $0x98] sm:$0xff] %v4322
  %4387 = vst [vmem:[#allocation2 + $0xa0] sm:$0xff] %v4323
  %4388 = vst [vmem:[#allocation2 + $0xa8] sm:$0xff] %v4324
  %4389 = vst [vmem:[#allocation2 + $0xb0] sm:$0xff] %v4325
  %4390 = vst [vmem:[#allocation2 + $0xb8] sm:$0xff] %v4326
  %4391 = vst [vmem:[#allocation2 + $0xc0] sm:$0xff] %v4327
  %4392 = vst [vmem:[#allocation2 + $0xc8] sm:$0xff] %v4328
  %4393 = vst [vmem:[#allocation2 + $0xd0] sm:$0xff] %v4329
  %4394 = vst [vmem:[#allocation2 + $0xd8] sm:$0xff] %v4330
  %4395 = vst [vmem:[#allocation2 + $0xe0] sm:$0xff] %v4331
  %4396 = vst [vmem:[#allocation2 + $0xe8] sm:$0xff] %v4332
  %4397 = vst [vmem:[#allocation2 + $0xf0] sm:$0xff] %v4333
  %4398 = vst [vmem:[#allocation2 + $0xf8] sm:$0xff] %v4334
  %4399 = vst [vmem:[#allocation2 + $0x100] sm:$0xff] %v4335
  %4400 = vst [vmem:[#allocation2 + $0x108] sm:$0xff] %v4336
  %4401 = vst [vmem:[#allocation2 + $0x110] sm:$0xff] %v4337
  %4402 = vst [vmem:[#allocation2 + $0x118] sm:$0xff] %v4338
  %4403 = vst [vmem:[#allocation2 + $0x120] sm:$0xff] %v4339
  %4404 = vst [vmem:[#allocation2 + $0x128] sm:$0xff] %v4340
  %4405 = vst [vmem:[#allocation2 + $0x130] sm:$0xff] %v4341
  %4406 = vst [vmem:[#allocation2 + $0x138] sm:$0xff] %v4342
  %4407 = vst [vmem:[#allocation2 + $0x140] sm:$0xff] %v4343
  %4408 = vst [vmem:[#allocation2 + $0x148] sm:$0xff] %v4344
  %4409 = vst [vmem:[#allocation2 + $0x150] sm:$0xff] %v4345
  %4410 = vst [vmem:[#allocation2 + $0x158] sm:$0xff] %v4346
  %4411 = vst [vmem:[#allocation2 + $0x160] sm:$0xff] %v4347
  %4412 = vst [vmem:[#allocation2 + $0x168] sm:$0xff] %v4348
  %4413 = vst [vmem:[#allocation2 + $0x170] sm:$0xff] %v4349
  %4414 = vst [vmem:[#allocation2 + $0x178] sm:$0xff] %v4350
  %4415 = vst [vmem:[#allocation2 + $0x180] sm:$0xff] %v4351
  %4416 = vst [vmem:[#allocation2 + $0x188] sm:$0xff] %v4352
  %4417 = vst [vmem:[#allocation2 + $0x190] sm:$0xff] %v4353
  %4418 = vst [vmem:[#allocation2 + $0x198] sm:$0xff] %v4354
  %4419 = vst [vmem:[#allocation2 + $0x1a0] sm:$0xff] %v4355
  %4420 = vst [vmem:[#allocation2 + $0x1a8] sm:$0xff] %v4356
  %4421 = vst [vmem:[#allocation2 + $0x1b0] sm:$0xff] %v4357
  %4422 = vst [vmem:[#allocation2 + $0x1b8] sm:$0xff] %v4358
  %4423 = vst [vmem:[#allocation2 + $0x1c0] sm:$0xff] %v4359
  %4424 = vst [vmem:[#allocation2 + $0x1c8] sm:$0xff] %v4360
  %4425 = vst [vmem:[#allocation2 + $0x1d0] sm:$0xff] %v4361
  %4426 = vst [vmem:[#allocation2 + $0x1d8] sm:$0xff] %v4362
  %4427 = vst [vmem:[#allocation2 + $0x1e0] sm:$0xff] %v4363
  %4428 = vst [vmem:[#allocation2 + $0x1e8] sm:$0xff] %v4364
  %4429 = vst [vmem:[#allocation2 + $0x1f0] sm:$0xff] %v4365
  %4430 = vst [vmem:[#allocation2 + $0x1f8] sm:$0xff] %v4366
  %v4432 = vshrl.u32 %v72, 16
  %v4434 = vrot.slane %v4432, 4
  %v4435 = vshll.u32 %v72, 16
  %v4437 = vrot.slane %v4435, 5
  %v4438 = vor.u32 %v4434, %v4437
  %v4439 = vrot.slane %v4438, 4
  %v4441 = vshll.u32 %v73, 16
  %v4443 = vrot.slane %v4441, 5
  %v4444 = vsel %vm637, %v4439, %v4443
  %v4445 = vshrl.u32 %v73, 16
  %v4447 = vrot.slane %v4445, 4
  %v4448 = vor.u32 %v4447, %v4443
  %v4449 = vrot.slane %v4448, 4
  %v4451 = vshll.u32 %v74, 16
  %v4453 = vrot.slane %v4451, 5
  %v4454 = vsel %vm637, %v4449, %v4453
  %v4456 = vshrl.u32 %v126, 16
  %v4458 = vrot.slane %v4456, 4
  %v4459 = vshll.u32 %v126, 16
  %v4461 = vrot.slane %v4459, 5
  %v4462 = vor.u32 %v4458, %v4461
  %v4463 = vrot.slane %v4462, 4
  %v4465 = vshll.u32 %v127, 16
  %v4467 = vrot.slane %v4465, 5
  %v4468 = vsel %vm637, %v4463, %v4467
  %v4469 = vshrl.u32 %v127, 16
  %v4471 = vrot.slane %v4469, 4
  %v4472 = vor.u32 %v4471, %v4467
  %v4473 = vrot.slane %v4472, 4
  %v4475 = vshll.u32 %v128, 16
  %v4477 = vrot.slane %v4475, 5
  %v4478 = vsel %vm637, %v4473, %v4477
  %v4479 = vld [vmem:[%s1 + $0x70] sm:$0xf]
  %v4480 = vld [vmem:[%s1 + $0x74] sm:$0xf]
  %v4481 = vld [vmem:[%s1 + $0x78] sm:$0xf]
  %v4482 = vld [vmem:[%s1 + $0x7c] sm:$0xf]
  %v4483 = vunpack.c.l.b16 %v4444
  %v4484 = vunpack.c.l.b16 %v4454
  %v4485 = vunpack.c.l.b16 %v4468
  %v4486 = vunpack.c.l.b16 %v4478
  %v4487 = vpack.c.b16 %v4484, %v4483
  %v4488 = vpack.c.b16 %v4486, %v4485
  %v4493 = vunpack.c.l.b16 %v4479
  %v4494 = vunpack.c.l.b16 %v4480
  %v4495 = vunpack.c.l.b16 %v4481
  %v4496 = vunpack.c.l.b16 %v4482
  %v4497 = vpack.c.b16 %v4494, %v4493
  %v4498 = vpack.c.b16 %v4496, %v4495
  %v4502 = vsel %vm305, %v4487, 0
  %v4505 = vsel %vm305, %v4488, 0
  %4507 = vmatpush.bf16.msra.mxu0 0
  %4508 = vmatpush.bf16.msra.mxu0 0
  %4509 = vmatpush.bf16.msra.mxu0 0
  %4510 = vmatpush.bf16.msra.mxu0 0
  %4511 = vmatpush.bf16.msra.mxu0 0
  %4512 = vmatpush.bf16.msra.mxu0 0
  %4513 = vmatpush.bf16.msra.mxu0 %v4498
  %4514 = vmatpush.bf16.msra.mxu0 %v4497
  %4515 = vmatmul.bf16.gmra.mxu0 %v1525
  %v4516 = vpop.f32.mrf.mxu0
  %v4517 = vadd.f32 0.0, %v4516
  %v4518 = vpop.f32.mrf.mxu0
  %v4519 = vadd.f32 0.0, %v4518
  %4520 = vmatmul.bf16.gmra.mxu0 %v1528
  %v4521 = vpop.f32.mrf.mxu0
  %v4522 = vadd.f32 0.0, %v4521
  %v4523 = vpop.f32.mrf.mxu0
  %v4524 = vadd.f32 0.0, %v4523
  %4525 = vmatmul.bf16.gmra.mxu0 %v1531
  %v4526 = vpop.f32.mrf.mxu0
  %v4527 = vadd.f32 0.0, %v4526
  %v4528 = vpop.f32.mrf.mxu0
  %v4529 = vadd.f32 0.0, %v4528
  %4530 = vmatmul.bf16.gmra.mxu0 %v1534
  %v4531 = vpop.f32.mrf.mxu0
  %v4532 = vadd.f32 0.0, %v4531
  %v4533 = vpop.f32.mrf.mxu0
  %v4534 = vadd.f32 0.0, %v4533
  %4535 = vmatmul.bf16.gmra.mxu0 %v1537
  %v4536 = vpop.f32.mrf.mxu0
  %v4537 = vadd.f32 0.0, %v4536
  %v4538 = vpop.f32.mrf.mxu0
  %v4539 = vadd.f32 0.0, %v4538
  %4540 = vmatmul.bf16.gmra.mxu0 %v1540
  %v4541 = vpop.f32.mrf.mxu0
  %v4542 = vadd.f32 0.0, %v4541
  %v4543 = vpop.f32.mrf.mxu0
  %v4544 = vadd.f32 0.0, %v4543
  %4545 = vmatmul.bf16.gmra.mxu0 %v1543
  %v4546 = vpop.f32.mrf.mxu0
  %v4547 = vadd.f32 0.0, %v4546
  %v4548 = vpop.f32.mrf.mxu0
  %v4549 = vadd.f32 0.0, %v4548
  %4550 = vmatmul.bf16.gmra.mxu0 %v1546
  %v4551 = vpop.f32.mrf.mxu0
  %v4552 = vadd.f32 0.0, %v4551
  %v4553 = vpop.f32.mrf.mxu0
  %v4554 = vadd.f32 0.0, %v4553
  %4555 = vmatmul.bf16.gmra.mxu0 %v1549
  %v4556 = vpop.f32.mrf.mxu0
  %v4557 = vadd.f32 0.0, %v4556
  %v4558 = vpop.f32.mrf.mxu0
  %v4559 = vadd.f32 0.0, %v4558
  %4560 = vmatmul.bf16.gmra.mxu0 %v1552
  %v4561 = vpop.f32.mrf.mxu0
  %v4562 = vadd.f32 0.0, %v4561
  %v4563 = vpop.f32.mrf.mxu0
  %v4564 = vadd.f32 0.0, %v4563
  %4565 = vmatmul.bf16.gmra.mxu0 %v1555
  %v4566 = vpop.f32.mrf.mxu0
  %v4567 = vadd.f32 0.0, %v4566
  %v4568 = vpop.f32.mrf.mxu0
  %v4569 = vadd.f32 0.0, %v4568
  %4570 = vmatmul.bf16.gmra.mxu0 %v1558
  %v4571 = vpop.f32.mrf.mxu0
  %v4572 = vadd.f32 0.0, %v4571
  %v4573 = vpop.f32.mrf.mxu0
  %v4574 = vadd.f32 0.0, %v4573
  %4575 = vmatmul.bf16.gmra.mxu0 %v1561
  %v4576 = vpop.f32.mrf.mxu0
  %v4577 = vadd.f32 0.0, %v4576
  %v4578 = vpop.f32.mrf.mxu0
  %v4579 = vadd.f32 0.0, %v4578
  %4580 = vmatmul.bf16.gmra.mxu0 %v1564
  %v4581 = vpop.f32.mrf.mxu0
  %v4582 = vadd.f32 0.0, %v4581
  %v4583 = vpop.f32.mrf.mxu0
  %v4584 = vadd.f32 0.0, %v4583
  %4585 = vmatmul.bf16.gmra.mxu0 %v3267
  %v4586 = vpop.f32.mrf.mxu0
  %v4587 = vadd.f32 0.0, %v4586
  %v4588 = vpop.f32.mrf.mxu0
  %v4589 = vadd.f32 0.0, %v4588
  %4590 = vmatmul.bf16.gmra.mxu0 %v4502
  %v4591 = vpop.f32.mrf.mxu0
  %v4592 = vadd.f32 0.0, %v4591
  %v4593 = vpop.f32.mrf.mxu0
  %v4594 = vadd.f32 0.0, %v4593
  %4595 = vmatmul.bf16.gmra.mxu0 %v1573
  %v4596 = vpop.f32.mrf.mxu0
  %v4597 = vadd.f32 0.0, %v4596
  %v4598 = vpop.f32.mrf.mxu0
  %v4599 = vadd.f32 0.0, %v4598
  %4600 = vmatmul.bf16.gmra.mxu0 %v1576
  %v4601 = vpop.f32.mrf.mxu0
  %v4602 = vadd.f32 0.0, %v4601
  %v4603 = vpop.f32.mrf.mxu0
  %v4604 = vadd.f32 0.0, %v4603
  %4605 = vmatmul.bf16.gmra.mxu0 %v1579
  %v4606 = vpop.f32.mrf.mxu0
  %v4607 = vadd.f32 0.0, %v4606
  %v4608 = vpop.f32.mrf.mxu0
  %v4609 = vadd.f32 0.0, %v4608
  %4610 = vmatmul.bf16.gmra.mxu0 %v1582
  %v4611 = vpop.f32.mrf.mxu0
  %v4612 = vadd.f32 0.0, %v4611
  %v4613 = vpop.f32.mrf.mxu0
  %v4614 = vadd.f32 0.0, %v4613
  %4615 = vmatmul.bf16.gmra.mxu0 %v1585
  %v4616 = vpop.f32.mrf.mxu0
  %v4617 = vadd.f32 0.0, %v4616
  %v4618 = vpop.f32.mrf.mxu0
  %v4619 = vadd.f32 0.0, %v4618
  %4620 = vmatmul.bf16.gmra.mxu0 %v1588
  %v4621 = vpop.f32.mrf.mxu0
  %v4622 = vadd.f32 0.0, %v4621
  %v4623 = vpop.f32.mrf.mxu0
  %v4624 = vadd.f32 0.0, %v4623
  %4625 = vmatmul.bf16.gmra.mxu0 %v1591
  %v4626 = vpop.f32.mrf.mxu0
  %v4627 = vadd.f32 0.0, %v4626
  %v4628 = vpop.f32.mrf.mxu0
  %v4629 = vadd.f32 0.0, %v4628
  %4630 = vmatmul.bf16.gmra.mxu0 %v1594
  %v4631 = vpop.f32.mrf.mxu0
  %v4632 = vadd.f32 0.0, %v4631
  %v4633 = vpop.f32.mrf.mxu0
  %v4634 = vadd.f32 0.0, %v4633
  %4635 = vmatmul.bf16.gmra.mxu0 %v1597
  %v4636 = vpop.f32.mrf.mxu0
  %v4637 = vadd.f32 0.0, %v4636
  %v4638 = vpop.f32.mrf.mxu0
  %v4639 = vadd.f32 0.0, %v4638
  %4640 = vmatmul.bf16.gmra.mxu0 %v1600
  %v4641 = vpop.f32.mrf.mxu0
  %v4642 = vadd.f32 0.0, %v4641
  %v4643 = vpop.f32.mrf.mxu0
  %v4644 = vadd.f32 0.0, %v4643
  %4645 = vmatmul.bf16.gmra.mxu0 %v1603
  %v4646 = vpop.f32.mrf.mxu0
  %v4647 = vadd.f32 0.0, %v4646
  %v4648 = vpop.f32.mrf.mxu0
  %v4649 = vadd.f32 0.0, %v4648
  %4650 = vmatmul.bf16.gmra.mxu0 %v1606
  %v4651 = vpop.f32.mrf.mxu0
  %v4652 = vadd.f32 0.0, %v4651
  %v4653 = vpop.f32.mrf.mxu0
  %v4654 = vadd.f32 0.0, %v4653
  %4655 = vmatmul.bf16.gmra.mxu0 %v1609
  %v4656 = vpop.f32.mrf.mxu0
  %v4657 = vadd.f32 0.0, %v4656
  %v4658 = vpop.f32.mrf.mxu0
  %v4659 = vadd.f32 0.0, %v4658
  %4660 = vmatmul.bf16.gmra.mxu0 %v1612
  %v4661 = vpop.f32.mrf.mxu0
  %v4662 = vadd.f32 0.0, %v4661
  %v4663 = vpop.f32.mrf.mxu0
  %v4664 = vadd.f32 0.0, %v4663
  %4665 = vmatmul.bf16.gmra.mxu0 %v3270
  %v4666 = vpop.f32.mrf.mxu0
  %v4667 = vadd.f32 0.0, %v4666
  %v4668 = vpop.f32.mrf.mxu0
  %v4669 = vadd.f32 0.0, %v4668
  %4670 = vmatmul.bf16.gmra.mxu0 %v4505
  %v4671 = vpop.f32.mrf.mxu0
  %v4672 = vadd.f32 0.0, %v4671
  %v4673 = vpop.f32.mrf.mxu0
  %v4674 = vadd.f32 0.0, %v4673
  %4675 = vdwg.mxu0
  %v4676 = vld [vmem:[#allocation2] sm:$0xff]
  %v4677 = vld [vmem:[#allocation2 + $0x8] sm:$0xff]
  %v4678 = vld [vmem:[#allocation2 + $0x10] sm:$0xff]
  %v4679 = vld [vmem:[#allocation2 + $0x18] sm:$0xff]
  %v4680 = vld [vmem:[#allocation2 + $0x20] sm:$0xff]
  %v4681 = vld [vmem:[#allocation2 + $0x28] sm:$0xff]
  %v4682 = vld [vmem:[#allocation2 + $0x30] sm:$0xff]
  %v4683 = vld [vmem:[#allocation2 + $0x38] sm:$0xff]
  %v4684 = vld [vmem:[#allocation2 + $0x40] sm:$0xff]
  %v4685 = vld [vmem:[#allocation2 + $0x48] sm:$0xff]
  %v4686 = vld [vmem:[#allocation2 + $0x50] sm:$0xff]
  %v4687 = vld [vmem:[#allocation2 + $0x58] sm:$0xff]
  %v4688 = vld [vmem:[#allocation2 + $0x60] sm:$0xff]
  %v4689 = vld [vmem:[#allocation2 + $0x68] sm:$0xff]
  %v4690 = vld [vmem:[#allocation2 + $0x70] sm:$0xff]
  %v4691 = vld [vmem:[#allocation2 + $0x78] sm:$0xff]
  %v4692 = vld [vmem:[#allocation2 + $0x80] sm:$0xff]
  %v4693 = vld [vmem:[#allocation2 + $0x88] sm:$0xff]
  %v4694 = vld [vmem:[#allocation2 + $0x90] sm:$0xff]
  %v4695 = vld [vmem:[#allocation2 + $0x98] sm:$0xff]
  %v4696 = vld [vmem:[#allocation2 + $0xa0] sm:$0xff]
  %v4697 = vld [vmem:[#allocation2 + $0xa8] sm:$0xff]
  %v4698 = vld [vmem:[#allocation2 + $0xb0] sm:$0xff]
  %v4699 = vld [vmem:[#allocation2 + $0xb8] sm:$0xff]
  %v4700 = vld [vmem:[#allocation2 + $0xc0] sm:$0xff]
  %v4701 = vld [vmem:[#allocation2 + $0xc8] sm:$0xff]
  %v4702 = vld [vmem:[#allocation2 + $0xd0] sm:$0xff]
  %v4703 = vld [vmem:[#allocation2 + $0xd8] sm:$0xff]
  %v4704 = vld [vmem:[#allocation2 + $0xe0] sm:$0xff]
  %v4705 = vld [vmem:[#allocation2 + $0xe8] sm:$0xff]
  %v4706 = vld [vmem:[#allocation2 + $0xf0] sm:$0xff]
  %v4707 = vld [vmem:[#allocation2 + $0xf8] sm:$0xff]
  %v4708 = vld [vmem:[#allocation2 + $0x100] sm:$0xff]
  %v4709 = vld [vmem:[#allocation2 + $0x108] sm:$0xff]
  %v4710 = vld [vmem:[#allocation2 + $0x110] sm:$0xff]
  %v4711 = vld [vmem:[#allocation2 + $0x118] sm:$0xff]
  %v4712 = vld [vmem:[#allocation2 + $0x120] sm:$0xff]
  %v4713 = vld [vmem:[#allocation2 + $0x128] sm:$0xff]
  %v4714 = vld [vmem:[#allocation2 + $0x130] sm:$0xff]
  %v4715 = vld [vmem:[#allocation2 + $0x138] sm:$0xff]
  %v4716 = vld [vmem:[#allocation2 + $0x140] sm:$0xff]
  %v4717 = vld [vmem:[#allocation2 + $0x148] sm:$0xff]
  %v4718 = vld [vmem:[#allocation2 + $0x150] sm:$0xff]
  %v4719 = vld [vmem:[#allocation2 + $0x158] sm:$0xff]
  %v4720 = vld [vmem:[#allocation2 + $0x160] sm:$0xff]
  %v4721 = vld [vmem:[#allocation2 + $0x168] sm:$0xff]
  %v4722 = vld [vmem:[#allocation2 + $0x170] sm:$0xff]
  %v4723 = vld [vmem:[#allocation2 + $0x178] sm:$0xff]
  %v4724 = vld [vmem:[#allocation2 + $0x180] sm:$0xff]
  %v4725 = vld [vmem:[#allocation2 + $0x188] sm:$0xff]
  %v4726 = vld [vmem:[#allocation2 + $0x190] sm:$0xff]
  %v4727 = vld [vmem:[#allocation2 + $0x198] sm:$0xff]
  %v4728 = vld [vmem:[#allocation2 + $0x1a0] sm:$0xff]
  %v4729 = vld [vmem:[#allocation2 + $0x1a8] sm:$0xff]
  %v4730 = vld [vmem:[#allocation2 + $0x1b0] sm:$0xff]
  %v4731 = vld [vmem:[#allocation2 + $0x1b8] sm:$0xff]
  %v4732 = vld [vmem:[#allocation2 + $0x1c0] sm:$0xff]
  %v4733 = vld [vmem:[#allocation2 + $0x1c8] sm:$0xff]
  %v4734 = vld [vmem:[#allocation2 + $0x1d0] sm:$0xff]
  %v4735 = vld [vmem:[#allocation2 + $0x1d8] sm:$0xff]
  %v4736 = vld [vmem:[#allocation2 + $0x1e0] sm:$0xff]
  %v4737 = vld [vmem:[#allocation2 + $0x1e8] sm:$0xff]
  %v4738 = vld [vmem:[#allocation2 + $0x1f0] sm:$0xff]
  %v4739 = vld [vmem:[#allocation2 + $0x1f8] sm:$0xff]
  %v4740 = vadd.f32 %v4676, %v4517
  %v4741 = vadd.f32 %v4677, %v4519
  %v4742 = vadd.f32 %v4678, %v4522
  %v4743 = vadd.f32 %v4679, %v4524
  %v4744 = vadd.f32 %v4680, %v4527
  %v4745 = vadd.f32 %v4681, %v4529
  %v4746 = vadd.f32 %v4682, %v4532
  %v4747 = vadd.f32 %v4683, %v4534
  %v4748 = vadd.f32 %v4684, %v4537
  %v4749 = vadd.f32 %v4685, %v4539
  %v4750 = vadd.f32 %v4686, %v4542
  %v4751 = vadd.f32 %v4687, %v4544
  %v4752 = vadd.f32 %v4688, %v4547
  %v4753 = vadd.f32 %v4689, %v4549
  %v4754 = vadd.f32 %v4690, %v4552
  %v4755 = vadd.f32 %v4691, %v4554
  %v4756 = vadd.f32 %v4692, %v4557
  %v4757 = vadd.f32 %v4693, %v4559
  %v4758 = vadd.f32 %v4694, %v4562
  %v4759 = vadd.f32 %v4695, %v4564
  %v4760 = vadd.f32 %v4696, %v4567
  %v4761 = vadd.f32 %v4697, %v4569
  %v4762 = vadd.f32 %v4698, %v4572
  %v4763 = vadd.f32 %v4699, %v4574
  %v4764 = vadd.f32 %v4700, %v4577
  %v4765 = vadd.f32 %v4701, %v4579
  %v4766 = vadd.f32 %v4702, %v4582
  %v4767 = vadd.f32 %v4703, %v4584
  %v4768 = vadd.f32 %v4704, %v4587
  %v4769 = vadd.f32 %v4705, %v4589
  %v4770 = vadd.f32 %v4706, %v4592
  %v4771 = vadd.f32 %v4707, %v4594
  %v4772 = vadd.f32 %v4708, %v4597
  %v4773 = vadd.f32 %v4709, %v4599
  %v4774 = vadd.f32 %v4710, %v4602
  %v4775 = vadd.f32 %v4711, %v4604
  %v4776 = vadd.f32 %v4712, %v4607
  %v4777 = vadd.f32 %v4713, %v4609
  %v4778 = vadd.f32 %v4714, %v4612
  %v4779 = vadd.f32 %v4715, %v4614
  %v4780 = vadd.f32 %v4716, %v4617
  %v4781 = vadd.f32 %v4717, %v4619
  %v4782 = vadd.f32 %v4718, %v4622
  %v4783 = vadd.f32 %v4719, %v4624
  %v4784 = vadd.f32 %v4720, %v4627
  %v4785 = vadd.f32 %v4721, %v4629
  %v4786 = vadd.f32 %v4722, %v4632
  %v4787 = vadd.f32 %v4723, %v4634
  %v4788 = vadd.f32 %v4724, %v4637
  %v4789 = vadd.f32 %v4725, %v4639
  %v4790 = vadd.f32 %v4726, %v4642
  %v4791 = vadd.f32 %v4727, %v4644
  %v4792 = vadd.f32 %v4728, %v4647
  %v4793 = vadd.f32 %v4729, %v4649
  %v4794 = vadd.f32 %v4730, %v4652
  %v4795 = vadd.f32 %v4731, %v4654
  %v4796 = vadd.f32 %v4732, %v4657
  %v4797 = vadd.f32 %v4733, %v4659
  %v4798 = vadd.f32 %v4734, %v4662
  %v4799 = vadd.f32 %v4735, %v4664
  %v4800 = vadd.f32 %v4736, %v4667
  %v4801 = vadd.f32 %v4737, %v4669
  %v4802 = vadd.f32 %v4738, %v4672
  %v4803 = vadd.f32 %v4739, %v4674
  %4804 = vst [vmem:[#allocation2] sm:$0xff] %v4740
  %4805 = vst [vmem:[#allocation2 + $0x8] sm:$0xff] %v4741
  %4806 = vst [vmem:[#allocation2 + $0x10] sm:$0xff] %v4742
  %4807 = vst [vmem:[#allocation2 + $0x18] sm:$0xff] %v4743
  %4808 = vst [vmem:[#allocation2 + $0x20] sm:$0xff] %v4744
  %4809 = vst [vmem:[#allocation2 + $0x28] sm:$0xff] %v4745
  %4810 = vst [vmem:[#allocation2 + $0x30] sm:$0xff] %v4746
  %4811 = vst [vmem:[#allocation2 + $0x38] sm:$0xff] %v4747
  %4812 = vst [vmem:[#allocation2 + $0x40] sm:$0xff] %v4748
  %4813 = vst [vmem:[#allocation2 + $0x48] sm:$0xff] %v4749
  %4814 = vst [vmem:[#allocation2 + $0x50] sm:$0xff] %v4750
  %4815 = vst [vmem:[#allocation2 + $0x58] sm:$0xff] %v4751
  %4816 = vst [vmem:[#allocation2 + $0x60] sm:$0xff] %v4752
  %4817 = vst [vmem:[#allocation2 + $0x68] sm:$0xff] %v4753
  %4818 = vst [vmem:[#allocation2 + $0x70] sm:$0xff] %v4754
  %4819 = vst [vmem:[#allocation2 + $0x78] sm:$0xff] %v4755
  %4820 = vst [vmem:[#allocation2 + $0x80] sm:$0xff] %v4756
  %4821 = vst [vmem:[#allocation2 + $0x88] sm:$0xff] %v4757
  %4822 = vst [vmem:[#allocation2 + $0x90] sm:$0xff] %v4758
  %4823 = vst [vmem:[#allocation2 + $0x98] sm:$0xff] %v4759
  %4824 = vst [vmem:[#allocation2 + $0xa0] sm:$0xff] %v4760
  %4825 = vst [vmem:[#allocation2 + $0xa8] sm:$0xff] %v4761
  %4826 = vst [vmem:[#allocation2 + $0xb0] sm:$0xff] %v4762
  %4827 = vst [vmem:[#allocation2 + $0xb8] sm:$0xff] %v4763
  %4828 = vst [vmem:[#allocation2 + $0xc0] sm:$0xff] %v4764
  %4829 = vst [vmem:[#allocation2 + $0xc8] sm:$0xff] %v4765
  %4830 = vst [vmem:[#allocation2 + $0xd0] sm:$0xff] %v4766
  %4831 = vst [vmem:[#allocation2 + $0xd8] sm:$0xff] %v4767
  %4832 = vst [vmem:[#allocation2 + $0xe0] sm:$0xff] %v4768
  %4833 = vst [vmem:[#allocation2 + $0xe8] sm:$0xff] %v4769
  %4834 = vst [vmem:[#allocation2 + $0xf0] sm:$0xff] %v4770
  %4835 = vst [vmem:[#allocation2 + $0xf8] sm:$0xff] %v4771
  %4836 = vst [vmem:[#allocation2 + $0x100] sm:$0xff] %v4772
  %4837 = vst [vmem:[#allocation2 + $0x108] sm:$0xff] %v4773
  %4838 = vst [vmem:[#allocation2 + $0x110] sm:$0xff] %v4774
  %4839 = vst [vmem:[#allocation2 + $0x118] sm:$0xff] %v4775
  %4840 = vst [vmem:[#allocation2 + $0x120] sm:$0xff] %v4776
  %4841 = vst [vmem:[#allocation2 + $0x128] sm:$0xff] %v4777
  %4842 = vst [vmem:[#allocation2 + $0x130] sm:$0xff] %v4778
  %4843 = vst [vmem:[#allocation2 + $0x138] sm:$0xff] %v4779
  %4844 = vst [vmem:[#allocation2 + $0x140] sm:$0xff] %v4780
  %4845 = vst [vmem:[#allocation2 + $0x148] sm:$0xff] %v4781
  %4846 = vst [vmem:[#allocation2 + $0x150] sm:$0xff] %v4782
  %4847 = vst [vmem:[#allocation2 + $0x158] sm:$0xff] %v4783
  %4848 = vst [vmem:[#allocation2 + $0x160] sm:$0xff] %v4784
  %4849 = vst [vmem:[#allocation2 + $0x168] sm:$0xff] %v4785
  %4850 = vst [vmem:[#allocation2 + $0x170] sm:$0xff] %v4786
  %4851 = vst [vmem:[#allocation2 + $0x178] sm:$0xff] %v4787
  %4852 = vst [vmem:[#allocation2 + $0x180] sm:$0xff] %v4788
  %4853 = vst [vmem:[#allocation2 + $0x188] sm:$0xff] %v4789
  %4854 = vst [vmem:[#allocation2 + $0x190] sm:$0xff] %v4790
  %4855 = vst [vmem:[#allocation2 + $0x198] sm:$0xff] %v4791
  %4856 = vst [vmem:[#allocation2 + $0x1a0] sm:$0xff] %v4792
  %4857 = vst [vmem:[#allocation2 + $0x1a8] sm:$0xff] %v4793
  %4858 = vst [vmem:[#allocation2 + $0x1b0] sm:$0xff] %v4794
  %4859 = vst [vmem:[#allocation2 + $0x1b8] sm:$0xff] %v4795
  %4860 = vst [vmem:[#allocation2 + $0x1c0] sm:$0xff] %v4796
  %4861 = vst [vmem:[#allocation2 + $0x1c8] sm:$0xff] %v4797
  %4862 = vst [vmem:[#allocation2 + $0x1d0] sm:$0xff] %v4798
  %4863 = vst [vmem:[#allocation2 + $0x1d8] sm:$0xff] %v4799
  %4864 = vst [vmem:[#allocation2 + $0x1e0] sm:$0xff] %v4800
  %4865 = vst [vmem:[#allocation2 + $0x1e8] sm:$0xff] %v4801
  %4866 = vst [vmem:[#allocation2 + $0x1f0] sm:$0xff] %v4802
  %4867 = vst [vmem:[#allocation2 + $0x1f8] sm:$0xff] %v4803
  %v4870 = vrot.slane %v72, 5
  %v4871 = vrot.slane %v4870, 4
  %v4872 = vrot.slane %v73, 5
  %v4873 = vsel %vm2009, %v4871, %v4872
  %v4874 = vrot.slane %v4872, 4
  %v4875 = vrot.slane %v74, 5
  %v4876 = vsel %vm2009, %v4874, %v4875
  %v4877 = vrot.slane %v126, 5
  %v4878 = vrot.slane %v4877, 4
  %v4879 = vrot.slane %v127, 5
  %v4880 = vsel %vm2009, %v4878, %v4879
  %v4881 = vrot.slane %v4879, 4
  %v4882 = vrot.slane %v128, 5
  %v4883 = vsel %vm2009, %v4881, %v4882
  %v4884 = vld [vmem:[%s1 + $0x80] sm:$0xf]
  %v4885 = vld [vmem:[%s1 + $0x84] sm:$0xf]
  %v4886 = vld [vmem:[%s1 + $0x88] sm:$0xf]
  %v4887 = vld [vmem:[%s1 + $0x8c] sm:$0xf]
  %v4888 = vunpack.c.l.b16 %v4873
  %v4889 = vunpack.c.l.b16 %v4876
  %v4890 = vunpack.c.l.b16 %v4880
  %v4891 = vunpack.c.l.b16 %v4883
  %v4892 = vpack.c.b16 %v4889, %v4888
  %v4893 = vpack.c.b16 %v4891, %v4890
  %v4898 = vunpack.c.l.b16 %v4884
  %v4899 = vunpack.c.l.b16 %v4885
  %v4900 = vunpack.c.l.b16 %v4886
  %v4901 = vunpack.c.l.b16 %v4887
  %v4902 = vpack.c.b16 %v4899, %v4898
  %v4903 = vpack.c.b16 %v4901, %v4900
  %v4907 = vsel %vm305, %v4892, 0
  %v4910 = vsel %vm305, %v4893, 0
  %4912 = vmatpush.bf16.msra.mxu0 0
  %4913 = vmatpush.bf16.msra.mxu0 0
  %4914 = vmatpush.bf16.msra.mxu0 0
  %4915 = vmatpush.bf16.msra.mxu0 0
  %4916 = vmatpush.bf16.msra.mxu0 0
  %4917 = vmatpush.bf16.msra.mxu0 0
  %4918 = vmatpush.bf16.msra.mxu0 %v4903
  %4919 = vmatpush.bf16.msra.mxu0 %v4902
  %4920 = vmatmul.bf16.gmra.mxu0 %v2353
  %v4921 = vpop.f32.mrf.mxu0
  %v4922 = vadd.f32 0.0, %v4921
  %v4923 = vpop.f32.mrf.mxu0
  %v4924 = vadd.f32 0.0, %v4923
  %4925 = vmatmul.bf16.gmra.mxu0 %v2356
  %v4926 = vpop.f32.mrf.mxu0
  %v4927 = vadd.f32 0.0, %v4926
  %v4928 = vpop.f32.mrf.mxu0
  %v4929 = vadd.f32 0.0, %v4928
  %4930 = vmatmul.bf16.gmra.mxu0 %v2359
  %v4931 = vpop.f32.mrf.mxu0
  %v4932 = vadd.f32 0.0, %v4931
  %v4933 = vpop.f32.mrf.mxu0
  %v4934 = vadd.f32 0.0, %v4933
  %4935 = vmatmul.bf16.gmra.mxu0 %v2362
  %v4936 = vpop.f32.mrf.mxu0
  %v4937 = vadd.f32 0.0, %v4936
  %v4938 = vpop.f32.mrf.mxu0
  %v4939 = vadd.f32 0.0, %v4938
  %4940 = vmatmul.bf16.gmra.mxu0 %v2365
  %v4941 = vpop.f32.mrf.mxu0
  %v4942 = vadd.f32 0.0, %v4941
  %v4943 = vpop.f32.mrf.mxu0
  %v4944 = vadd.f32 0.0, %v4943
  %4945 = vmatmul.bf16.gmra.mxu0 %v2368
  %v4946 = vpop.f32.mrf.mxu0
  %v4947 = vadd.f32 0.0, %v4946
  %v4948 = vpop.f32.mrf.mxu0
  %v4949 = vadd.f32 0.0, %v4948
  %4950 = vmatmul.bf16.gmra.mxu0 %v2371
  %v4951 = vpop.f32.mrf.mxu0
  %v4952 = vadd.f32 0.0, %v4951
  %v4953 = vpop.f32.mrf.mxu0
  %v4954 = vadd.f32 0.0, %v4953
  %4955 = vmatmul.bf16.gmra.mxu0 %v2374
  %v4956 = vpop.f32.mrf.mxu0
  %v4957 = vadd.f32 0.0, %v4956
  %v4958 = vpop.f32.mrf.mxu0
  %v4959 = vadd.f32 0.0, %v4958
  %4960 = vmatmul.bf16.gmra.mxu0 %v2377
  %v4961 = vpop.f32.mrf.mxu0
  %v4962 = vadd.f32 0.0, %v4961
  %v4963 = vpop.f32.mrf.mxu0
  %v4964 = vadd.f32 0.0, %v4963
  %4965 = vmatmul.bf16.gmra.mxu0 %v2380
  %v4966 = vpop.f32.mrf.mxu0
  %v4967 = vadd.f32 0.0, %v4966
  %v4968 = vpop.f32.mrf.mxu0
  %v4969 = vadd.f32 0.0, %v4968
  %4970 = vmatmul.bf16.gmra.mxu0 %v2383
  %v4971 = vpop.f32.mrf.mxu0
  %v4972 = vadd.f32 0.0, %v4971
  %v4973 = vpop.f32.mrf.mxu0
  %v4974 = vadd.f32 0.0, %v4973
  %4975 = vmatmul.bf16.gmra.mxu0 %v2386
  %v4976 = vpop.f32.mrf.mxu0
  %v4977 = vadd.f32 0.0, %v4976
  %v4978 = vpop.f32.mrf.mxu0
  %v4979 = vadd.f32 0.0, %v4978
  %4980 = vmatmul.bf16.gmra.mxu0 %v2389
  %v4981 = vpop.f32.mrf.mxu0
  %v4982 = vadd.f32 0.0, %v4981
  %v4983 = vpop.f32.mrf.mxu0
  %v4984 = vadd.f32 0.0, %v4983
  %4985 = vmatmul.bf16.gmra.mxu0 %v2392
  %v4986 = vpop.f32.mrf.mxu0
  %v4987 = vadd.f32 0.0, %v4986
  %v4988 = vpop.f32.mrf.mxu0
  %v4989 = vadd.f32 0.0, %v4988
  %4990 = vmatmul.bf16.gmra.mxu0 %v3672
  %v4991 = vpop.f32.mrf.mxu0
  %v4992 = vadd.f32 0.0, %v4991
  %v4993 = vpop.f32.mrf.mxu0
  %v4994 = vadd.f32 0.0, %v4993
  %4995 = vmatmul.bf16.gmra.mxu0 %v4907
  %v4996 = vpop.f32.mrf.mxu0
  %v4997 = vadd.f32 0.0, %v4996
  %v4998 = vpop.f32.mrf.mxu0
  %v4999 = vadd.f32 0.0, %v4998
  %5000 = vmatmul.bf16.gmra.mxu0 %v2401
  %v5001 = vpop.f32.mrf.mxu0
  %v5002 = vadd.f32 0.0, %v5001
  %v5003 = vpop.f32.mrf.mxu0
  %v5004 = vadd.f32 0.0, %v5003
  %5005 = vmatmul.bf16.gmra.mxu0 %v2404
  %v5006 = vpop.f32.mrf.mxu0
  %v5007 = vadd.f32 0.0, %v5006
  %v5008 = vpop.f32.mrf.mxu0
  %v5009 = vadd.f32 0.0, %v5008
  %5010 = vmatmul.bf16.gmra.mxu0 %v2407
  %v5011 = vpop.f32.mrf.mxu0
  %v5012 = vadd.f32 0.0, %v5011
  %v5013 = vpop.f32.mrf.mxu0
  %v5014 = vadd.f32 0.0, %v5013
  %5015 = vmatmul.bf16.gmra.mxu0 %v2410
  %v5016 = vpop.f32.mrf.mxu0
  %v5017 = vadd.f32 0.0, %v5016
  %v5018 = vpop.f32.mrf.mxu0
  %v5019 = vadd.f32 0.0, %v5018
  %5020 = vmatmul.bf16.gmra.mxu0 %v2413
  %v5021 = vpop.f32.mrf.mxu0
  %v5022 = vadd.f32 0.0, %v5021
  %v5023 = vpop.f32.mrf.mxu0
  %v5024 = vadd.f32 0.0, %v5023
  %5025 = vmatmul.bf16.gmra.mxu0 %v2416
  %v5026 = vpop.f32.mrf.mxu0
  %v5027 = vadd.f32 0.0, %v5026
  %v5028 = vpop.f32.mrf.mxu0
  %v5029 = vadd.f32 0.0, %v5028
  %5030 = vmatmul.bf16.gmra.mxu0 %v2419
  %v5031 = vpop.f32.mrf.mxu0
  %v5032 = vadd.f32 0.0, %v5031
  %v5033 = vpop.f32.mrf.mxu0
  %v5034 = vadd.f32 0.0, %v5033
  %5035 = vmatmul.bf16.gmra.mxu0 %v2422
  %v5036 = vpop.f32.mrf.mxu0
  %v5037 = vadd.f32 0.0, %v5036
  %v5038 = vpop.f32.mrf.mxu0
  %v5039 = vadd.f32 0.0, %v5038
  %5040 = vmatmul.bf16.gmra.mxu0 %v2425
  %v5041 = vpop.f32.mrf.mxu0
  %v5042 = vadd.f32 0.0, %v5041
  %v5043 = vpop.f32.mrf.mxu0
  %v5044 = vadd.f32 0.0, %v5043
  %5045 = vmatmul.bf16.gmra.mxu0 %v2428
  %v5046 = vpop.f32.mrf.mxu0
  %v5047 = vadd.f32 0.0, %v5046
  %v5048 = vpop.f32.mrf.mxu0
  %v5049 = vadd.f32 0.0, %v5048
  %5050 = vmatmul.bf16.gmra.mxu0 %v2431
  %v5051 = vpop.f32.mrf.mxu0
  %v5052 = vadd.f32 0.0, %v5051
  %v5053 = vpop.f32.mrf.mxu0
  %v5054 = vadd.f32 0.0, %v5053
  %5055 = vmatmul.bf16.gmra.mxu0 %v2434
  %v5056 = vpop.f32.mrf.mxu0
  %v5057 = vadd.f32 0.0, %v5056
  %v5058 = vpop.f32.mrf.mxu0
  %v5059 = vadd.f32 0.0, %v5058
  %5060 = vmatmul.bf16.gmra.mxu0 %v2437
  %v5061 = vpop.f32.mrf.mxu0
  %v5062 = vadd.f32 0.0, %v5061
  %v5063 = vpop.f32.mrf.mxu0
  %v5064 = vadd.f32 0.0, %v5063
  %5065 = vmatmul.bf16.gmra.mxu0 %v2440
  %v5066 = vpop.f32.mrf.mxu0
  %v5067 = vadd.f32 0.0, %v5066
  %v5068 = vpop.f32.mrf.mxu0
  %v5069 = vadd.f32 0.0, %v5068
  %5070 = vmatmul.bf16.gmra.mxu0 %v3675
  %v5071 = vpop.f32.mrf.mxu0
  %v5072 = vadd.f32 0.0, %v5071
  %v5073 = vpop.f32.mrf.mxu0
  %v5074 = vadd.f32 0.0, %v5073
  %5075 = vmatmul.bf16.gmra.mxu0 %v4910
  %v5076 = vpop.f32.mrf.mxu0
  %v5077 = vadd.f32 0.0, %v5076
  %v5078 = vpop.f32.mrf.mxu0
  %v5079 = vadd.f32 0.0, %v5078
  %5080 = vdwg.mxu0
  %v5081 = vld [vmem:[#allocation2] sm:$0xff]
  %v5082 = vld [vmem:[#allocation2 + $0x8] sm:$0xff]
  %v5083 = vld [vmem:[#allocation2 + $0x10] sm:$0xff]
  %v5084 = vld [vmem:[#allocation2 + $0x18] sm:$0xff]
  %v5085 = vld [vmem:[#allocation2 + $0x20] sm:$0xff]
  %v5086 = vld [vmem:[#allocation2 + $0x28] sm:$0xff]
  %v5087 = vld [vmem:[#allocation2 + $0x30] sm:$0xff]
  %v5088 = vld [vmem:[#allocation2 + $0x38] sm:$0xff]
  %v5089 = vld [vmem:[#allocation2 + $0x40] sm:$0xff]
  %v5090 = vld [vmem:[#allocation2 + $0x48] sm:$0xff]
  %v5091 = vld [vmem:[#allocation2 + $0x50] sm:$0xff]
  %v5092 = vld [vmem:[#allocation2 + $0x58] sm:$0xff]
  %v5093 = vld [vmem:[#allocation2 + $0x60] sm:$0xff]
  %v5094 = vld [vmem:[#allocation2 + $0x68] sm:$0xff]
  %v5095 = vld [vmem:[#allocation2 + $0x70] sm:$0xff]
  %v5096 = vld [vmem:[#allocation2 + $0x78] sm:$0xff]
  %v5097 = vld [vmem:[#allocation2 + $0x80] sm:$0xff]
  %v5098 = vld [vmem:[#allocation2 + $0x88] sm:$0xff]
  %v5099 = vld [vmem:[#allocation2 + $0x90] sm:$0xff]
  %v5100 = vld [vmem:[#allocation2 + $0x98] sm:$0xff]
  %v5101 = vld [vmem:[#allocation2 + $0xa0] sm:$0xff]
  %v5102 = vld [vmem:[#allocation2 + $0xa8] sm:$0xff]
  %v5103 = vld [vmem:[#allocation2 + $0xb0] sm:$0xff]
  %v5104 = vld [vmem:[#allocation2 + $0xb8] sm:$0xff]
  %v5105 = vld [vmem:[#allocation2 + $0xc0] sm:$0xff]
  %v5106 = vld [vmem:[#allocation2 + $0xc8] sm:$0xff]
  %v5107 = vld [vmem:[#allocation2 + $0xd0] sm:$0xff]
  %v5108 = vld [vmem:[#allocation2 + $0xd8] sm:$0xff]
  %v5109 = vld [vmem:[#allocation2 + $0xe0] sm:$0xff]
  %v5110 = vld [vmem:[#allocation2 + $0xe8] sm:$0xff]
  %v5111 = vld [vmem:[#allocation2 + $0xf0] sm:$0xff]
  %v5112 = vld [vmem:[#allocation2 + $0xf8] sm:$0xff]
  %v5113 = vld [vmem:[#allocation2 + $0x100] sm:$0xff]
  %v5114 = vld [vmem:[#allocation2 + $0x108] sm:$0xff]
  %v5115 = vld [vmem:[#allocation2 + $0x110] sm:$0xff]
  %v5116 = vld [vmem:[#allocation2 + $0x118] sm:$0xff]
  %v5117 = vld [vmem:[#allocation2 + $0x120] sm:$0xff]
  %v5118 = vld [vmem:[#allocation2 + $0x128] sm:$0xff]
  %v5119 = vld [vmem:[#allocation2 + $0x130] sm:$0xff]
  %v5120 = vld [vmem:[#allocation2 + $0x138] sm:$0xff]
  %v5121 = vld [vmem:[#allocation2 + $0x140] sm:$0xff]
  %v5122 = vld [vmem:[#allocation2 + $0x148] sm:$0xff]
  %v5123 = vld [vmem:[#allocation2 + $0x150] sm:$0xff]
  %v5124 = vld [vmem:[#allocation2 + $0x158] sm:$0xff]
  %v5125 = vld [vmem:[#allocation2 + $0x160] sm:$0xff]
  %v5126 = vld [vmem:[#allocation2 + $0x168] sm:$0xff]
  %v5127 = vld [vmem:[#allocation2 + $0x170] sm:$0xff]
  %v5128 = vld [vmem:[#allocation2 + $0x178] sm:$0xff]
  %v5129 = vld [vmem:[#allocation2 + $0x180] sm:$0xff]
  %v5130 = vld [vmem:[#allocation2 + $0x188] sm:$0xff]
  %v5131 = vld [vmem:[#allocation2 + $0x190] sm:$0xff]
  %v5132 = vld [vmem:[#allocation2 + $0x198] sm:$0xff]
  %v5133 = vld [vmem:[#allocation2 + $0x1a0] sm:$0xff]
  %v5134 = vld [vmem:[#allocation2 + $0x1a8] sm:$0xff]
  %v5135 = vld [vmem:[#allocation2 + $0x1b0] sm:$0xff]
  %v5136 = vld [vmem:[#allocation2 + $0x1b8] sm:$0xff]
  %v5137 = vld [vmem:[#allocation2 + $0x1c0] sm:$0xff]
  %v5138 = vld [vmem:[#allocation2 + $0x1c8] sm:$0xff]
  %v5139 = vld [vmem:[#allocation2 + $0x1d0] sm:$0xff]
  %v5140 = vld [vmem:[#allocation2 + $0x1d8] sm:$0xff]
  %v5141 = vld [vmem:[#allocation2 + $0x1e0] sm:$0xff]
  %v5142 = vld [vmem:[#allocation2 + $0x1e8] sm:$0xff]
  %v5143 = vld [vmem:[#allocation2 + $0x1f0] sm:$0xff]
  %v5144 = vld [vmem:[#allocation2 + $0x1f8] sm:$0xff]
  %v5145 = vadd.f32 %v5081, %v4922
  %v5146 = vadd.f32 %v5082, %v4924
  %v5147 = vadd.f32 %v5083, %v4927
  %v5148 = vadd.f32 %v5084, %v4929
  %v5149 = vadd.f32 %v5085, %v4932
  %v5150 = vadd.f32 %v5086, %v4934
  %v5151 = vadd.f32 %v5087, %v4937
  %v5152 = vadd.f32 %v5088, %v4939
  %v5153 = vadd.f32 %v5089, %v4942
  %v5154 = vadd.f32 %v5090, %v4944
  %v5155 = vadd.f32 %v5091, %v4947
  %v5156 = vadd.f32 %v5092, %v4949
  %v5157 = vadd.f32 %v5093, %v4952
  %v5158 = vadd.f32 %v5094, %v4954
  %v5159 = vadd.f32 %v5095, %v4957
  %v5160 = vadd.f32 %v5096, %v4959
  %v5161 = vadd.f32 %v5097, %v4962
  %v5162 = vadd.f32 %v5098, %v4964
  %v5163 = vadd.f32 %v5099, %v4967
  %v5164 = vadd.f32 %v5100, %v4969
  %v5165 = vadd.f32 %v5101, %v4972
  %v5166 = vadd.f32 %v5102, %v4974
  %v5167 = vadd.f32 %v5103, %v4977
  %v5168 = vadd.f32 %v5104, %v4979
  %v5169 = vadd.f32 %v5105, %v4982
  %v5170 = vadd.f32 %v5106, %v4984
  %v5171 = vadd.f32 %v5107, %v4987
  %v5172 = vadd.f32 %v5108, %v4989
  %v5173 = vadd.f32 %v5109, %v4992
  %v5174 = vadd.f32 %v5110, %v4994
  %v5175 = vadd.f32 %v5111, %v4997
  %v5176 = vadd.f32 %v5112, %v4999
  %v5177 = vadd.f32 %v5113, %v5002
  %v5178 = vadd.f32 %v5114, %v5004
  %v5179 = vadd.f32 %v5115, %v5007
  %v5180 = vadd.f32 %v5116, %v5009
  %v5181 = vadd.f32 %v5117, %v5012
  %v5182 = vadd.f32 %v5118, %v5014
  %v5183 = vadd.f32 %v5119, %v5017
  %v5184 = vadd.f32 %v5120, %v5019
  %v5185 = vadd.f32 %v5121, %v5022
  %v5186 = vadd.f32 %v5122, %v5024
  %v5187 = vadd.f32 %v5123, %v5027
  %v5188 = vadd.f32 %v5124, %v5029
  %v5189 = vadd.f32 %v5125, %v5032
  %v5190 = vadd.f32 %v5126, %v5034
  %v5191 = vadd.f32 %v5127, %v5037
  %v5192 = vadd.f32 %v5128, %v5039
  %v5193 = vadd.f32 %v5129, %v5042
  %v5194 = vadd.f32 %v5130, %v5044
  %v5195 = vadd.f32 %v5131, %v5047
  %v5196 = vadd.f32 %v5132, %v5049
  %v5197 = vadd.f32 %v5133, %v5052
  %v5198 = vadd.f32 %v5134, %v5054
  %v5199 = vadd.f32 %v5135, %v5057
  %v5200 = vadd.f32 %v5136, %v5059
  %v5201 = vadd.f32 %v5137, %v5062
  %v5202 = vadd.f32 %v5138, %v5064
  %v5203 = vadd.f32 %v5139, %v5067
  %v5204 = vadd.f32 %v5140, %v5069
  %v5205 = vadd.f32 %v5141, %v5072
  %v5206 = vadd.f32 %v5142, %v5074
  %v5207 = vadd.f32 %v5143, %v5077
  %v5208 = vadd.f32 %v5144, %v5079
  %5209 = vst [vmem:[#allocation2] sm:$0xff] %v5145
  %5210 = vst [vmem:[#allocation2 + $0x8] sm:$0xff] %v5146
  %5211 = vst [vmem:[#allocation2 + $0x10] sm:$0xff] %v5147
  %5212 = vst [vmem:[#allocation2 + $0x18] sm:$0xff] %v5148
  %5213 = vst [vmem:[#allocation2 + $0x20] sm:$0xff] %v5149
  %5214 = vst [vmem:[#allocation2 + $0x28] sm:$0xff] %v5150
  %5215 = vst [vmem:[#allocation2 + $0x30] sm:$0xff] %v5151
  %5216 = vst [vmem:[#allocation2 + $0x38] sm:$0xff] %v5152
  %5217 = vst [vmem:[#allocation2 + $0x40] sm:$0xff] %v5153
  %5218 = vst [vmem:[#allocation2 + $0x48] sm:$0xff] %v5154
  %5219 = vst [vmem:[#allocation2 + $0x50] sm:$0xff] %v5155
  %5220 = vst [vmem:[#allocation2 + $0x58] sm:$0xff] %v5156
  %5221 = vst [vmem:[#allocation2 + $0x60] sm:$0xff] %v5157
  %5222 = vst [vmem:[#allocation2 + $0x68] sm:$0xff] %v5158
  %5223 = vst [vmem:[#allocation2 + $0x70] sm:$0xff] %v5159
  %5224 = vst [vmem:[#allocation2 + $0x78] sm:$0xff] %v5160
  %5225 = vst [vmem:[#allocation2 + $0x80] sm:$0xff] %v5161
  %5226 = vst [vmem:[#allocation2 + $0x88] sm:$0xff] %v5162
  %5227 = vst [vmem:[#allocation2 + $0x90] sm:$0xff] %v5163
  %5228 = vst [vmem:[#allocation2 + $0x98] sm:$0xff] %v5164
  %5229 = vst [vmem:[#allocation2 + $0xa0] sm:$0xff] %v5165
  %5230 = vst [vmem:[#allocation2 + $0xa8] sm:$0xff] %v5166
  %5231 = vst [vmem:[#allocation2 + $0xb0] sm:$0xff] %v5167
  %5232 = vst [vmem:[#allocation2 + $0xb8] sm:$0xff] %v5168
  %5233 = vst [vmem:[#allocation2 + $0xc0] sm:$0xff] %v5169
  %5234 = vst [vmem:[#allocation2 + $0xc8] sm:$0xff] %v5170
  %5235 = vst [vmem:[#allocation2 + $0xd0] sm:$0xff] %v5171
  %5236 = vst [vmem:[#allocation2 + $0xd8] sm:$0xff] %v5172
  %5237 = vst [vmem:[#allocation2 + $0xe0] sm:$0xff] %v5173
  %5238 = vst [vmem:[#allocation2 + $0xe8] sm:$0xff] %v5174
  %5239 = vst [vmem:[#allocation2 + $0xf0] sm:$0xff] %v5175
  %5240 = vst [vmem:[#allocation2 + $0xf8] sm:$0xff] %v5176
  %5241 = vst [vmem:[#allocation2 + $0x100] sm:$0xff] %v5177
  %5242 = vst [vmem:[#allocation2 + $0x108] sm:$0xff] %v5178
  %5243 = vst [vmem:[#allocation2 + $0x110] sm:$0xff] %v5179
  %5244 = vst [vmem:[#allocation2 + $0x118] sm:$0xff] %v5180
  %5245 = vst [vmem:[#allocation2 + $0x120] sm:$0xff] %v5181
  %5246 = vst [vmem:[#allocation2 + $0x128] sm:$0xff] %v5182
  %5247 = vst [vmem:[#allocation2 + $0x130] sm:$0xff] %v5183
  %5248 = vst [vmem:[#allocation2 + $0x138] sm:$0xff] %v5184
  %5249 = vst [vmem:[#allocation2 + $0x140] sm:$0xff] %v5185
  %5250 = vst [vmem:[#allocation2 + $0x148] sm:$0xff] %v5186
  %5251 = vst [vmem:[#allocation2 + $0x150] sm:$0xff] %v5187
  %5252 = vst [vmem:[#allocation2 + $0x158] sm:$0xff] %v5188
  %5253 = vst [vmem:[#allocation2 + $0x160] sm:$0xff] %v5189
  %5254 = vst [vmem:[#allocation2 + $0x168] sm:$0xff] %v5190
  %5255 = vst [vmem:[#allocation2 + $0x170] sm:$0xff] %v5191
  %5256 = vst [vmem:[#allocation2 + $0x178] sm:$0xff] %v5192
  %5257 = vst [vmem:[#allocation2 + $0x180] sm:$0xff] %v5193
  %5258 = vst [vmem:[#allocation2 + $0x188] sm:$0xff] %v5194
  %5259 = vst [vmem:[#allocation2 + $0x190] sm:$0xff] %v5195
  %5260 = vst [vmem:[#allocation2 + $0x198] sm:$0xff] %v5196
  %5261 = vst [vmem:[#allocation2 + $0x1a0] sm:$0xff] %v5197
  %5262 = vst [vmem:[#allocation2 + $0x1a8] sm:$0xff] %v5198
  %5263 = vst [vmem:[#allocation2 + $0x1b0] sm:$0xff] %v5199
  %5264 = vst [vmem:[#allocation2 + $0x1b8] sm:$0xff] %v5200
  %5265 = vst [vmem:[#allocation2 + $0x1c0] sm:$0xff] %v5201
  %5266 = vst [vmem:[#allocation2 + $0x1c8] sm:$0xff] %v5202
  %5267 = vst [vmem:[#allocation2 + $0x1d0] sm:$0xff] %v5203
  %5268 = vst [vmem:[#allocation2 + $0x1d8] sm:$0xff] %v5204
  %5269 = vst [vmem:[#allocation2 + $0x1e0] sm:$0xff] %v5205
  %5270 = vst [vmem:[#allocation2 + $0x1e8] sm:$0xff] %v5206
  %5271 = vst [vmem:[#allocation2 + $0x1f0] sm:$0xff] %v5207
  %5272 = vst [vmem:[#allocation2 + $0x1f8] sm:$0xff] %v5208
  %v5273 = vld [vmem:[#allocation2] sm:$0xff]
  %v5274 = vld [vmem:[#allocation2 + $0x8] sm:$0xff]
  %v5275 = vld [vmem:[#allocation2 + $0x10] sm:$0xff]
  %v5276 = vld [vmem:[#allocation2 + $0x18] sm:$0xff]
  %v5277 = vld [vmem:[#allocation2 + $0x20] sm:$0xff]
  %v5278 = vld [vmem:[#allocation2 + $0x28] sm:$0xff]
  %v5279 = vld [vmem:[#allocation2 + $0x30] sm:$0xff]
  %v5280 = vld [vmem:[#allocation2 + $0x38] sm:$0xff]
  %v5281 = vld [vmem:[#allocation2 + $0x40] sm:$0xff]
  %v5282 = vld [vmem:[#allocation2 + $0x48] sm:$0xff]
  %v5283 = vld [vmem:[#allocation2 + $0x50] sm:$0xff]
  %v5284 = vld [vmem:[#allocation2 + $0x58] sm:$0xff]
  %v5285 = vld [vmem:[#allocation2 + $0x60] sm:$0xff]
  %v5286 = vld [vmem:[#allocation2 + $0x68] sm:$0xff]
  %v5287 = vld [vmem:[#allocation2 + $0x70] sm:$0xff]
  %v5288 = vld [vmem:[#allocation2 + $0x78] sm:$0xff]
  %v5289 = vld [vmem:[#allocation2 + $0x80] sm:$0xff]
  %v5290 = vld [vmem:[#allocation2 + $0x88] sm:$0xff]
  %v5291 = vld [vmem:[#allocation2 + $0x90] sm:$0xff]
  %v5292 = vld [vmem:[#allocation2 + $0x98] sm:$0xff]
  %v5293 = vld [vmem:[#allocation2 + $0xa0] sm:$0xff]
  %v5294 = vld [vmem:[#allocation2 + $0xa8] sm:$0xff]
  %v5295 = vld [vmem:[#allocation2 + $0xb0] sm:$0xff]
  %v5296 = vld [vmem:[#allocation2 + $0xb8] sm:$0xff]
  %v5297 = vld [vmem:[#allocation2 + $0xc0] sm:$0xff]
  %v5298 = vld [vmem:[#allocation2 + $0xc8] sm:$0xff]
  %v5299 = vld [vmem:[#allocation2 + $0xd0] sm:$0xff]
  %v5300 = vld [vmem:[#allocation2 + $0xd8] sm:$0xff]
  %v5301 = vld [vmem:[#allocation2 + $0xe0] sm:$0xff]
  %v5302 = vld [vmem:[#allocation2 + $0xe8] sm:$0xff]
  %v5303 = vld [vmem:[#allocation2 + $0xf0] sm:$0xff]
  %v5304 = vld [vmem:[#allocation2 + $0xf8] sm:$0xff]
  %v5305 = vld [vmem:[#allocation2 + $0x100] sm:$0xff]
  %v5306 = vld [vmem:[#allocation2 + $0x108] sm:$0xff]
  %v5307 = vld [vmem:[#allocation2 + $0x110] sm:$0xff]
  %v5308 = vld [vmem:[#allocation2 + $0x118] sm:$0xff]
  %v5309 = vld [vmem:[#allocation2 + $0x120] sm:$0xff]
  %v5310 = vld [vmem:[#allocation2 + $0x128] sm:$0xff]
  %v5311 = vld [vmem:[#allocation2 + $0x130] sm:$0xff]
  %v5312 = vld [vmem:[#allocation2 + $0x138] sm:$0xff]
  %v5313 = vld [vmem:[#allocation2 + $0x140] sm:$0xff]
  %v5314 = vld [vmem:[#allocation2 + $0x148] sm:$0xff]
  %v5315 = vld [vmem:[#allocation2 + $0x150] sm:$0xff]
  %v5316 = vld [vmem:[#allocation2 + $0x158] sm:$0xff]
  %v5317 = vld [vmem:[#allocation2 + $0x160] sm:$0xff]
  %v5318 = vld [vmem:[#allocation2 + $0x168] sm:$0xff]
  %v5319 = vld [vmem:[#allocation2 + $0x170] sm:$0xff]
  %v5320 = vld [vmem:[#allocation2 + $0x178] sm:$0xff]
  %v5321 = vld [vmem:[#allocation2 + $0x180] sm:$0xff]
  %v5322 = vld [vmem:[#allocation2 + $0x188] sm:$0xff]
  %v5323 = vld [vmem:[#allocation2 + $0x190] sm:$0xff]
  %v5324 = vld [vmem:[#allocation2 + $0x198] sm:$0xff]
  %v5325 = vld [vmem:[#allocation2 + $0x1a0] sm:$0xff]
  %v5326 = vld [vmem:[#allocation2 + $0x1a8] sm:$0xff]
  %v5327 = vld [vmem:[#allocation2 + $0x1b0] sm:$0xff]
  %v5328 = vld [vmem:[#allocation2 + $0x1b8] sm:$0xff]
  %v5329 = vld [vmem:[#allocation2 + $0x1c0] sm:$0xff]
  %v5330 = vld [vmem:[#allocation2 + $0x1c8] sm:$0xff]
  %v5331 = vld [vmem:[#allocation2 + $0x1d0] sm:$0xff]
  %v5332 = vld [vmem:[#allocation2 + $0x1d8] sm:$0xff]
  %v5333 = vld [vmem:[#allocation2 + $0x1e0] sm:$0xff]
  %v5334 = vld [vmem:[#allocation2 + $0x1e8] sm:$0xff]
  %v5335 = vld [vmem:[#allocation2 + $0x1f0] sm:$0xff]
  %v5336 = vld [vmem:[#allocation2 + $0x1f8] sm:$0xff]
  %v5337 = vld [vmem:[%s2] sm:$0x1]
  %v5339 = vperm.slane %v5337, 0
  %v5341 = vadd.f32 %v5273, %v5339
  %v5342 = vadd.f32 %v5274, %v5339
  %v5343 = vadd.f32 %v5275, %v5339
  %v5344 = vadd.f32 %v5276, %v5339
  %v5345 = vadd.f32 %v5277, %v5339
  %v5346 = vadd.f32 %v5278, %v5339
  %v5347 = vadd.f32 %v5279, %v5339
  %v5348 = vadd.f32 %v5280, %v5339
  %v5349 = vadd.f32 %v5281, %v5339
  %v5350 = vadd.f32 %v5282, %v5339
  %v5351 = vadd.f32 %v5283, %v5339
  %v5352 = vadd.f32 %v5284, %v5339
  %v5353 = vadd.f32 %v5285, %v5339
  %v5354 = vadd.f32 %v5286, %v5339
  %v5355 = vadd.f32 %v5287, %v5339
  %v5356 = vadd.f32 %v5288, %v5339
  %v5357 = vadd.f32 %v5289, %v5339
  %v5358 = vadd.f32 %v5290, %v5339
  %v5359 = vadd.f32 %v5291, %v5339
  %v5360 = vadd.f32 %v5292, %v5339
  %v5361 = vadd.f32 %v5293, %v5339
  %v5362 = vadd.f32 %v5294, %v5339
  %v5363 = vadd.f32 %v5295, %v5339
  %v5364 = vadd.f32 %v5296, %v5339
  %v5365 = vadd.f32 %v5297, %v5339
  %v5366 = vadd.f32 %v5298, %v5339
  %v5367 = vadd.f32 %v5299, %v5339
  %v5368 = vadd.f32 %v5300, %v5339
  %v5369 = vadd.f32 %v5301, %v5339
  %v5370 = vadd.f32 %v5302, %v5339
  %v5371 = vadd.f32 %v5303, %v5339
  %v5372 = vadd.f32 %v5304, %v5339
  %v5373 = vadd.f32 %v5305, %v5339
  %v5374 = vadd.f32 %v5306, %v5339
  %v5375 = vadd.f32 %v5307, %v5339
  %v5376 = vadd.f32 %v5308, %v5339
  %v5377 = vadd.f32 %v5309, %v5339
  %v5378 = vadd.f32 %v5310, %v5339
  %v5379 = vadd.f32 %v5311, %v5339
  %v5380 = vadd.f32 %v5312, %v5339
  %v5381 = vadd.f32 %v5313, %v5339
  %v5382 = vadd.f32 %v5314, %v5339
  %v5383 = vadd.f32 %v5315, %v5339
  %v5384 = vadd.f32 %v5316, %v5339
  %v5385 = vadd.f32 %v5317, %v5339
  %v5386 = vadd.f32 %v5318, %v5339
  %v5387 = vadd.f32 %v5319, %v5339
  %v5388 = vadd.f32 %v5320, %v5339
  %v5389 = vadd.f32 %v5321, %v5339
  %v5390 = vadd.f32 %v5322, %v5339
  %v5391 = vadd.f32 %v5323, %v5339
  %v5392 = vadd.f32 %v5324, %v5339
  %v5393 = vadd.f32 %v5325, %v5339
  %v5394 = vadd.f32 %v5326, %v5339
  %v5395 = vadd.f32 %v5327, %v5339
  %v5396 = vadd.f32 %v5328, %v5339
  %v5397 = vadd.f32 %v5329, %v5339
  %v5398 = vadd.f32 %v5330, %v5339
  %v5399 = vadd.f32 %v5331, %v5339
  %v5400 = vadd.f32 %v5332, %v5339
  %v5401 = vadd.f32 %v5333, %v5339
  %v5402 = vadd.f32 %v5334, %v5339
  %v5403 = vadd.f32 %v5335, %v5339
  %v5404 = vadd.f32 %v5336, %v5339
  %v5405 = vadd.f32 %v5341, %v5342
  %v5406 = vadd.f32 %v5405, %v5343
  %v5407 = vadd.f32 %v5406, %v5344
  %v5408 = vadd.f32 %v5407, %v5345
  %v5409 = vadd.f32 %v5408, %v5346
  %v5410 = vadd.f32 %v5409, %v5347
  %v5411 = vadd.f32 %v5410, %v5348
  %v5412 = vadd.f32 %v5411, %v5349
  %v5413 = vadd.f32 %v5412, %v5350
  %v5414 = vadd.f32 %v5413, %v5351
  %v5415 = vadd.f32 %v5414, %v5352
  %v5416 = vadd.f32 %v5415, %v5353
  %v5417 = vadd.f32 %v5416, %v5354
  %v5418 = vadd.f32 %v5417, %v5355
  %v5419 = vadd.f32 %v5418, %v5356
  %v5420 = vadd.f32 %v5419, %v5357
  %v5421 = vadd.f32 %v5420, %v5358
  %v5422 = vadd.f32 %v5421, %v5359
  %v5423 = vadd.f32 %v5422, %v5360
  %v5424 = vadd.f32 %v5423, %v5361
  %v5425 = vadd.f32 %v5424, %v5362
  %v5426 = vadd.f32 %v5425, %v5363
  %v5427 = vadd.f32 %v5426, %v5364
  %v5428 = vadd.f32 %v5427, %v5365
  %v5429 = vadd.f32 %v5428, %v5366
  %v5430 = vadd.f32 %v5429, %v5367
  %v5431 = vadd.f32 %v5430, %v5368
  %v5432 = vadd.f32 %v5431, %v5369
  %v5433 = vadd.f32 %v5432, %v5370
  %v5434 = vadd.f32 %v5433, %v5371
  %v5435 = vadd.f32 %v5434, %v5372
  %v5436 = vadd.f32 %v5435, %v5373
  %v5437 = vadd.f32 %v5436, %v5374
  %v5438 = vadd.f32 %v5437, %v5375
  %v5439 = vadd.f32 %v5438, %v5376
  %v5440 = vadd.f32 %v5439, %v5377
  %v5441 = vadd.f32 %v5440, %v5378
  %v5442 = vadd.f32 %v5441, %v5379
  %v5443 = vadd.f32 %v5442, %v5380
  %v5444 = vadd.f32 %v5443, %v5381
  %v5445 = vadd.f32 %v5444, %v5382
  %v5446 = vadd.f32 %v5445, %v5383
  %v5447 = vadd.f32 %v5446, %v5384
  %v5448 = vadd.f32 %v5447, %v5385
  %v5449 = vadd.f32 %v5448, %v5386
  %v5450 = vadd.f32 %v5449, %v5387
  %v5451 = vadd.f32 %v5450, %v5388
  %v5452 = vadd.f32 %v5451, %v5389
  %v5453 = vadd.f32 %v5452, %v5390
  %v5454 = vadd.f32 %v5453, %v5391
  %v5455 = vadd.f32 %v5454, %v5392
  %v5456 = vadd.f32 %v5455, %v5393
  %v5457 = vadd.f32 %v5456, %v5394
  %v5458 = vadd.f32 %v5457, %v5395
  %v5459 = vadd.f32 %v5458, %v5396
  %v5460 = vadd.f32 %v5459, %v5397
  %v5461 = vadd.f32 %v5460, %v5398
  %v5462 = vadd.f32 %v5461, %v5399
  %v5463 = vadd.f32 %v5462, %v5400
  %v5464 = vadd.f32 %v5463, %v5401
  %v5465 = vadd.f32 %v5464, %v5402
  %v5466 = vadd.f32 %v5465, %v5403
  %v5467 = vadd.f32 %v5466, %v5404
  %v5468 = vrot.slane %v5467, 4
  %v5469 = vadd.f32 %v5467, %v5468
  %v5470 = vrot.slane %v5469, 2
  %v5471 = vadd.f32 %v5469, %v5470
  %v5472 = vrot.slane %v5471, 1
  %v5473 = vadd.f32 %v5471, %v5472
  %v5474 = vrcp.pop 512.0
  %v5475 = vmul.f32 512.0, %v5474
  %v5476 = vsub.f32 1.0, %v5475
  %v5477 = vmul.f32 %v5474, %v5476
  %v5478 = vadd.f32 %v5474, %v5477
  %vm5479 = vweird.f32 %v5474
  %v5480 = vsel %vm5479, %v5474, %v5478
  %v5481 = vmul.f32 %v5473, %v5480
  %v5482 = vsub.f32 %v5341, %v5481
  %v5483 = vsub.f32 %v5342, %v5481
  %v5484 = vsub.f32 %v5343, %v5481
  %v5485 = vsub.f32 %v5344, %v5481
  %v5486 = vsub.f32 %v5345, %v5481
  %v5487 = vsub.f32 %v5346, %v5481
  %v5488 = vsub.f32 %v5347, %v5481
  %v5489 = vsub.f32 %v5348, %v5481
  %v5490 = vsub.f32 %v5349, %v5481
  %v5491 = vsub.f32 %v5350, %v5481
  %v5492 = vsub.f32 %v5351, %v5481
  %v5493 = vsub.f32 %v5352, %v5481
  %v5494 = vsub.f32 %v5353, %v5481
  %v5495 = vsub.f32 %v5354, %v5481
  %v5496 = vsub.f32 %v5355, %v5481
  %v5497 = vsub.f32 %v5356, %v5481
  %v5498 = vsub.f32 %v5357, %v5481
  %v5499 = vsub.f32 %v5358, %v5481
  %v5500 = vsub.f32 %v5359, %v5481
  %v5501 = vsub.f32 %v5360, %v5481
  %v5502 = vsub.f32 %v5361, %v5481
  %v5503 = vsub.f32 %v5362, %v5481
  %v5504 = vsub.f32 %v5363, %v5481
  %v5505 = vsub.f32 %v5364, %v5481
  %v5506 = vsub.f32 %v5365, %v5481
  %v5507 = vsub.f32 %v5366, %v5481
  %v5508 = vsub.f32 %v5367, %v5481
  %v5509 = vsub.f32 %v5368, %v5481
  %v5510 = vsub.f32 %v5369, %v5481
  %v5511 = vsub.f32 %v5370, %v5481
  %v5512 = vsub.f32 %v5371, %v5481
  %v5513 = vsub.f32 %v5372, %v5481
  %v5514 = vsub.f32 %v5373, %v5481
  %v5515 = vsub.f32 %v5374, %v5481
  %v5516 = vsub.f32 %v5375, %v5481
  %v5517 = vsub.f32 %v5376, %v5481
  %v5518 = vsub.f32 %v5377, %v5481
  %v5519 = vsub.f32 %v5378, %v5481
  %v5520 = vsub.f32 %v5379, %v5481
  %v5521 = vsub.f32 %v5380, %v5481
  %v5522 = vsub.f32 %v5381, %v5481
  %v5523 = vsub.f32 %v5382, %v5481
  %v5524 = vsub.f32 %v5383, %v5481
  %v5525 = vsub.f32 %v5384, %v5481
  %v5526 = vsub.f32 %v5385, %v5481
  %v5527 = vsub.f32 %v5386, %v5481
  %v5528 = vsub.f32 %v5387, %v5481
  %v5529 = vsub.f32 %v5388, %v5481
  %v5530 = vsub.f32 %v5389, %v5481
  %v5531 = vsub.f32 %v5390, %v5481
  %v5532 = vsub.f32 %v5391, %v5481
  %v5533 = vsub.f32 %v5392, %v5481
  %v5534 = vsub.f32 %v5393, %v5481
  %v5535 = vsub.f32 %v5394, %v5481
  %v5536 = vsub.f32 %v5395, %v5481
  %v5537 = vsub.f32 %v5396, %v5481
  %v5538 = vsub.f32 %v5397, %v5481
  %v5539 = vsub.f32 %v5398, %v5481
  %v5540 = vsub.f32 %v5399, %v5481
  %v5541 = vsub.f32 %v5400, %v5481
  %v5542 = vsub.f32 %v5401, %v5481
  %v5543 = vsub.f32 %v5402, %v5481
  %v5544 = vsub.f32 %v5403, %v5481
  %v5545 = vsub.f32 %v5404, %v5481
  %v5546 = vmul.f32 %v5482, %v5482
  %v5547 = vmul.f32 %v5483, %v5483
  %v5548 = vmul.f32 %v5484, %v5484
  %v5549 = vmul.f32 %v5485, %v5485
  %v5550 = vmul.f32 %v5486, %v5486
  %v5551 = vmul.f32 %v5487, %v5487
  %v5552 = vmul.f32 %v5488, %v5488
  %v5553 = vmul.f32 %v5489, %v5489
  %v5554 = vmul.f32 %v5490, %v5490
  %v5555 = vmul.f32 %v5491, %v5491
  %v5556 = vmul.f32 %v5492, %v5492
  %v5557 = vmul.f32 %v5493, %v5493
  %v5558 = vmul.f32 %v5494, %v5494
  %v5559 = vmul.f32 %v5495, %v5495
  %v5560 = vmul.f32 %v5496, %v5496
  %v5561 = vmul.f32 %v5497, %v5497
  %v5562 = vmul.f32 %v5498, %v5498
  %v5563 = vmul.f32 %v5499, %v5499
  %v5564 = vmul.f32 %v5500, %v5500
  %v5565 = vmul.f32 %v5501, %v5501
  %v5566 = vmul.f32 %v5502, %v5502
  %v5567 = vmul.f32 %v5503, %v5503
  %v5568 = vmul.f32 %v5504, %v5504
  %v5569 = vmul.f32 %v5505, %v5505
  %v5570 = vmul.f32 %v5506, %v5506
  %v5571 = vmul.f32 %v5507, %v5507
  %v5572 = vmul.f32 %v5508, %v5508
  %v5573 = vmul.f32 %v5509, %v5509
  %v5574 = vmul.f32 %v5510, %v5510
  %v5575 = vmul.f32 %v5511, %v5511
  %v5576 = vmul.f32 %v5512, %v5512
  %v5577 = vmul.f32 %v5513, %v5513
  %v5578 = vmul.f32 %v5514, %v5514
  %v5579 = vmul.f32 %v5515, %v5515
  %v5580 = vmul.f32 %v5516, %v5516
  %v5581 = vmul.f32 %v5517, %v5517
  %v5582 = vmul.f32 %v5518, %v5518
  %v5583 = vmul.f32 %v5519, %v5519
  %v5584 = vmul.f32 %v5520, %v5520
  %v5585 = vmul.f32 %v5521, %v5521
  %v5586 = vmul.f32 %v5522, %v5522
  %v5587 = vmul.f32 %v5523, %v5523
  %v5588 = vmul.f32 %v5524, %v5524
  %v5589 = vmul.f32 %v5525, %v5525
  %v5590 = vmul.f32 %v5526, %v5526
  %v5591 = vmul.f32 %v5527, %v5527
  %v5592 = vmul.f32 %v5528, %v5528
  %v5593 = vmul.f32 %v5529, %v5529
  %v5594 = vmul.f32 %v5530, %v5530
  %v5595 = vmul.f32 %v5531, %v5531
  %v5596 = vmul.f32 %v5532, %v5532
  %v5597 = vmul.f32 %v5533, %v5533
  %v5598 = vmul.f32 %v5534, %v5534
  %v5599 = vmul.f32 %v5535, %v5535
  %v5600 = vmul.f32 %v5536, %v5536
  %v5601 = vmul.f32 %v5537, %v5537
  %v5602 = vmul.f32 %v5538, %v5538
  %v5603 = vmul.f32 %v5539, %v5539
  %v5604 = vmul.f32 %v5540, %v5540
  %v5605 = vmul.f32 %v5541, %v5541
  %v5606 = vmul.f32 %v5542, %v5542
  %v5607 = vmul.f32 %v5543, %v5543
  %v5608 = vmul.f32 %v5544, %v5544
  %v5609 = vmul.f32 %v5545, %v5545
  %v5610 = vadd.f32 %v5546, %v5547
  %v5611 = vadd.f32 %v5610, %v5548
  %v5612 = vadd.f32 %v5611, %v5549
  %v5613 = vadd.f32 %v5612, %v5550
  %v5614 = vadd.f32 %v5613, %v5551
  %v5615 = vadd.f32 %v5614, %v5552
  %v5616 = vadd.f32 %v5615, %v5553
  %v5617 = vadd.f32 %v5616, %v5554
  %v5618 = vadd.f32 %v5617, %v5555
  %v5619 = vadd.f32 %v5618, %v5556
  %v5620 = vadd.f32 %v5619, %v5557
  %v5621 = vadd.f32 %v5620, %v5558
  %v5622 = vadd.f32 %v5621, %v5559
  %v5623 = vadd.f32 %v5622, %v5560
  %v5624 = vadd.f32 %v5623, %v5561
  %v5625 = vadd.f32 %v5624, %v5562
  %v5626 = vadd.f32 %v5625, %v5563
  %v5627 = vadd.f32 %v5626, %v5564
  %v5628 = vadd.f32 %v5627, %v5565
  %v5629 = vadd.f32 %v5628, %v5566
  %v5630 = vadd.f32 %v5629, %v5567
  %v5631 = vadd.f32 %v5630, %v5568
  %v5632 = vadd.f32 %v5631, %v5569
  %v5633 = vadd.f32 %v5632, %v5570
  %v5634 = vadd.f32 %v5633, %v5571
  %v5635 = vadd.f32 %v5634, %v5572
  %v5636 = vadd.f32 %v5635, %v5573
  %v5637 = vadd.f32 %v5636, %v5574
  %v5638 = vadd.f32 %v5637, %v5575
  %v5639 = vadd.f32 %v5638, %v5576
  %v5640 = vadd.f32 %v5639, %v5577
  %v5641 = vadd.f32 %v5640, %v5578
  %v5642 = vadd.f32 %v5641, %v5579
  %v5643 = vadd.f32 %v5642, %v5580
  %v5644 = vadd.f32 %v5643, %v5581
  %v5645 = vadd.f32 %v5644, %v5582
  %v5646 = vadd.f32 %v5645, %v5583
  %v5647 = vadd.f32 %v5646, %v5584
  %v5648 = vadd.f32 %v5647, %v5585
  %v5649 = vadd.f32 %v5648, %v5586
  %v5650 = vadd.f32 %v5649, %v5587
  %v5651 = vadd.f32 %v5650, %v5588
  %v5652 = vadd.f32 %v5651, %v5589
  %v5653 = vadd.f32 %v5652, %v5590
  %v5654 = vadd.f32 %v5653, %v5591
  %v5655 = vadd.f32 %v5654, %v5592
  %v5656 = vadd.f32 %v5655, %v5593
  %v5657 = vadd.f32 %v5656, %v5594
  %v5658 = vadd.f32 %v5657, %v5595
  %v5659 = vadd.f32 %v5658, %v5596
  %v5660 = vadd.f32 %v5659, %v5597
  %v5661 = vadd.f32 %v5660, %v5598
  %v5662 = vadd.f32 %v5661, %v5599
  %v5663 = vadd.f32 %v5662, %v5600
  %v5664 = vadd.f32 %v5663, %v5601
  %v5665 = vadd.f32 %v5664, %v5602
  %v5666 = vadd.f32 %v5665, %v5603
  %v5667 = vadd.f32 %v5666, %v5604
  %v5668 = vadd.f32 %v5667, %v5605
  %v5669 = vadd.f32 %v5668, %v5606
  %v5670 = vadd.f32 %v5669, %v5607
  %v5671 = vadd.f32 %v5670, %v5608
  %v5672 = vadd.f32 %v5671, %v5609
  %v5673 = vrot.slane %v5672, 4
  %v5674 = vadd.f32 %v5672, %v5673
  %v5675 = vrot.slane %v5674, 2
  %v5676 = vadd.f32 %v5674, %v5675
  %v5677 = vrot.slane %v5676, 1
  %v5678 = vadd.f32 %v5676, %v5677
  %v5679 = vmul.f32 %v5678, %v5480
  %v5680 = vld [vmem:[%s3] sm:$0x1]
  %v5681 = vadd.f32 %v5679, 1e-05
  %v5682 = vrsqrt.pop %v5681
  %v5683 = vmul.f32 %v5682, %v5681
  %v5684 = vmul.f32 %v5683, %v5682
  %v5685 = vmul.f32 0.5, %v5684
  %v5686 = vsub.f32 1.5, %v5685
  %v5687 = vmul.f32 %v5682, %v5686
  %vm5688 = vweird.f32 %v5681
  %vm5689 = vweird.f32 %v5682
  %vm5690 = vmor %vm5688, %vm5689
  %v5691 = vsel %vm5690, %v5682, %v5687
  %v5692 = vmul.f32 %v5680, %v5691
  %v5693 = vld [vmem:[%s4] sm:$0x1]
  %v5694 = vmul.f32 %v5481, %v5692
  %v5695 = vsub.f32 %v5693, %v5694
  %v5697 = vperm.slane %v5692, 0
  %v5699 = vmul.f32 %v5341, %v5697
  %v5700 = vmul.f32 %v5342, %v5697
  %v5701 = vmul.f32 %v5343, %v5697
  %v5702 = vmul.f32 %v5344, %v5697
  %v5703 = vmul.f32 %v5345, %v5697
  %v5704 = vmul.f32 %v5346, %v5697
  %v5705 = vmul.f32 %v5347, %v5697
  %v5706 = vmul.f32 %v5348, %v5697
  %v5707 = vmul.f32 %v5349, %v5697
  %v5708 = vmul.f32 %v5350, %v5697
  %v5709 = vmul.f32 %v5351, %v5697
  %v5710 = vmul.f32 %v5352, %v5697
  %v5711 = vmul.f32 %v5353, %v5697
  %v5712 = vmul.f32 %v5354, %v5697
  %v5713 = vmul.f32 %v5355, %v5697
  %v5714 = vmul.f32 %v5356, %v5697
  %v5715 = vmul.f32 %v5357, %v5697
  %v5716 = vmul.f32 %v5358, %v5697
  %v5717 = vmul.f32 %v5359, %v5697
  %v5718 = vmul.f32 %v5360, %v5697
  %v5719 = vmul.f32 %v5361, %v5697
  %v5720 = vmul.f32 %v5362, %v5697
  %v5721 = vmul.f32 %v5363, %v5697
  %v5722 = vmul.f32 %v5364, %v5697
  %v5723 = vmul.f32 %v5365, %v5697
  %v5724 = vmul.f32 %v5366, %v5697
  %v5725 = vmul.f32 %v5367, %v5697
  %v5726 = vmul.f32 %v5368, %v5697
  %v5727 = vmul.f32 %v5369, %v5697
  %v5728 = vmul.f32 %v5370, %v5697
  %v5729 = vmul.f32 %v5371, %v5697
  %v5730 = vmul.f32 %v5372, %v5697
  %v5731 = vmul.f32 %v5373, %v5697
  %v5732 = vmul.f32 %v5374, %v5697
  %v5733 = vmul.f32 %v5375, %v5697
  %v5734 = vmul.f32 %v5376, %v5697
  %v5735 = vmul.f32 %v5377, %v5697
  %v5736 = vmul.f32 %v5378, %v5697
  %v5737 = vmul.f32 %v5379, %v5697
  %v5738 = vmul.f32 %v5380, %v5697
  %v5739 = vmul.f32 %v5381, %v5697
  %v5740 = vmul.f32 %v5382, %v5697
  %v5741 = vmul.f32 %v5383, %v5697
  %v5742 = vmul.f32 %v5384, %v5697
  %v5743 = vmul.f32 %v5385, %v5697
  %v5744 = vmul.f32 %v5386, %v5697
  %v5745 = vmul.f32 %v5387, %v5697
  %v5746 = vmul.f32 %v5388, %v5697
  %v5747 = vmul.f32 %v5389, %v5697
  %v5748 = vmul.f32 %v5390, %v5697
  %v5749 = vmul.f32 %v5391, %v5697
  %v5750 = vmul.f32 %v5392, %v5697
  %v5751 = vmul.f32 %v5393, %v5697
  %v5752 = vmul.f32 %v5394, %v5697
  %v5753 = vmul.f32 %v5395, %v5697
  %v5754 = vmul.f32 %v5396, %v5697
  %v5755 = vmul.f32 %v5397, %v5697
  %v5756 = vmul.f32 %v5398, %v5697
  %v5757 = vmul.f32 %v5399, %v5697
  %v5758 = vmul.f32 %v5400, %v5697
  %v5759 = vmul.f32 %v5401, %v5697
  %v5760 = vmul.f32 %v5402, %v5697
  %v5761 = vmul.f32 %v5403, %v5697
  %v5762 = vmul.f32 %v5404, %v5697
  %v5764 = vperm.slane %v5695, 0
  %v5766 = vadd.f32 %v5699, %v5764
  %v5767 = vadd.f32 %v5700, %v5764
  %v5768 = vadd.f32 %v5701, %v5764
  %v5769 = vadd.f32 %v5702, %v5764
  %v5770 = vadd.f32 %v5703, %v5764
  %v5771 = vadd.f32 %v5704, %v5764
  %v5772 = vadd.f32 %v5705, %v5764
  %v5773 = vadd.f32 %v5706, %v5764
  %v5774 = vadd.f32 %v5707, %v5764
  %v5775 = vadd.f32 %v5708, %v5764
  %v5776 = vadd.f32 %v5709, %v5764
  %v5777 = vadd.f32 %v5710, %v5764
  %v5778 = vadd.f32 %v5711, %v5764
  %v5779 = vadd.f32 %v5712, %v5764
  %v5780 = vadd.f32 %v5713, %v5764
  %v5781 = vadd.f32 %v5714, %v5764
  %v5782 = vadd.f32 %v5715, %v5764
  %v5783 = vadd.f32 %v5716, %v5764
  %v5784 = vadd.f32 %v5717, %v5764
  %v5785 = vadd.f32 %v5718, %v5764
  %v5786 = vadd.f32 %v5719, %v5764
  %v5787 = vadd.f32 %v5720, %v5764
  %v5788 = vadd.f32 %v5721, %v5764
  %v5789 = vadd.f32 %v5722, %v5764
  %v5790 = vadd.f32 %v5723, %v5764
  %v5791 = vadd.f32 %v5724, %v5764
  %v5792 = vadd.f32 %v5725, %v5764
  %v5793 = vadd.f32 %v5726, %v5764
  %v5794 = vadd.f32 %v5727, %v5764
  %v5795 = vadd.f32 %v5728, %v5764
  %v5796 = vadd.f32 %v5729, %v5764
  %v5797 = vadd.f32 %v5730, %v5764
  %v5798 = vadd.f32 %v5731, %v5764
  %v5799 = vadd.f32 %v5732, %v5764
  %v5800 = vadd.f32 %v5733, %v5764
  %v5801 = vadd.f32 %v5734, %v5764
  %v5802 = vadd.f32 %v5735, %v5764
  %v5803 = vadd.f32 %v5736, %v5764
  %v5804 = vadd.f32 %v5737, %v5764
  %v5805 = vadd.f32 %v5738, %v5764
  %v5806 = vadd.f32 %v5739, %v5764
  %v5807 = vadd.f32 %v5740, %v5764
  %v5808 = vadd.f32 %v5741, %v5764
  %v5809 = vadd.f32 %v5742, %v5764
  %v5810 = vadd.f32 %v5743, %v5764
  %v5811 = vadd.f32 %v5744, %v5764
  %v5812 = vadd.f32 %v5745, %v5764
  %v5813 = vadd.f32 %v5746, %v5764
  %v5814 = vadd.f32 %v5747, %v5764
  %v5815 = vadd.f32 %v5748, %v5764
  %v5816 = vadd.f32 %v5749, %v5764
  %v5817 = vadd.f32 %v5750, %v5764
  %v5818 = vadd.f32 %v5751, %v5764
  %v5819 = vadd.f32 %v5752, %v5764
  %v5820 = vadd.f32 %v5753, %v5764
  %v5821 = vadd.f32 %v5754, %v5764
  %v5822 = vadd.f32 %v5755, %v5764
  %v5823 = vadd.f32 %v5756, %v5764
  %v5824 = vadd.f32 %v5757, %v5764
  %v5825 = vadd.f32 %v5758, %v5764
  %v5826 = vadd.f32 %v5759, %v5764
  %v5827 = vadd.f32 %v5760, %v5764
  %v5828 = vadd.f32 %v5761, %v5764
  %v5829 = vadd.f32 %v5762, %v5764
  %v5830 = vmax.f32 %v5766, 0.0
  %v5831 = vmax.f32 %v5767, 0.0
  %v5832 = vmax.f32 %v5768, 0.0
  %v5833 = vmax.f32 %v5769, 0.0
  %v5834 = vmax.f32 %v5770, 0.0
  %v5835 = vmax.f32 %v5771, 0.0
  %v5836 = vmax.f32 %v5772, 0.0
  %v5837 = vmax.f32 %v5773, 0.0
  %v5838 = vmax.f32 %v5774, 0.0
  %v5839 = vmax.f32 %v5775, 0.0
  %v5840 = vmax.f32 %v5776, 0.0
  %v5841 = vmax.f32 %v5777, 0.0
  %v5842 = vmax.f32 %v5778, 0.0
  %v5843 = vmax.f32 %v5779, 0.0
  %v5844 = vmax.f32 %v5780, 0.0
  %v5845 = vmax.f32 %v5781, 0.0
  %v5846 = vmax.f32 %v5782, 0.0
  %v5847 = vmax.f32 %v5783, 0.0
  %v5848 = vmax.f32 %v5784, 0.0
  %v5849 = vmax.f32 %v5785, 0.0
  %v5850 = vmax.f32 %v5786, 0.0
  %v5851 = vmax.f32 %v5787, 0.0
  %v5852 = vmax.f32 %v5788, 0.0
  %v5853 = vmax.f32 %v5789, 0.0
  %v5854 = vmax.f32 %v5790, 0.0
  %v5855 = vmax.f32 %v5791, 0.0
  %v5856 = vmax.f32 %v5792, 0.0
  %v5857 = vmax.f32 %v5793, 0.0
  %v5858 = vmax.f32 %v5794, 0.0
  %v5859 = vmax.f32 %v5795, 0.0
  %v5860 = vmax.f32 %v5796, 0.0
  %v5861 = vmax.f32 %v5797, 0.0
  %v5862 = vmax.f32 %v5798, 0.0
  %v5863 = vmax.f32 %v5799, 0.0
  %v5864 = vmax.f32 %v5800, 0.0
  %v5865 = vmax.f32 %v5801, 0.0
  %v5866 = vmax.f32 %v5802, 0.0
  %v5867 = vmax.f32 %v5803, 0.0
  %v5868 = vmax.f32 %v5804, 0.0
  %v5869 = vmax.f32 %v5805, 0.0
  %v5870 = vmax.f32 %v5806, 0.0
  %v5871 = vmax.f32 %v5807, 0.0
  %v5872 = vmax.f32 %v5808, 0.0
  %v5873 = vmax.f32 %v5809, 0.0
  %v5874 = vmax.f32 %v5810, 0.0
  %v5875 = vmax.f32 %v5811, 0.0
  %v5876 = vmax.f32 %v5812, 0.0
  %v5877 = vmax.f32 %v5813, 0.0
  %v5878 = vmax.f32 %v5814, 0.0
  %v5879 = vmax.f32 %v5815, 0.0
  %v5880 = vmax.f32 %v5816, 0.0
  %v5881 = vmax.f32 %v5817, 0.0
  %v5882 = vmax.f32 %v5818, 0.0
  %v5883 = vmax.f32 %v5819, 0.0
  %v5884 = vmax.f32 %v5820, 0.0
  %v5885 = vmax.f32 %v5821, 0.0
  %v5886 = vmax.f32 %v5822, 0.0
  %v5887 = vmax.f32 %v5823, 0.0
  %v5888 = vmax.f32 %v5824, 0.0
  %v5889 = vmax.f32 %v5825, 0.0
  %v5890 = vmax.f32 %v5826, 0.0
  %v5891 = vmax.f32 %v5827, 0.0
  %v5892 = vmax.f32 %v5828, 0.0
  %v5893 = vmax.f32 %v5829, 0.0
  %5894 = vst [vmem:[%s5] sm:$0xff] %v5830
  %5895 = vst [vmem:[%s5 + $0x8] sm:$0xff] %v5831
  %5896 = vst [vmem:[%s5 + $0x10] sm:$0xff] %v5832
  %5897 = vst [vmem:[%s5 + $0x18] sm:$0xff] %v5833
  %5898 = vst [vmem:[%s5 + $0x20] sm:$0xff] %v5834
  %5899 = vst [vmem:[%s5 + $0x28] sm:$0xff] %v5835
  %5900 = vst [vmem:[%s5 + $0x30] sm:$0xff] %v5836
  %5901 = vst [vmem:[%s5 + $0x38] sm:$0xff] %v5837
  %5902 = vst [vmem:[%s5 + $0x40] sm:$0xff] %v5838
  %5903 = vst [vmem:[%s5 + $0x48] sm:$0xff] %v5839
  %5904 = vst [vmem:[%s5 + $0x50] sm:$0xff] %v5840
  %5905 = vst [vmem:[%s5 + $0x58] sm:$0xff] %v5841
  %5906 = vst [vmem:[%s5 + $0x60] sm:$0xff] %v5842
  %5907 = vst [vmem:[%s5 + $0x68] sm:$0xff] %v5843
  %5908 = vst [vmem:[%s5 + $0x70] sm:$0xff] %v5844
  %5909 = vst [vmem:[%s5 + $0x78] sm:$0xff] %v5845
  %5910 = vst [vmem:[%s5 + $0x80] sm:$0xff] %v5846
  %5911 = vst [vmem:[%s5 + $0x88] sm:$0xff] %v5847
  %5912 = vst [vmem:[%s5 + $0x90] sm:$0xff] %v5848
  %5913 = vst [vmem:[%s5 + $0x98] sm:$0xff] %v5849
  %5914 = vst [vmem:[%s5 + $0xa0] sm:$0xff] %v5850
  %5915 = vst [vmem:[%s5 + $0xa8] sm:$0xff] %v5851
  %5916 = vst [vmem:[%s5 + $0xb0] sm:$0xff] %v5852
  %5917 = vst [vmem:[%s5 + $0xb8] sm:$0xff] %v5853
  %5918 = vst [vmem:[%s5 + $0xc0] sm:$0xff] %v5854
  %5919 = vst [vmem:[%s5 + $0xc8] sm:$0xff] %v5855
  %5920 = vst [vmem:[%s5 + $0xd0] sm:$0xff] %v5856
  %5921 = vst [vmem:[%s5 + $0xd8] sm:$0xff] %v5857
  %5922 = vst [vmem:[%s5 + $0xe0] sm:$0xff] %v5858
  %5923 = vst [vmem:[%s5 + $0xe8] sm:$0xff] %v5859
  %5924 = vst [vmem:[%s5 + $0xf0] sm:$0xff] %v5860
  %5925 = vst [vmem:[%s5 + $0xf8] sm:$0xff] %v5861
  %5926 = vst [vmem:[%s5 + $0x100] sm:$0xff] %v5862
  %5927 = vst [vmem:[%s5 + $0x108] sm:$0xff] %v5863
  %5928 = vst [vmem:[%s5 + $0x110] sm:$0xff] %v5864
  %5929 = vst [vmem:[%s5 + $0x118] sm:$0xff] %v5865
  %5930 = vst [vmem:[%s5 + $0x120] sm:$0xff] %v5866
  %5931 = vst [vmem:[%s5 + $0x128] sm:$0xff] %v5867
  %5932 = vst [vmem:[%s5 + $0x130] sm:$0xff] %v5868
  %5933 = vst [vmem:[%s5 + $0x138] sm:$0xff] %v5869
  %5934 = vst [vmem:[%s5 + $0x140] sm:$0xff] %v5870
  %5935 = vst [vmem:[%s5 + $0x148] sm:$0xff] %v5871
  %5936 = vst [vmem:[%s5 + $0x150] sm:$0xff] %v5872
  %5937 = vst [vmem:[%s5 + $0x158] sm:$0xff] %v5873
  %5938 = vst [vmem:[%s5 + $0x160] sm:$0xff] %v5874
  %5939 = vst [vmem:[%s5 + $0x168] sm:$0xff] %v5875
  %5940 = vst [vmem:[%s5 + $0x170] sm:$0xff] %v5876
  %5941 = vst [vmem:[%s5 + $0x178] sm:$0xff] %v5877
  %5942 = vst [vmem:[%s5 + $0x180] sm:$0xff] %v5878
  %5943 = vst [vmem:[%s5 + $0x188] sm:$0xff] %v5879
  %5944 = vst [vmem:[%s5 + $0x190] sm:$0xff] %v5880
  %5945 = vst [vmem:[%s5 + $0x198] sm:$0xff] %v5881
  %5946 = vst [vmem:[%s5 + $0x1a0] sm:$0xff] %v5882
  %5947 = vst [vmem:[%s5 + $0x1a8] sm:$0xff] %v5883
  %5948 = vst [vmem:[%s5 + $0x1b0] sm:$0xff] %v5884
  %5949 = vst [vmem:[%s5 + $0x1b8] sm:$0xff] %v5885
  %5950 = vst [vmem:[%s5 + $0x1c0] sm:$0xff] %v5886
  %5951 = vst [vmem:[%s5 + $0x1c8] sm:$0xff] %v5887
  %5952 = vst [vmem:[%s5 + $0x1d0] sm:$0xff] %v5888
  %5953 = vst [vmem:[%s5 + $0x1d8] sm:$0xff] %v5889
  %5954 = vst [vmem:[%s5 + $0x1e0] sm:$0xff] %v5890
  %5955 = vst [vmem:[%s5 + $0x1e8] sm:$0xff] %v5891
  %5956 = vst [vmem:[%s5 + $0x1f0] sm:$0xff] %v5892
  %5957 = vst [vmem:[%s5 + $0x1f8] sm:$0xff] %v5893
  // Predicated region
  $region22: #{reconstruct_forward.1} parent=0 // pred_check
    _
  $region23: #{reconstruct_forward.1} parent=0 // pred_check_branch
    %5959 = sbr.rel (0) target = $region25
  $region24: #{reconstruct_forward.1} parent=0 // pred_region
    _
  $region25: #{reconstruct_forward.1} parent=0 // pred_fallthru
    _
  // Predicated region
  $region26: #{reconstruct_forward.1} parent=0 // pred_check
    _
  $region27: #{reconstruct_forward.1} parent=0 // pred_check_branch
    %5961 = sbr.rel (0) target = $region29
  $region28: #{reconstruct_forward.1} parent=0 // pred_region
    _
  $region29: #{reconstruct_forward.1} parent=0 // pred_fallthru
    _

</llo_original>
